<compile_context>
chip_gen: v6e
topology: v6e:2x2x1
jax: 0.10.0
libtpu: 0.0.40
codegen_flags: <defaults>
</compile_context>

<pallas_src>
import math

import jax
import jax.numpy as jnp
from jax.experimental import pallas as pl
from jax.experimental.pallas import tpu as pltpu

N_CHANNELS = 128                  # time_emb_channels used by the encoder
IN_DIM = N_CHANNELS // 4          # sinusoidal feature width (sin ++ cos) = 32
HALF_DIM = N_CHANNELS // 8        # 16


def _round_up(x, m):
    return (x + m - 1) // m * m


# ------------------------------- Pallas kernel --------------------------------
def _time_emb_kernel(t_ref, freqs_ref, w1_ref, b1_ref, w2_ref, b2_ref, o_ref):
    # t_ref: (bn, 1) row-block of timesteps; freqs/weights/biases are grid-resident.
    e = t_ref[...] * freqs_ref[...]                         # (bn, 1)*(1, 16) -> (bn, 16)
    # concat([sin, cos], axis=1) @ W1  ==  sin @ W1[:16] + cos @ W1[16:]
    # (static ref slices are free; avoids an in-kernel concat on a sub-lane-width axis)
    h = (jnp.dot(jnp.sin(e), w1_ref[:HALF_DIM, :], preferred_element_type=jnp.float32)
         + jnp.dot(jnp.cos(e), w1_ref[HALF_DIM:, :], preferred_element_type=jnp.float32)
         + b1_ref[...])
    h = h * jax.nn.sigmoid(h)                               # exact SiLU, one EUP push
    o_ref[...] = (jnp.dot(h, w2_ref[...], preferred_element_type=jnp.float32)
                  + b2_ref[...]).astype(o_ref.dtype)


# --------------------------- pure-JAX reference path ---------------------------
def time_embedding_reference(params, t):
    e = t.astype(jnp.float32)[:, None] * params["freqs"]    # (N, 16)
    x = jnp.concatenate([jnp.sin(e), jnp.cos(e)], axis=1)   # (N, 32)
    h = x @ params["w1"] + params["b1"]
    h = h * jax.nn.sigmoid(h)                                # SiLU
    return h @ params["w2"] + params["b2"]


# --------------------------------- JAX wrapper ----------------------------------
def _choose_block_rows(n, block_rows):
    # >= 8 sublanes, <= block_rows, and sized so the grid keeps >= 2 "parallel"
    # steps (lets megacore shard the row axis across v7x's two TensorCores).
    return max(8, min(block_rows, _round_up(pl.cdiv(n, 2), 8)))


def time_embedding(params, t, *, block_rows=1024, min_pallas_rows=64,
                   out_dtype=jnp.float32):
    n = t.shape[0]
    if n <= min_pallas_rows:
        # Tiny batches: pallas_call fixed cost dominates; plain XLA is faster.
        return time_embedding_reference(params, t).astype(out_dtype)

    t2d = t.astype(jnp.float32).reshape(n, 1)
    bn = _choose_block_rows(n, block_rows)
    grid = (pl.cdiv(n, bn),)                                 # ragged last block is fine

    w1, b1, w2, b2, freqs = (params["w1"], params["b1"], params["w2"],
                             params["b2"], params["freqs"])

    flops = 2 * n * (IN_DIM * N_CHANNELS + N_CHANNELS * N_CHANNELS)
    transcendentals = n * (IN_DIM + N_CHANNELS)              # sin/cos + sigmoid
    bytes_accessed = (4 * (t2d.size + freqs.size + w1.size + b1.size + w2.size + b2.size)
                      + n * N_CHANNELS * jnp.dtype(out_dtype).itemsize)

    return pl.pallas_call(
        _time_emb_kernel,
        out_shape=jax.ShapeDtypeStruct((n, N_CHANNELS), out_dtype),
        grid=grid,
        in_specs=[
            pl.BlockSpec((bn, 1), lambda i: (i, 0)),                      # row-tiled t
            pl.BlockSpec((1, HALF_DIM), lambda i: (0, 0)),                # resident freqs
            pl.BlockSpec((IN_DIM, N_CHANNELS), lambda i: (0, 0)),         # resident w1
            pl.BlockSpec((1, N_CHANNELS), lambda i: (0, 0)),              # resident b1
            pl.BlockSpec((N_CHANNELS, N_CHANNELS), lambda i: (0, 0)),     # resident w2
            pl.BlockSpec((1, N_CHANNELS), lambda i: (0, 0)),              # resident b2
        ],
        out_specs=pl.BlockSpec((bn, N_CHANNELS), lambda i: (i, 0)),       # lane-dense 128
        compiler_params=pltpu.CompilerParams(
            dimension_semantics=("parallel",),                            # megacore on v7x
            vmem_limit_bytes=32 * 1024 * 1024,                            # safe on 64 MiB v7x
        ),
        cost_estimate=pl.CostEstimate(
            flops=flops, transcendentals=transcendentals, bytes_accessed=bytes_accessed),
    )(t2d, freqs, w1, b1, w2, b2)


# ----------------------------------- params -------------------------------------
def init_params(key):
    k1, k2, k3, k4 = jax.random.split(key, 4)
    # Weights stored pre-transposed ([in, out]) relative to torch nn.Linear layout.
    w1 = (jax.random.normal(k1, (IN_DIM, N_CHANNELS)) / math.sqrt(IN_DIM)).astype(jnp.float32)
    b1 = (0.05 * jax.random.normal(k2, (1, N_CHANNELS))).astype(jnp.float32)
    w2 = (jax.random.normal(k3, (N_CHANNELS, N_CHANNELS)) / math.sqrt(N_CHANNELS)).astype(jnp.float32)
    b2 = (0.05 * jax.random.normal(k4, (1, N_CHANNELS))).astype(jnp.float32)
    # Parameter-free sinusoidal frequencies, precomputed once (compile-time constant).
    scale = math.log(10000.0) / (HALF_DIM - 1)
    freqs = jnp.exp(-scale * jnp.arange(HALF_DIM, dtype=jnp.float32)).reshape(1, HALF_DIM)
    return dict(w1=w1, b1=b1, w2=w2, b2=b2, freqs=freqs)


# ------------------------------------ main ---------------------------------------
if __name__ == "__main__":
    key = jax.random.PRNGKey(0)
    kt1, kt2, kp = jax.random.split(key, 3)
    params = init_params(kp)

    # Tiny batch: exercises the small-N XLA fallback (dispatch wiring only).
    t_small = jax.random.uniform(kt1, (2,), minval=0.0, maxval=1000.0, dtype=jnp.float32)
    out_small = jax.block_until_ready(time_embedding(params, t_small))
    ref_small = time_embedding_reference(params, t_small)
    assert out_small.shape == (2, N_CHANNELS), out_small.shape
    assert float(jnp.max(jnp.abs(out_small - ref_small))) < 1e-3

    # Small-but-nontrivial batch: exercises the fused Pallas path, including a
    # ragged last block and the >=2-step "parallel" row grid.
    n = 200
    t_big = jax.random.uniform(kt2, (n,), minval=0.0, maxval=1000.0, dtype=jnp.float32)
    out = jax.block_until_ready(time_embedding(params, t_big))
    ref = time_embedding_reference(params, t_big)
    assert out.shape == (n, N_CHANNELS), out.shape
    assert bool(jnp.all(jnp.isfinite(out)))
    max_err = float(jnp.max(jnp.abs(out - ref)))
    assert max_err < 1e-2, f"max abs error vs reference: {max_err}"
    print("KERNEL_OK")
</pallas_src>

<mosaic_0001>
module attributes {stable_mosaic.version = 11 : i64} {
  func.func @_time_emb_kernel(%arg0: i32, %arg1: memref<104x1xf32, #tpu.memory_space<vmem>>, %arg2: memref<1x16xf32, #tpu.memory_space<vmem>>, %arg3: memref<32x128xf32, #tpu.memory_space<vmem>>, %arg4: memref<1x128xf32, #tpu.memory_space<vmem>>, %arg5: memref<128x128xf32, #tpu.memory_space<vmem>>, %arg6: memref<1x128xf32, #tpu.memory_space<vmem>>, %arg7: memref<104x128xf32, #tpu.memory_space<vmem>>) attributes {dimension_semantics = [#tpu.dimension_semantics<parallel>], iteration_bounds = array<i64: 2>, scalar_prefetch = 0 : i64, scratch_operands = 0 : i64, tpu.core_type = #tpu.core_type<tc>, window_params = [{transform_indices = @transform_0, window_bounds = array<i64: 104, 1>}, {pipeline_mode = #tpu.pipeline_mode<synchronous>, transform_indices = @transform_1, window_bounds = array<i64: 1, 16>}, {pipeline_mode = #tpu.pipeline_mode<synchronous>, transform_indices = @transform_2, window_bounds = array<i64: 32, 128>}, {pipeline_mode = #tpu.pipeline_mode<synchronous>, transform_indices = @transform_3, window_bounds = array<i64: 1, 128>}, {pipeline_mode = #tpu.pipeline_mode<synchronous>, transform_indices = @transform_4, window_bounds = array<i64: 128, 128>}, {pipeline_mode = #tpu.pipeline_mode<synchronous>, transform_indices = @transform_5, window_bounds = array<i64: 1, 128>}, {transform_indices = @transform_6, window_bounds = array<i64: 104, 128>}]} {
    %c0 = arith.constant 0 : index
    %c0_0 = arith.constant 0 : index
    %0 = vector.load %arg1[%c0, %c0_0] : memref<104x1xf32, #tpu.memory_space<vmem>>, vector<104x1xf32>
    %c0_1 = arith.constant 0 : index
    %c0_2 = arith.constant 0 : index
    %1 = vector.load %arg2[%c0_1, %c0_2] : memref<1x16xf32, #tpu.memory_space<vmem>>, vector<1x16xf32>
    %2 = vector.broadcast %0 : vector<104x1xf32> to vector<104x16xf32>
    %3 = vector.broadcast %1 : vector<1x16xf32> to vector<104x16xf32>
    %4 = arith.mulf %2, %3 : vector<104x16xf32>
    %5 = math.sin %4 : vector<104x16xf32>
    %c0_3 = arith.constant 0 : index
    %c0_4 = arith.constant 0 : index
    %6 = vector.load %arg3[%c0_3, %c0_4] : memref<32x128xf32, #tpu.memory_space<vmem>>, vector<16x128xf32>
    %cst = arith.constant dense<0.000000e+00> : vector<104x128xf32>
    %7 = tpu.matmul %5, %6, %cst {dimension_numbers = #tpu.dot_dimension_numbers<[1], [0], [0], [1], [0, 0, 1, 1], [], []>} : vector<104x16xf32>, vector<16x128xf32>, vector<104x128xf32> -> vector<104x128xf32>
    %8 = math.cos %4 : vector<104x16xf32>
    %c16 = arith.constant 16 : index
    %c0_5 = arith.constant 0 : index
    %9 = vector.load %arg3[%c16, %c0_5] : memref<32x128xf32, #tpu.memory_space<vmem>>, vector<16x128xf32>
    %cst_6 = arith.constant dense<0.000000e+00> : vector<104x128xf32>
    %10 = tpu.matmul %8, %9, %cst_6 {dimension_numbers = #tpu.dot_dimension_numbers<[1], [0], [0], [1], [0, 0, 1, 1], [], []>} : vector<104x16xf32>, vector<16x128xf32>, vector<104x128xf32> -> vector<104x128xf32>
    %11 = arith.addf %7, %10 : vector<104x128xf32>
    %c0_7 = arith.constant 0 : index
    %c0_8 = arith.constant 0 : index
    %12 = vector.load %arg4[%c0_7, %c0_8] : memref<1x128xf32, #tpu.memory_space<vmem>>, vector<1x128xf32>
    %13 = vector.broadcast %12 : vector<1x128xf32> to vector<104x128xf32>
    %14 = arith.addf %11, %13 : vector<104x128xf32>
    %15 = arith.negf %14 : vector<104x128xf32>
    %16 = math.exp %15 : vector<104x128xf32>
    %cst_9 = arith.constant 1.000000e+00 : f32
    %17 = vector.broadcast %cst_9 : f32 to vector<104x128xf32>
    %18 = arith.addf %17, %16 : vector<104x128xf32>
    %19 = arith.divf %17, %18 : vector<104x128xf32>
    %20 = arith.mulf %14, %19 : vector<104x128xf32>
    %c0_10 = arith.constant 0 : index
    %c0_11 = arith.constant 0 : index
    %21 = vector.load %arg5[%c0_10, %c0_11] : memref<128x128xf32, #tpu.memory_space<vmem>>, vector<128x128xf32>
    %cst_12 = arith.constant dense<0.000000e+00> : vector<104x128xf32>
    %22 = tpu.matmul %20, %21, %cst_12 {dimension_numbers = #tpu.dot_dimension_numbers<[1], [0], [0], [1], [0, 0, 1, 1], [], []>} : vector<104x128xf32>, vector<128x128xf32>, vector<104x128xf32> -> vector<104x128xf32>
    %c0_13 = arith.constant 0 : index
    %c0_14 = arith.constant 0 : index
    %23 = vector.load %arg6[%c0_13, %c0_14] : memref<1x128xf32, #tpu.memory_space<vmem>>, vector<1x128xf32>
    %24 = vector.broadcast %23 : vector<1x128xf32> to vector<104x128xf32>
    %25 = arith.addf %22, %24 : vector<104x128xf32>
    %c0_15 = arith.constant 0 : index
    %c0_16 = arith.constant 0 : index
    %26 = vector.load %arg7[%c0_15, %c0_16] : memref<104x128xf32, #tpu.memory_space<vmem>>, vector<104x128xf32>
    tpu.vector_store %arg7[%c0_15, %c0_16], %25 {strides = array<i32>} : memref<104x128xf32, #tpu.memory_space<vmem>>, vector<104x128xf32>,
    return
  }
  func.func @transform_0(%arg0: i32) -> (i32, i32) {
    %c0_i32 = arith.constant 0 : i32
    %c0_i32_0 = arith.constant 0 : i32
    return %arg0, %c0_i32 : i32, i32
  }
  func.func @transform_1(%arg0: i32) -> (i32, i32) {
    %c0_i32 = arith.constant 0 : i32
    %c0_i32_0 = arith.constant 0 : i32
    %c0_i32_1 = arith.constant 0 : i32
    return %c0_i32, %c0_i32_0 : i32, i32
  }
  func.func @transform_2(%arg0: i32) -> (i32, i32) {
    %c0_i32 = arith.constant 0 : i32
    %c0_i32_0 = arith.constant 0 : i32
    %c0_i32_1 = arith.constant 0 : i32
    return %c0_i32, %c0_i32_0 : i32, i32
  }
  func.func @transform_3(%arg0: i32) -> (i32, i32) {
    %c0_i32 = arith.constant 0 : i32
    %c0_i32_0 = arith.constant 0 : i32
    %c0_i32_1 = arith.constant 0 : i32
    return %c0_i32, %c0_i32_0 : i32, i32
  }
  func.func @transform_4(%arg0: i32) -> (i32, i32) {
    %c0_i32 = arith.constant 0 : i32
    %c0_i32_0 = arith.constant 0 : i32
    %c0_i32_1 = arith.constant 0 : i32
    return %c0_i32, %c0_i32_0 : i32, i32
  }
  func.func @transform_5(%arg0: i32) -> (i32, i32) {
    %c0_i32 = arith.constant 0 : i32
    %c0_i32_0 = arith.constant 0 : i32
    %c0_i32_1 = arith.constant 0 : i32
    return %c0_i32, %c0_i32_0 : i32, i32
  }
  func.func @transform_6(%arg0: i32) -> (i32, i32) {
    %c0_i32 = arith.constant 0 : i32
    %c0_i32_0 = arith.constant 0 : i32
    return %arg0, %c0_i32 : i32, i32
  }
}

</mosaic_0001>

<llo_original>
// kernel: tpu_custom_call.1
$region0: #{tpu_custom_call.1}
  #allocation0 [shape = 'u32[]', space=smem, size = 0x4, offset = 0x4, fixed_abs, tag = 'smem constant byte address 0x4 - core index']
  #allocation1 [shape = 'u32[144,128]{1,0:T(1,128)}', space=vmem, size = 0x12000, scoped, tag = 'internal scratch']
  %s0 = inlined_call_operand.vmem [shape: f32[200,1], index: 0, kind: input, shape index: {}]
  %s1 = inlined_call_operand.vmem [shape: f32[1,16], index: 1, kind: input, shape index: {}]
  %s2 = inlined_call_operand.vmem [shape: f32[32,128], index: 2, kind: input, shape index: {}]
  %s3 = inlined_call_operand.vmem [shape: f32[1,128], index: 3, kind: input, shape index: {}]
  %s4 = inlined_call_operand.vmem [shape: f32[128,128], index: 4, kind: input, shape index: {}]
  %s5 = inlined_call_operand.vmem [shape: f32[1,128], index: 5, kind: input, shape index: {}]
  %s6 = inlined_call_operand.hbm [shape: f32[200,128], index: 6, kind: output, shape index: {}]
  %s7 = sld [smem:[#allocation0]]
  $region57: #{tpu_custom_call.1} parent=0
    _
  %s9 = ssub.s32 1, %s7
  %s10 = scalar_select 0, %s9, %s7
  $region1: #{tpu_custom_call.1} parent=0
    #allocation2 [shape = 'u8[106496]{0}', space=vmem, size = 0x1a000, scoped, tag = 'output window, operand 0']
    #allocation3 [shape = 's32[2]{0}', space=sflag, size = 0x8, scoped, tag = 'scoped memory for tpu_custom_call.1']
    %11 = vsyncpa [#allocation3], 0
    %s12 = scalar_lea.sflag [#allocation3], 1
    %13 = vsyncpa %s12, 0
    loop: start=0, step=1, limit=4
    $region2: #{tpu_custom_call.1} parent=1 // loop_pre_header
      _
    $region3: #{tpu_custom_call.1} parent=1 // loop_header
      %s15 = sphi 0, %s19
      %p16 = scmp.ge.s32.totalorder %s15, 4
      %s25 = sphi 0, %s27
      %s28 = sphi 0, %s25
      %s29 = sphi 0, %s28
      %s45 = sphi 0, %s29
      %s49 = sphi 0, %s49
      %s51 = sphi 0, %s49
      %s52 = sphi 0, %s51
      %s66 = sphi 0, %s52
      %s70 = sphi 0, %s70
      %s72 = sphi 0, %s70
      %s73 = sphi 0, %s72
      %s87 = sphi 0, %s73
      %s91 = sphi 0, %s91
      %s93 = sphi 0, %s91
      %s94 = sphi 0, %s93
      %s108 = sphi 0, %s94
      %s112 = sphi 0, %s112
      %s114 = sphi 0, %s112
      %s115 = sphi 0, %s114
      %s129 = sphi 0, %s115
      %s133 = sphi 0, %s133
      %s135 = sphi 0, %s133
      %s136 = sphi 0, %s135
      %s150 = sphi 0, %s136
      %s156 = sphi 0, %s158
      %s159 = sphi 0, %s156
      %s160 = sphi 0, %s159
      %s176 = sphi 0, %s160
    $region4: #{tpu_custom_call.1} parent=1 // loop_header_branch
      %18 = sbr.rel (%p16) target = $region8
    $region5: #{tpu_custom_call.1} parent=1 // loop_body
      %s20 = ssub.s32 %s15, 1
      %s21 = ssub.s32 %s15, 2
      %s22 = sadd.s32 %s15, 1
      %s23 = ssub.s32 %s15, %s22
      %p24 = scmp.eq.s32.totalorder %s23, 0
      %s26 = sadd.s32 %s25, 1
      %s27 = scalar_select %p24, %s25, %s26
      %p30 = pneg %p24
      %p31 = scmp.eq.s32.totalorder %s15, 1
      %p32 = por %p30, %p31
      %p33 = scmp.ne.s32.totalorder %s25, %s28
      %p34 = scmp.eq.s32.totalorder %s15, 0
      %p35 = por %p33, %p34
      %p36 = scmp.ne.s32.totalorder %s25, %s28
      %p37 = scmp.eq.s32.totalorder %s20, 1
      %p38 = por %p36, %p37
      %p39 = scmp.ne.s32.totalorder %s28, %s29
      %p40 = scmp.eq.s32.totalorder %s20, 0
      %p41 = por %p39, %p40
      %p42 = scmp.ne.s32.totalorder %s28, %s29
      %p43 = scmp.eq.s32.totalorder %s21, 1
      %p44 = por %p42, %p43
      %p46 = scmp.ne.s32.totalorder %s29, %s45
      %p47 = scmp.eq.s32.totalorder %s21, 0
      %p48 = por %p46, %p47
      %s50 = sadd.s32 %s49, 1
      %p53 = scmp.eq.s32.totalorder %s15, 1
      %p54 = scmp.ne.s32.totalorder %s49, %s51
      %p55 = scmp.eq.s32.totalorder %s15, 0
      %p56 = por %p54, %p55
      %p57 = scmp.ne.s32.totalorder %s49, %s51
      %p58 = scmp.eq.s32.totalorder %s20, 1
      %p59 = por %p57, %p58
      %p60 = scmp.ne.s32.totalorder %s51, %s52
      %p61 = scmp.eq.s32.totalorder %s20, 0
      %p62 = por %p60, %p61
      %p63 = scmp.ne.s32.totalorder %s51, %s52
      %p64 = scmp.eq.s32.totalorder %s21, 1
      %p65 = por %p63, %p64
      %p67 = scmp.ne.s32.totalorder %s52, %s66
      %p68 = scmp.eq.s32.totalorder %s21, 0
      %p69 = por %p67, %p68
      %s71 = sadd.s32 %s70, 1
      %p74 = scmp.eq.s32.totalorder %s15, 1
      %p75 = scmp.ne.s32.totalorder %s70, %s72
      %p76 = scmp.eq.s32.totalorder %s15, 0
      %p77 = por %p75, %p76
      %p78 = scmp.ne.s32.totalorder %s70, %s72
      %p79 = scmp.eq.s32.totalorder %s20, 1
      %p80 = por %p78, %p79
      %p81 = scmp.ne.s32.totalorder %s72, %s73
      %p82 = scmp.eq.s32.totalorder %s20, 0
      %p83 = por %p81, %p82
      %p84 = scmp.ne.s32.totalorder %s72, %s73
      %p85 = scmp.eq.s32.totalorder %s21, 1
      %p86 = por %p84, %p85
      %p88 = scmp.ne.s32.totalorder %s73, %s87
      %p89 = scmp.eq.s32.totalorder %s21, 0
      %p90 = por %p88, %p89
      %s92 = sadd.s32 %s91, 1
      %p95 = scmp.eq.s32.totalorder %s15, 1
      %p96 = scmp.ne.s32.totalorder %s91, %s93
      %p97 = scmp.eq.s32.totalorder %s15, 0
      %p98 = por %p96, %p97
      %p99 = scmp.ne.s32.totalorder %s91, %s93
      %p100 = scmp.eq.s32.totalorder %s20, 1
      %p101 = por %p99, %p100
      %p102 = scmp.ne.s32.totalorder %s93, %s94
      %p103 = scmp.eq.s32.totalorder %s20, 0
      %p104 = por %p102, %p103
      %p105 = scmp.ne.s32.totalorder %s93, %s94
      %p106 = scmp.eq.s32.totalorder %s21, 1
      %p107 = por %p105, %p106
      %p109 = scmp.ne.s32.totalorder %s94, %s108
      %p110 = scmp.eq.s32.totalorder %s21, 0
      %p111 = por %p109, %p110
      %s113 = sadd.s32 %s112, 1
      %p116 = scmp.eq.s32.totalorder %s15, 1
      %p117 = scmp.ne.s32.totalorder %s112, %s114
      %p118 = scmp.eq.s32.totalorder %s15, 0
      %p119 = por %p117, %p118
      %p120 = scmp.ne.s32.totalorder %s112, %s114
      %p121 = scmp.eq.s32.totalorder %s20, 1
      %p122 = por %p120, %p121
      %p123 = scmp.ne.s32.totalorder %s114, %s115
      %p124 = scmp.eq.s32.totalorder %s20, 0
      %p125 = por %p123, %p124
      %p126 = scmp.ne.s32.totalorder %s114, %s115
      %p127 = scmp.eq.s32.totalorder %s21, 1
      %p128 = por %p126, %p127
      %p130 = scmp.ne.s32.totalorder %s115, %s129
      %p131 = scmp.eq.s32.totalorder %s21, 0
      %p132 = por %p130, %p131
      %s134 = sadd.s32 %s133, 1
      %p137 = scmp.eq.s32.totalorder %s15, 1
      %p138 = scmp.ne.s32.totalorder %s133, %s135
      %p139 = scmp.eq.s32.totalorder %s15, 0
      %p140 = por %p138, %p139
      %p141 = scmp.ne.s32.totalorder %s133, %s135
      %p142 = scmp.eq.s32.totalorder %s20, 1
      %p143 = por %p141, %p142
      %p144 = scmp.ne.s32.totalorder %s135, %s136
      %p145 = scmp.eq.s32.totalorder %s20, 0
      %p146 = por %p144, %p145
      %p147 = scmp.ne.s32.totalorder %s135, %s136
      %p148 = scmp.eq.s32.totalorder %s21, 1
      %p149 = por %p147, %p148
      %p151 = scmp.ne.s32.totalorder %s136, %s150
      %p152 = scmp.eq.s32.totalorder %s21, 0
      %p153 = por %p151, %p152
      %s154 = ssub.s32 %s15, %s22
      %p155 = scmp.eq.s32.totalorder %s154, 0
      %s157 = sadd.s32 %s156, 1
      %s158 = scalar_select %p155, %s156, %s157
      %p161 = pneg %p155
      %p162 = scmp.eq.s32.totalorder %s15, 1
      %p163 = por %p161, %p162
      %p164 = scmp.ne.s32.totalorder %s156, %s159
      %p165 = scmp.eq.s32.totalorder %s15, 0
      %p166 = por %p164, %p165
      %p167 = scmp.ne.s32.totalorder %s156, %s159
      %p168 = scmp.eq.s32.totalorder %s20, 1
      %p169 = por %p167, %p168
      %p170 = scmp.ne.s32.totalorder %s159, %s160
      %p171 = scmp.eq.s32.totalorder %s20, 0
      %p172 = por %p170, %p171
      %p173 = scmp.ne.s32.totalorder %s159, %s160
      %p174 = scmp.eq.s32.totalorder %s21, 1
      %p175 = por %p173, %p174
      %p177 = scmp.ne.s32.totalorder %s160, %s176
      %p178 = scmp.eq.s32.totalorder %s21, 0
      %p179 = por %p177, %p178
      %p180 = scmp.le.s32.totalorder 1, %s15
      %p181 = scmp.lt.s32.totalorder %s15, 3
      %p182 = pnand %p180, %p181
      %p183 = pneg %p182
      // Predicated region
      $region9: #{tpu_custom_call.1} parent=5 // pred_check
        _
      $region10: #{tpu_custom_call.1} parent=5 // pred_check_branch
        %185 = sbr.rel (%p182) target = $region12
      $region11: #{tpu_custom_call.1} parent=5 // pred_region
        %s186 = ssub.s32 %s15, 1
        // Predicated region
        $region13: #{tpu_custom_call.1} parent=11 // pred_check
          %p187 = pneg %p62
        $region14: #{tpu_custom_call.1} parent=11 // pred_check_branch
          %189 = sbr.rel (%p187) target = $region16
        $region15: #{tpu_custom_call.1} parent=11 // pred_region
          _
        $region16: #{tpu_custom_call.1} parent=11 // pred_fallthru
          _
        // Predicated region
        $region17: #{tpu_custom_call.1} parent=11 // pred_check
          %p190 = pneg %p83
        $region18: #{tpu_custom_call.1} parent=11 // pred_check_branch
          %192 = sbr.rel (%p190) target = $region20
        $region19: #{tpu_custom_call.1} parent=11 // pred_region
          _
        $region20: #{tpu_custom_call.1} parent=11 // pred_fallthru
          _
        // Predicated region
        $region21: #{tpu_custom_call.1} parent=11 // pred_check
          %p193 = pneg %p104
        $region22: #{tpu_custom_call.1} parent=11 // pred_check_branch
          %195 = sbr.rel (%p193) target = $region24
        $region23: #{tpu_custom_call.1} parent=11 // pred_region
          _
        $region24: #{tpu_custom_call.1} parent=11 // pred_fallthru
          _
        // Predicated region
        $region25: #{tpu_custom_call.1} parent=11 // pred_check
          %p196 = pneg %p125
        $region26: #{tpu_custom_call.1} parent=11 // pred_check_branch
          %198 = sbr.rel (%p196) target = $region28
        $region27: #{tpu_custom_call.1} parent=11 // pred_region
          _
        $region28: #{tpu_custom_call.1} parent=11 // pred_fallthru
          _
        // Predicated region
        $region29: #{tpu_custom_call.1} parent=11 // pred_check
          %p199 = pneg %p146
        $region30: #{tpu_custom_call.1} parent=11 // pred_check_branch
          %201 = sbr.rel (%p199) target = $region32
        $region31: #{tpu_custom_call.1} parent=11 // pred_region
          _
        $region32: #{tpu_custom_call.1} parent=11 // pred_fallthru
          _
      $region12: #{tpu_custom_call.1} parent=5 // pred_fallthru
        _
      %p202 = scmp.lt.s32.totalorder %s15, 2
      // Predicated region
      $region33: #{tpu_custom_call.1} parent=5 // pred_check
        %p203 = pneg %p202
      $region34: #{tpu_custom_call.1} parent=5 // pred_check_branch
        %205 = sbr.rel (%p203) target = $region36
      $region35: #{tpu_custom_call.1} parent=5 // pred_region
        // Predicated region
        $region37: #{tpu_custom_call.1} parent=35 // pred_check
          %p206 = pneg %p35
        $region38: #{tpu_custom_call.1} parent=35 // pred_check_branch
          %208 = sbr.rel (%p206) target = $region40
        $region39: #{tpu_custom_call.1} parent=35 // pred_region
          %s209 = smul.u32 13, %s15
          %s210 = ssub.s32 25, %s209
          %p211 = scmp.lt.s32.totalorder %s210, 13
          %s212 = scalar_select %p211, %s210, 13
          %s213 = smul.u32 128, %s212
          %p214 = scmp.lt.s32.totalorder %s209, 24
          %s215 = scalar_select %p214, %s209, 24
          %s216 = smul.addr %s215, 8
          %s217 = scalar_lea.vmem %s0, %s216
          %s218 = smul.u32 13, %s15
          %s219 = ssub.s32 25, %s218
          %p220 = scmp.lt.s32.totalorder %s219, 13
          %s221 = scalar_select %p220, %s219, 13
          %s222 = smul.u32 128, %s221
        $region40: #{tpu_custom_call.1} parent=35 // pred_fallthru
          _
      $region36: #{tpu_custom_call.1} parent=5 // pred_fallthru
        _
      %p223 = scmp.le.s32.totalorder 1, %s15
      %p224 = scmp.lt.s32.totalorder %s15, 3
      %p225 = pnand %p223, %p224
      %p226 = pneg %p225
      // Predicated region
      $region41: #{tpu_custom_call.1} parent=5 // pred_check
        _
      $region42: #{tpu_custom_call.1} parent=5 // pred_check_branch
        %228 = sbr.rel (%p225) target = $region44
      $region43: #{tpu_custom_call.1} parent=5 // pred_region
        %s229 = ssub.s32 %s15, 1
        %s230 = smul.u32 13, %s20
        %s231 = ssub.s32 25, %s230
        %p232 = scmp.lt.s32.totalorder %s231, 13
        %s233 = scalar_select %p232, %s231, 13
        %s234 = smul.u32 128, %s233
        %p235 = scmp.lt.s32.totalorder %s230, 24
        %s236 = scalar_select %p235, %s230, 24
        %s237 = smul.addr %s236, 8
        %s238 = scalar_lea.vmem %s0, %s237
        %p239 = pneg %p41
        %p240 = pneg %p38
        %p241 = pneg %p62
        %p242 = pneg %p59
        %p243 = pneg %p83
        %p244 = pneg %p80
        %p245 = pneg %p104
        %p246 = pneg %p101
        %p247 = pneg %p125
        %p248 = pneg %p122
        %p249 = pneg %p146
        %p250 = pneg %p143
        %p251 = pneg %p172
        %p252 = pneg %p169
        %s253 = sand.u32 %s159, 1
        %s254 = scalar_lea.sflag [#allocation3], %s253
        %s255 = sand.u32 %s159, 1
        %s256 = smul.addr %s255, 104
        %s257 = scalar_lea.vmem [#allocation2], %s256
        %s258 = smul.u32 13, %s20
        %s259 = ssub.s32 25, %s258
        %p260 = scmp.lt.s32.totalorder %s259, 13
        %s261 = scalar_select %p260, %s259, 13
        %s262 = smul.u32 128, %s261
        %p263 = scmp.lt.s32.totalorder %s258, 24
        %s264 = scalar_select %p263, %s258, 24
        %s265 = smul.addr %s264, 8
        %s266 = scalar_lea.vmem %s0, %s265
        %s267 = smul.u32 13, %s20
        %s268 = ssub.s32 25, %s267
        %p269 = scmp.lt.s32.totalorder %s268, 13
        %s270 = scalar_select %p269, %s268, 13
        %s271 = smul.u32 128, %s270
        %s272 = smul.u32 13, %s20
        %s273 = ssub.s32 25, %s272
        %p274 = scmp.lt.s32.totalorder %s273, 13
        %s275 = scalar_select %p274, %s273, 13
        %s276 = smul.u32 128, %s275
        %v277 = vld [vmem:[%s266] sm:$0xff]
        %v278 = vld [vmem:[%s266 + $0x8] sm:$0xff]
        %v279 = vld [vmem:[%s266 + $0x10] sm:$0xff]
        %v280 = vld [vmem:[%s266 + $0x18] sm:$0xff]
        %v281 = vld [vmem:[%s266 + $0x20] sm:$0xff]
        %v282 = vld [vmem:[%s266 + $0x28] sm:$0xff]
        %v283 = vld [vmem:[%s266 + $0x30] sm:$0xff]
        %v284 = vld [vmem:[%s266 + $0x38] sm:$0xff]
        %v285 = vld [vmem:[%s266 + $0x40] sm:$0xff]
        %v286 = vld [vmem:[%s266 + $0x48] sm:$0xff]
        %v287 = vld [vmem:[%s266 + $0x50] sm:$0xff]
        %v288 = vld [vmem:[%s266 + $0x58] sm:$0xff]
        %v289 = vld [vmem:[%s266 + $0x60] sm:$0xff]
        %v290 = vld [vmem:[%s1] sm:$0x1]
        %292 = vset.pattern.permute.xlu0 0
        %293 = vperm.xlu0 %292, %v277
        %v294 = vpop.permute.xlu0 %293
        %297 = vset.pattern.permute.xlu0 0
        %298 = vperm.xlu0 %297, %v278
        %v299 = vpop.permute.xlu0 %298
        %302 = vset.pattern.permute.xlu0 0
        %303 = vperm.xlu0 %302, %v279
        %v304 = vpop.permute.xlu0 %303
        %307 = vset.pattern.permute.xlu0 0
        %308 = vperm.xlu0 %307, %v280
        %v309 = vpop.permute.xlu0 %308
        %312 = vset.pattern.permute.xlu0 0
        %313 = vperm.xlu0 %312, %v281
        %v314 = vpop.permute.xlu0 %313
        %317 = vset.pattern.permute.xlu0 0
        %318 = vperm.xlu0 %317, %v282
        %v319 = vpop.permute.xlu0 %318
        %322 = vset.pattern.permute.xlu0 0
        %323 = vperm.xlu0 %322, %v283
        %v324 = vpop.permute.xlu0 %323
        %327 = vset.pattern.permute.xlu0 0
        %328 = vperm.xlu0 %327, %v284
        %v329 = vpop.permute.xlu0 %328
        %332 = vset.pattern.permute.xlu0 0
        %333 = vperm.xlu0 %332, %v285
        %v334 = vpop.permute.xlu0 %333
        %337 = vset.pattern.permute.xlu0 0
        %338 = vperm.xlu0 %337, %v286
        %v339 = vpop.permute.xlu0 %338
        %342 = vset.pattern.permute.xlu0 0
        %343 = vperm.xlu0 %342, %v287
        %v344 = vpop.permute.xlu0 %343
        %347 = vset.pattern.permute.xlu0 0
        %348 = vperm.xlu0 %347, %v288
        %v349 = vpop.permute.xlu0 %348
        %352 = vset.pattern.permute.xlu0 0
        %353 = vperm.xlu0 %352, %v289
        %v354 = vpop.permute.xlu0 %353
        %v357 = vlaneseq
        %v358 = vshrl.u32 %v357, 7
        %v359 = vsub.s32 0, %v358
        %v360 = vrot.slane %v290, %v359
        %v362 = vmul.f32 %v294, %v360
        %v363 = vmul.f32 %v299, %v360
        %v364 = vmul.f32 %v304, %v360
        %v365 = vmul.f32 %v309, %v360
        %v366 = vmul.f32 %v314, %v360
        %v367 = vmul.f32 %v319, %v360
        %v368 = vmul.f32 %v324, %v360
        %v369 = vmul.f32 %v329, %v360
        %v370 = vmul.f32 %v334, %v360
        %v371 = vmul.f32 %v339, %v360
        %v372 = vmul.f32 %v344, %v360
        %v373 = vmul.f32 %v349, %v360
        %v374 = vmul.f32 %v354, %v360
        %v375 = vand.u32 2147483647, %v362
        %vm376 = vcmp.le.f32.partialorder %v375, 0.7853982
        %vm377 = vcmp.lt.s32.totalorder %v362, 0
        %v378 = vand.u32 %v362, 2139095040
        %v379 = vshrl.u32 %v378, 23
        %v380 = vsub.s32 %v379, 127
        %v381 = vand.u32 2147483647, %v362
        %v382 = vand.u32 %v381, 8388607
        %v383 = vor.u32 %v382, 8388608
        %v384 = vsub.s32 0, %v383
        %v385 = vadd.s32 %v380, 1
        %vm386 = vcmp.gt.s32.totalorder %v385, 0
        %v387 = vsel %vm386, %v385, 0
        %v388 = vshrl.u32 %v387, 5
        %v389 = vand.u32 %v387, 31
        %v390 = vsub.s32 32, %v389
        %v391 = vshrl.u32 683565275, %v390
        %v392 = vshll.u32 683565275, %v389
        %v393 = vshrl.u32 2475754826, %v390
        %v394 = vor.u32 %v392, %v393
        %v395 = vshll.u32 2475754826, %v389
        %v396 = vshrl.u32 2131351028, %v390
        %v397 = vor.u32 %v395, %v396
        %v398 = vshll.u32 2131351028, %v389
        %v399 = vshrl.u32 2102212464, %v390
        %v400 = vor.u32 %v398, %v399
        %v401 = vshll.u32 2102212464, %v389
        %v402 = vshrl.u32 920167782, %v390
        %v403 = vor.u32 %v401, %v402
        %v404 = vshll.u32 920167782, %v389
        %v405 = vshrl.u32 1326507024, %v390
        %v406 = vor.u32 %v404, %v405
        %vm407 = vcmp.lt.s32.totalorder %v388, 1
        %vm408 = vcmp.lt.s32.totalorder %v388, 2
        %vm409 = vcmp.lt.s32.totalorder %v388, 3
        %vm410 = vcmp.lt.s32.totalorder %v388, 4
        %v411 = vsel %vm407, %v391, %v394
        %v412 = vsel %vm410, %v400, 2102212464
        %v413 = vsel %vm409, %v397, %v412
        %v414 = vsel %vm408, %v411, %v413
        %v415 = vsel %vm407, %v394, %v397
        %v416 = vsel %vm410, %v403, 920167782
        %v417 = vsel %vm409, %v400, %v416
        %v418 = vsel %vm408, %v415, %v417
        %v419 = vsel %vm407, %v397, %v400
        %v420 = vsel %vm410, %v406, 1326507024
        %v421 = vsel %vm409, %v403, %v420
        %v422 = vsel %vm408, %v419, %v421
        %v423 = vshll.u32 %v383, 8
        %v424 = vmul.u32.u64.compose %v423, %v422
        %v425 = vextract.low.u32 %v424
        %v426 = vextract.high.u32 %v424
        %v427 = vmul.u32.u64.compose %v423, %v418
        %v428 = vextract.low.u32 %v427
        %v429 = vextract.high.u32 %v427
        %v430 = vmul.u32 %v423, %v414
        %v431 = vadd.s32 %v426, %v428
        %vm432 = vc.u32 %v426, %v428
        %v433 = vadd.s32 %v429, 1
        %v434 = vsel %vm432, %v433, %v429
        %v435 = vadd.s32 %v430, %v434
        %v436 = vadd.s32 %v435, 536870912
        %v437 = vshrl.u32 %v436, 30
        %v438 = vshll.u32 %v437, 30
        %v439 = vsub.s32 %v435, %v438
        %vm440 = vcmp.lt.s32.totalorder %v439, 0
        %v441 = vsub.s32 0, %v439
        %v442 = vsel %vm440, %v441, %v439
        %v443 = vclz %v442
        %v444 = vsub.s32 %v443, 2
        %vm445 = vcmp.gt.s32.totalorder 0, %v444
        %v446 = vsel %vm445, 0, %v444
        %v447 = vsub.s32 32, %v446
        %v448 = vshll.u32 %v439, %v446
        %v449 = vshrl.u32 %v431, %v447
        %v450 = vor.u32 %v448, %v449
        %v451 = vsub.s32 4294967266, %v446
        %v452 = vadd.s32 %v451, 127
        %v453 = vshll.u32 %v452, 23
        %v454 = vor.u32 4788187, %v453
        %v455 = vand.u32 2147483647, %v454
        %v457 = vcvt.s32.f32 %v450
        %v458 = vmul.f32 %v457, %v455
        %v459 = vxor.u32 %v458, 2147483648
        %v460 = vsel %vm377, %v459, %v458
        %v461 = vsub.s32 4, %v437
        %v462 = vsel %vm377, %v461, %v437
        %v463 = vsel %vm376, %v362, %v460
        %v464 = vsel %vm376, 0, %v462
        %v465 = vcosq.f32.pop %v463
        %v466 = vsinq.f32.pop %v463
        %vm467 = vweird.f32 %v362
        %v468 = vadd.s32 %v464, 3
        %v469 = vand.u32 %v468, 3
        %vm470 = vcmp.lt.s32.totalorder %v469, 2
        %vm471 = vcmp.eq.s32.totalorder %v469, 0
        %v472 = vxor.u32 %v466, 2147483648
        %v473 = vsel %vm471, %v465, %v472
        %vm474 = vcmp.eq.s32.totalorder %v469, 2
        %v475 = vxor.u32 %v465, 2147483648
        %v476 = vsel %vm474, %v475, %v466
        %v477 = vsel %vm470, %v473, %v476
        %v478 = vsel %vm467, nan, %v477
        %v479 = vand.u32 2147483647, %v363
        %vm480 = vcmp.le.f32.partialorder %v479, 0.7853982
        %vm481 = vcmp.lt.s32.totalorder %v363, 0
        %v482 = vand.u32 %v363, 2139095040
        %v483 = vshrl.u32 %v482, 23
        %v484 = vsub.s32 %v483, 127
        %v485 = vand.u32 2147483647, %v363
        %v486 = vand.u32 %v485, 8388607
        %v487 = vor.u32 %v486, 8388608
        %v488 = vsub.s32 0, %v487
        %v489 = vadd.s32 %v484, 1
        %vm490 = vcmp.gt.s32.totalorder %v489, 0
        %v491 = vsel %vm490, %v489, 0
        %v492 = vshrl.u32 %v491, 5
        %v493 = vand.u32 %v491, 31
        %v494 = vsub.s32 32, %v493
        %v495 = vshrl.u32 683565275, %v494
        %v496 = vshll.u32 683565275, %v493
        %v497 = vshrl.u32 2475754826, %v494
        %v498 = vor.u32 %v496, %v497
        %v499 = vshll.u32 2475754826, %v493
        %v500 = vshrl.u32 2131351028, %v494
        %v501 = vor.u32 %v499, %v500
        %v502 = vshll.u32 2131351028, %v493
        %v503 = vshrl.u32 2102212464, %v494
        %v504 = vor.u32 %v502, %v503
        %v505 = vshll.u32 2102212464, %v493
        %v506 = vshrl.u32 920167782, %v494
        %v507 = vor.u32 %v505, %v506
        %v508 = vshll.u32 920167782, %v493
        %v509 = vshrl.u32 1326507024, %v494
        %v510 = vor.u32 %v508, %v509
        %vm511 = vcmp.lt.s32.totalorder %v492, 1
        %vm512 = vcmp.lt.s32.totalorder %v492, 2
        %vm513 = vcmp.lt.s32.totalorder %v492, 3
        %vm514 = vcmp.lt.s32.totalorder %v492, 4
        %v515 = vsel %vm511, %v495, %v498
        %v516 = vsel %vm514, %v504, 2102212464
        %v517 = vsel %vm513, %v501, %v516
        %v518 = vsel %vm512, %v515, %v517
        %v519 = vsel %vm511, %v498, %v501
        %v520 = vsel %vm514, %v507, 920167782
        %v521 = vsel %vm513, %v504, %v520
        %v522 = vsel %vm512, %v519, %v521
        %v523 = vsel %vm511, %v501, %v504
        %v524 = vsel %vm514, %v510, 1326507024
        %v525 = vsel %vm513, %v507, %v524
        %v526 = vsel %vm512, %v523, %v525
        %v527 = vshll.u32 %v487, 8
        %v528 = vmul.u32.u64.compose %v527, %v526
        %v529 = vextract.low.u32 %v528
        %v530 = vextract.high.u32 %v528
        %v531 = vmul.u32.u64.compose %v527, %v522
        %v532 = vextract.low.u32 %v531
        %v533 = vextract.high.u32 %v531
        %v534 = vmul.u32 %v527, %v518
        %v535 = vadd.s32 %v530, %v532
        %vm536 = vc.u32 %v530, %v532
        %v537 = vadd.s32 %v533, 1
        %v538 = vsel %vm536, %v537, %v533
        %v539 = vadd.s32 %v534, %v538
        %v540 = vadd.s32 %v539, 536870912
        %v541 = vshrl.u32 %v540, 30
        %v542 = vshll.u32 %v541, 30
        %v543 = vsub.s32 %v539, %v542
        %vm544 = vcmp.lt.s32.totalorder %v543, 0
        %v545 = vsub.s32 0, %v543
        %v546 = vsel %vm544, %v545, %v543
        %v547 = vclz %v546
        %v548 = vsub.s32 %v547, 2
        %vm549 = vcmp.gt.s32.totalorder 0, %v548
        %v550 = vsel %vm549, 0, %v548
        %v551 = vsub.s32 32, %v550
        %v552 = vshll.u32 %v543, %v550
        %v553 = vshrl.u32 %v535, %v551
        %v554 = vor.u32 %v552, %v553
        %v555 = vsub.s32 4294967266, %v550
        %v556 = vadd.s32 %v555, 127
        %v557 = vshll.u32 %v556, 23
        %v558 = vor.u32 4788187, %v557
        %v559 = vand.u32 2147483647, %v558
        %v561 = vcvt.s32.f32 %v554
        %v562 = vmul.f32 %v561, %v559
        %v563 = vxor.u32 %v562, 2147483648
        %v564 = vsel %vm481, %v563, %v562
        %v565 = vsub.s32 4, %v541
        %v566 = vsel %vm481, %v565, %v541
        %v567 = vsel %vm480, %v363, %v564
        %v568 = vsel %vm480, 0, %v566
        %v569 = vcosq.f32.pop %v567
        %v570 = vsinq.f32.pop %v567
        %vm571 = vweird.f32 %v363
        %v572 = vadd.s32 %v568, 3
        %v573 = vand.u32 %v572, 3
        %vm574 = vcmp.lt.s32.totalorder %v573, 2
        %vm575 = vcmp.eq.s32.totalorder %v573, 0
        %v576 = vxor.u32 %v570, 2147483648
        %v577 = vsel %vm575, %v569, %v576
        %vm578 = vcmp.eq.s32.totalorder %v573, 2
        %v579 = vxor.u32 %v569, 2147483648
        %v580 = vsel %vm578, %v579, %v570
        %v581 = vsel %vm574, %v577, %v580
        %v582 = vsel %vm571, nan, %v581
        %v583 = vand.u32 2147483647, %v364
        %vm584 = vcmp.le.f32.partialorder %v583, 0.7853982
        %vm585 = vcmp.lt.s32.totalorder %v364, 0
        %v586 = vand.u32 %v364, 2139095040
        %v587 = vshrl.u32 %v586, 23
        %v588 = vsub.s32 %v587, 127
        %v589 = vand.u32 2147483647, %v364
        %v590 = vand.u32 %v589, 8388607
        %v591 = vor.u32 %v590, 8388608
        %v592 = vsub.s32 0, %v591
        %v593 = vadd.s32 %v588, 1
        %vm594 = vcmp.gt.s32.totalorder %v593, 0
        %v595 = vsel %vm594, %v593, 0
        %v596 = vshrl.u32 %v595, 5
        %v597 = vand.u32 %v595, 31
        %v598 = vsub.s32 32, %v597
        %v599 = vshrl.u32 683565275, %v598
        %v600 = vshll.u32 683565275, %v597
        %v601 = vshrl.u32 2475754826, %v598
        %v602 = vor.u32 %v600, %v601
        %v603 = vshll.u32 2475754826, %v597
        %v604 = vshrl.u32 2131351028, %v598
        %v605 = vor.u32 %v603, %v604
        %v606 = vshll.u32 2131351028, %v597
        %v607 = vshrl.u32 2102212464, %v598
        %v608 = vor.u32 %v606, %v607
        %v609 = vshll.u32 2102212464, %v597
        %v610 = vshrl.u32 920167782, %v598
        %v611 = vor.u32 %v609, %v610
        %v612 = vshll.u32 920167782, %v597
        %v613 = vshrl.u32 1326507024, %v598
        %v614 = vor.u32 %v612, %v613
        %vm615 = vcmp.lt.s32.totalorder %v596, 1
        %vm616 = vcmp.lt.s32.totalorder %v596, 2
        %vm617 = vcmp.lt.s32.totalorder %v596, 3
        %vm618 = vcmp.lt.s32.totalorder %v596, 4
        %v619 = vsel %vm615, %v599, %v602
        %v620 = vsel %vm618, %v608, 2102212464
        %v621 = vsel %vm617, %v605, %v620
        %v622 = vsel %vm616, %v619, %v621
        %v623 = vsel %vm615, %v602, %v605
        %v624 = vsel %vm618, %v611, 920167782
        %v625 = vsel %vm617, %v608, %v624
        %v626 = vsel %vm616, %v623, %v625
        %v627 = vsel %vm615, %v605, %v608
        %v628 = vsel %vm618, %v614, 1326507024
        %v629 = vsel %vm617, %v611, %v628
        %v630 = vsel %vm616, %v627, %v629
        %v631 = vshll.u32 %v591, 8
        %v632 = vmul.u32.u64.compose %v631, %v630
        %v633 = vextract.low.u32 %v632
        %v634 = vextract.high.u32 %v632
        %v635 = vmul.u32.u64.compose %v631, %v626
        %v636 = vextract.low.u32 %v635
        %v637 = vextract.high.u32 %v635
        %v638 = vmul.u32 %v631, %v622
        %v639 = vadd.s32 %v634, %v636
        %vm640 = vc.u32 %v634, %v636
        %v641 = vadd.s32 %v637, 1
        %v642 = vsel %vm640, %v641, %v637
        %v643 = vadd.s32 %v638, %v642
        %v644 = vadd.s32 %v643, 536870912
        %v645 = vshrl.u32 %v644, 30
        %v646 = vshll.u32 %v645, 30
        %v647 = vsub.s32 %v643, %v646
        %vm648 = vcmp.lt.s32.totalorder %v647, 0
        %v649 = vsub.s32 0, %v647
        %v650 = vsel %vm648, %v649, %v647
        %v651 = vclz %v650
        %v652 = vsub.s32 %v651, 2
        %vm653 = vcmp.gt.s32.totalorder 0, %v652
        %v654 = vsel %vm653, 0, %v652
        %v655 = vsub.s32 32, %v654
        %v656 = vshll.u32 %v647, %v654
        %v657 = vshrl.u32 %v639, %v655
        %v658 = vor.u32 %v656, %v657
        %v659 = vsub.s32 4294967266, %v654
        %v660 = vadd.s32 %v659, 127
        %v661 = vshll.u32 %v660, 23
        %v662 = vor.u32 4788187, %v661
        %v663 = vand.u32 2147483647, %v662
        %v665 = vcvt.s32.f32 %v658
        %v666 = vmul.f32 %v665, %v663
        %v667 = vxor.u32 %v666, 2147483648
        %v668 = vsel %vm585, %v667, %v666
        %v669 = vsub.s32 4, %v645
        %v670 = vsel %vm585, %v669, %v645
        %v671 = vsel %vm584, %v364, %v668
        %v672 = vsel %vm584, 0, %v670
        %v673 = vcosq.f32.pop %v671
        %v674 = vsinq.f32.pop %v671
        %vm675 = vweird.f32 %v364
        %v676 = vadd.s32 %v672, 3
        %v677 = vand.u32 %v676, 3
        %vm678 = vcmp.lt.s32.totalorder %v677, 2
        %vm679 = vcmp.eq.s32.totalorder %v677, 0
        %v680 = vxor.u32 %v674, 2147483648
        %v681 = vsel %vm679, %v673, %v680
        %vm682 = vcmp.eq.s32.totalorder %v677, 2
        %v683 = vxor.u32 %v673, 2147483648
        %v684 = vsel %vm682, %v683, %v674
        %v685 = vsel %vm678, %v681, %v684
        %v686 = vsel %vm675, nan, %v685
        %v687 = vand.u32 2147483647, %v365
        %vm688 = vcmp.le.f32.partialorder %v687, 0.7853982
        %vm689 = vcmp.lt.s32.totalorder %v365, 0
        %v690 = vand.u32 %v365, 2139095040
        %v691 = vshrl.u32 %v690, 23
        %v692 = vsub.s32 %v691, 127
        %v693 = vand.u32 2147483647, %v365
        %v694 = vand.u32 %v693, 8388607
        %v695 = vor.u32 %v694, 8388608
        %v696 = vsub.s32 0, %v695
        %v697 = vadd.s32 %v692, 1
        %vm698 = vcmp.gt.s32.totalorder %v697, 0
        %v699 = vsel %vm698, %v697, 0
        %v700 = vshrl.u32 %v699, 5
        %v701 = vand.u32 %v699, 31
        %v702 = vsub.s32 32, %v701
        %v703 = vshrl.u32 683565275, %v702
        %v704 = vshll.u32 683565275, %v701
        %v705 = vshrl.u32 2475754826, %v702
        %v706 = vor.u32 %v704, %v705
        %v707 = vshll.u32 2475754826, %v701
        %v708 = vshrl.u32 2131351028, %v702
        %v709 = vor.u32 %v707, %v708
        %v710 = vshll.u32 2131351028, %v701
        %v711 = vshrl.u32 2102212464, %v702
        %v712 = vor.u32 %v710, %v711
        %v713 = vshll.u32 2102212464, %v701
        %v714 = vshrl.u32 920167782, %v702
        %v715 = vor.u32 %v713, %v714
        %v716 = vshll.u32 920167782, %v701
        %v717 = vshrl.u32 1326507024, %v702
        %v718 = vor.u32 %v716, %v717
        %vm719 = vcmp.lt.s32.totalorder %v700, 1
        %vm720 = vcmp.lt.s32.totalorder %v700, 2
        %vm721 = vcmp.lt.s32.totalorder %v700, 3
        %vm722 = vcmp.lt.s32.totalorder %v700, 4
        %v723 = vsel %vm719, %v703, %v706
        %v724 = vsel %vm722, %v712, 2102212464
        %v725 = vsel %vm721, %v709, %v724
        %v726 = vsel %vm720, %v723, %v725
        %v727 = vsel %vm719, %v706, %v709
        %v728 = vsel %vm722, %v715, 920167782
        %v729 = vsel %vm721, %v712, %v728
        %v730 = vsel %vm720, %v727, %v729
        %v731 = vsel %vm719, %v709, %v712
        %v732 = vsel %vm722, %v718, 1326507024
        %v733 = vsel %vm721, %v715, %v732
        %v734 = vsel %vm720, %v731, %v733
        %v735 = vshll.u32 %v695, 8
        %v736 = vmul.u32.u64.compose %v735, %v734
        %v737 = vextract.low.u32 %v736
        %v738 = vextract.high.u32 %v736
        %v739 = vmul.u32.u64.compose %v735, %v730
        %v740 = vextract.low.u32 %v739
        %v741 = vextract.high.u32 %v739
        %v742 = vmul.u32 %v735, %v726
        %v743 = vadd.s32 %v738, %v740
        %vm744 = vc.u32 %v738, %v740
        %v745 = vadd.s32 %v741, 1
        %v746 = vsel %vm744, %v745, %v741
        %v747 = vadd.s32 %v742, %v746
        %v748 = vadd.s32 %v747, 536870912
        %v749 = vshrl.u32 %v748, 30
        %v750 = vshll.u32 %v749, 30
        %v751 = vsub.s32 %v747, %v750
        %vm752 = vcmp.lt.s32.totalorder %v751, 0
        %v753 = vsub.s32 0, %v751
        %v754 = vsel %vm752, %v753, %v751
        %v755 = vclz %v754
        %v756 = vsub.s32 %v755, 2
        %vm757 = vcmp.gt.s32.totalorder 0, %v756
        %v758 = vsel %vm757, 0, %v756
        %v759 = vsub.s32 32, %v758
        %v760 = vshll.u32 %v751, %v758
        %v761 = vshrl.u32 %v743, %v759
        %v762 = vor.u32 %v760, %v761
        %v763 = vsub.s32 4294967266, %v758
        %v764 = vadd.s32 %v763, 127
        %v765 = vshll.u32 %v764, 23
        %v766 = vor.u32 4788187, %v765
        %v767 = vand.u32 2147483647, %v766
        %v769 = vcvt.s32.f32 %v762
        %v770 = vmul.f32 %v769, %v767
        %v771 = vxor.u32 %v770, 2147483648
        %v772 = vsel %vm689, %v771, %v770
        %v773 = vsub.s32 4, %v749
        %v774 = vsel %vm689, %v773, %v749
        %v775 = vsel %vm688, %v365, %v772
        %v776 = vsel %vm688, 0, %v774
        %v777 = vcosq.f32.pop %v775
        %v778 = vsinq.f32.pop %v775
        %vm779 = vweird.f32 %v365
        %v780 = vadd.s32 %v776, 3
        %v781 = vand.u32 %v780, 3
        %vm782 = vcmp.lt.s32.totalorder %v781, 2
        %vm783 = vcmp.eq.s32.totalorder %v781, 0
        %v784 = vxor.u32 %v778, 2147483648
        %v785 = vsel %vm783, %v777, %v784
        %vm786 = vcmp.eq.s32.totalorder %v781, 2
        %v787 = vxor.u32 %v777, 2147483648
        %v788 = vsel %vm786, %v787, %v778
        %v789 = vsel %vm782, %v785, %v788
        %v790 = vsel %vm779, nan, %v789
        %v791 = vand.u32 2147483647, %v366
        %vm792 = vcmp.le.f32.partialorder %v791, 0.7853982
        %vm793 = vcmp.lt.s32.totalorder %v366, 0
        %v794 = vand.u32 %v366, 2139095040
        %v795 = vshrl.u32 %v794, 23
        %v796 = vsub.s32 %v795, 127
        %v797 = vand.u32 2147483647, %v366
        %v798 = vand.u32 %v797, 8388607
        %v799 = vor.u32 %v798, 8388608
        %v800 = vsub.s32 0, %v799
        %v801 = vadd.s32 %v796, 1
        %vm802 = vcmp.gt.s32.totalorder %v801, 0
        %v803 = vsel %vm802, %v801, 0
        %v804 = vshrl.u32 %v803, 5
        %v805 = vand.u32 %v803, 31
        %v806 = vsub.s32 32, %v805
        %v807 = vshrl.u32 683565275, %v806
        %v808 = vshll.u32 683565275, %v805
        %v809 = vshrl.u32 2475754826, %v806
        %v810 = vor.u32 %v808, %v809
        %v811 = vshll.u32 2475754826, %v805
        %v812 = vshrl.u32 2131351028, %v806
        %v813 = vor.u32 %v811, %v812
        %v814 = vshll.u32 2131351028, %v805
        %v815 = vshrl.u32 2102212464, %v806
        %v816 = vor.u32 %v814, %v815
        %v817 = vshll.u32 2102212464, %v805
        %v818 = vshrl.u32 920167782, %v806
        %v819 = vor.u32 %v817, %v818
        %v820 = vshll.u32 920167782, %v805
        %v821 = vshrl.u32 1326507024, %v806
        %v822 = vor.u32 %v820, %v821
        %vm823 = vcmp.lt.s32.totalorder %v804, 1
        %vm824 = vcmp.lt.s32.totalorder %v804, 2
        %vm825 = vcmp.lt.s32.totalorder %v804, 3
        %vm826 = vcmp.lt.s32.totalorder %v804, 4
        %v827 = vsel %vm823, %v807, %v810
        %v828 = vsel %vm826, %v816, 2102212464
        %v829 = vsel %vm825, %v813, %v828
        %v830 = vsel %vm824, %v827, %v829
        %v831 = vsel %vm823, %v810, %v813
        %v832 = vsel %vm826, %v819, 920167782
        %v833 = vsel %vm825, %v816, %v832
        %v834 = vsel %vm824, %v831, %v833
        %v835 = vsel %vm823, %v813, %v816
        %v836 = vsel %vm826, %v822, 1326507024
        %v837 = vsel %vm825, %v819, %v836
        %v838 = vsel %vm824, %v835, %v837
        %v839 = vshll.u32 %v799, 8
        %v840 = vmul.u32.u64.compose %v839, %v838
        %v841 = vextract.low.u32 %v840
        %v842 = vextract.high.u32 %v840
        %v843 = vmul.u32.u64.compose %v839, %v834
        %v844 = vextract.low.u32 %v843
        %v845 = vextract.high.u32 %v843
        %v846 = vmul.u32 %v839, %v830
        %v847 = vadd.s32 %v842, %v844
        %vm848 = vc.u32 %v842, %v844
        %v849 = vadd.s32 %v845, 1
        %v850 = vsel %vm848, %v849, %v845
        %v851 = vadd.s32 %v846, %v850
        %v852 = vadd.s32 %v851, 536870912
        %v853 = vshrl.u32 %v852, 30
        %v854 = vshll.u32 %v853, 30
        %v855 = vsub.s32 %v851, %v854
        %vm856 = vcmp.lt.s32.totalorder %v855, 0
        %v857 = vsub.s32 0, %v855
        %v858 = vsel %vm856, %v857, %v855
        %v859 = vclz %v858
        %v860 = vsub.s32 %v859, 2
        %vm861 = vcmp.gt.s32.totalorder 0, %v860
        %v862 = vsel %vm861, 0, %v860
        %v863 = vsub.s32 32, %v862
        %v864 = vshll.u32 %v855, %v862
        %v865 = vshrl.u32 %v847, %v863
        %v866 = vor.u32 %v864, %v865
        %v867 = vsub.s32 4294967266, %v862
        %v868 = vadd.s32 %v867, 127
        %v869 = vshll.u32 %v868, 23
        %v870 = vor.u32 4788187, %v869
        %v871 = vand.u32 2147483647, %v870
        %v873 = vcvt.s32.f32 %v866
        %v874 = vmul.f32 %v873, %v871
        %v875 = vxor.u32 %v874, 2147483648
        %v876 = vsel %vm793, %v875, %v874
        %v877 = vsub.s32 4, %v853
        %v878 = vsel %vm793, %v877, %v853
        %v879 = vsel %vm792, %v366, %v876
        %v880 = vsel %vm792, 0, %v878
        %v881 = vcosq.f32.pop %v879
        %v882 = vsinq.f32.pop %v879
        %vm883 = vweird.f32 %v366
        %v884 = vadd.s32 %v880, 3
        %v885 = vand.u32 %v884, 3
        %vm886 = vcmp.lt.s32.totalorder %v885, 2
        %vm887 = vcmp.eq.s32.totalorder %v885, 0
        %v888 = vxor.u32 %v882, 2147483648
        %v889 = vsel %vm887, %v881, %v888
        %vm890 = vcmp.eq.s32.totalorder %v885, 2
        %v891 = vxor.u32 %v881, 2147483648
        %v892 = vsel %vm890, %v891, %v882
        %v893 = vsel %vm886, %v889, %v892
        %v894 = vsel %vm883, nan, %v893
        %v895 = vand.u32 2147483647, %v367
        %vm896 = vcmp.le.f32.partialorder %v895, 0.7853982
        %vm897 = vcmp.lt.s32.totalorder %v367, 0
        %v898 = vand.u32 %v367, 2139095040
        %v899 = vshrl.u32 %v898, 23
        %v900 = vsub.s32 %v899, 127
        %v901 = vand.u32 2147483647, %v367
        %v902 = vand.u32 %v901, 8388607
        %v903 = vor.u32 %v902, 8388608
        %v904 = vsub.s32 0, %v903
        %v905 = vadd.s32 %v900, 1
        %vm906 = vcmp.gt.s32.totalorder %v905, 0
        %v907 = vsel %vm906, %v905, 0
        %v908 = vshrl.u32 %v907, 5
        %v909 = vand.u32 %v907, 31
        %v910 = vsub.s32 32, %v909
        %v911 = vshrl.u32 683565275, %v910
        %v912 = vshll.u32 683565275, %v909
        %v913 = vshrl.u32 2475754826, %v910
        %v914 = vor.u32 %v912, %v913
        %v915 = vshll.u32 2475754826, %v909
        %v916 = vshrl.u32 2131351028, %v910
        %v917 = vor.u32 %v915, %v916
        %v918 = vshll.u32 2131351028, %v909
        %v919 = vshrl.u32 2102212464, %v910
        %v920 = vor.u32 %v918, %v919
        %v921 = vshll.u32 2102212464, %v909
        %v922 = vshrl.u32 920167782, %v910
        %v923 = vor.u32 %v921, %v922
        %v924 = vshll.u32 920167782, %v909
        %v925 = vshrl.u32 1326507024, %v910
        %v926 = vor.u32 %v924, %v925
        %vm927 = vcmp.lt.s32.totalorder %v908, 1
        %vm928 = vcmp.lt.s32.totalorder %v908, 2
        %vm929 = vcmp.lt.s32.totalorder %v908, 3
        %vm930 = vcmp.lt.s32.totalorder %v908, 4
        %v931 = vsel %vm927, %v911, %v914
        %v932 = vsel %vm930, %v920, 2102212464
        %v933 = vsel %vm929, %v917, %v932
        %v934 = vsel %vm928, %v931, %v933
        %v935 = vsel %vm927, %v914, %v917
        %v936 = vsel %vm930, %v923, 920167782
        %v937 = vsel %vm929, %v920, %v936
        %v938 = vsel %vm928, %v935, %v937
        %v939 = vsel %vm927, %v917, %v920
        %v940 = vsel %vm930, %v926, 1326507024
        %v941 = vsel %vm929, %v923, %v940
        %v942 = vsel %vm928, %v939, %v941
        %v943 = vshll.u32 %v903, 8
        %v944 = vmul.u32.u64.compose %v943, %v942
        %v945 = vextract.low.u32 %v944
        %v946 = vextract.high.u32 %v944
        %v947 = vmul.u32.u64.compose %v943, %v938
        %v948 = vextract.low.u32 %v947
        %v949 = vextract.high.u32 %v947
        %v950 = vmul.u32 %v943, %v934
        %v951 = vadd.s32 %v946, %v948
        %vm952 = vc.u32 %v946, %v948
        %v953 = vadd.s32 %v949, 1
        %v954 = vsel %vm952, %v953, %v949
        %v955 = vadd.s32 %v950, %v954
        %v956 = vadd.s32 %v955, 536870912
        %v957 = vshrl.u32 %v956, 30
        %v958 = vshll.u32 %v957, 30
        %v959 = vsub.s32 %v955, %v958
        %vm960 = vcmp.lt.s32.totalorder %v959, 0
        %v961 = vsub.s32 0, %v959
        %v962 = vsel %vm960, %v961, %v959
        %v963 = vclz %v962
        %v964 = vsub.s32 %v963, 2
        %vm965 = vcmp.gt.s32.totalorder 0, %v964
        %v966 = vsel %vm965, 0, %v964
        %v967 = vsub.s32 32, %v966
        %v968 = vshll.u32 %v959, %v966
        %v969 = vshrl.u32 %v951, %v967
        %v970 = vor.u32 %v968, %v969
        %v971 = vsub.s32 4294967266, %v966
        %v972 = vadd.s32 %v971, 127
        %v973 = vshll.u32 %v972, 23
        %v974 = vor.u32 4788187, %v973
        %v975 = vand.u32 2147483647, %v974
        %v977 = vcvt.s32.f32 %v970
        %v978 = vmul.f32 %v977, %v975
        %v979 = vxor.u32 %v978, 2147483648
        %v980 = vsel %vm897, %v979, %v978
        %v981 = vsub.s32 4, %v957
        %v982 = vsel %vm897, %v981, %v957
        %v983 = vsel %vm896, %v367, %v980
        %v984 = vsel %vm896, 0, %v982
        %v985 = vcosq.f32.pop %v983
        %v986 = vsinq.f32.pop %v983
        %vm987 = vweird.f32 %v367
        %v988 = vadd.s32 %v984, 3
        %v989 = vand.u32 %v988, 3
        %vm990 = vcmp.lt.s32.totalorder %v989, 2
        %vm991 = vcmp.eq.s32.totalorder %v989, 0
        %v992 = vxor.u32 %v986, 2147483648
        %v993 = vsel %vm991, %v985, %v992
        %vm994 = vcmp.eq.s32.totalorder %v989, 2
        %v995 = vxor.u32 %v985, 2147483648
        %v996 = vsel %vm994, %v995, %v986
        %v997 = vsel %vm990, %v993, %v996
        %v998 = vsel %vm987, nan, %v997
        %v999 = vand.u32 2147483647, %v368
        %vm1000 = vcmp.le.f32.partialorder %v999, 0.7853982
        %vm1001 = vcmp.lt.s32.totalorder %v368, 0
        %v1002 = vand.u32 %v368, 2139095040
        %v1003 = vshrl.u32 %v1002, 23
        %v1004 = vsub.s32 %v1003, 127
        %v1005 = vand.u32 2147483647, %v368
        %v1006 = vand.u32 %v1005, 8388607
        %v1007 = vor.u32 %v1006, 8388608
        %v1008 = vsub.s32 0, %v1007
        %v1009 = vadd.s32 %v1004, 1
        %vm1010 = vcmp.gt.s32.totalorder %v1009, 0
        %v1011 = vsel %vm1010, %v1009, 0
        %v1012 = vshrl.u32 %v1011, 5
        %v1013 = vand.u32 %v1011, 31
        %v1014 = vsub.s32 32, %v1013
        %v1015 = vshrl.u32 683565275, %v1014
        %v1016 = vshll.u32 683565275, %v1013
        %v1017 = vshrl.u32 2475754826, %v1014
        %v1018 = vor.u32 %v1016, %v1017
        %v1019 = vshll.u32 2475754826, %v1013
        %v1020 = vshrl.u32 2131351028, %v1014
        %v1021 = vor.u32 %v1019, %v1020
        %v1022 = vshll.u32 2131351028, %v1013
        %v1023 = vshrl.u32 2102212464, %v1014
        %v1024 = vor.u32 %v1022, %v1023
        %v1025 = vshll.u32 2102212464, %v1013
        %v1026 = vshrl.u32 920167782, %v1014
        %v1027 = vor.u32 %v1025, %v1026
        %v1028 = vshll.u32 920167782, %v1013
        %v1029 = vshrl.u32 1326507024, %v1014
        %v1030 = vor.u32 %v1028, %v1029
        %vm1031 = vcmp.lt.s32.totalorder %v1012, 1
        %vm1032 = vcmp.lt.s32.totalorder %v1012, 2
        %vm1033 = vcmp.lt.s32.totalorder %v1012, 3
        %vm1034 = vcmp.lt.s32.totalorder %v1012, 4
        %v1035 = vsel %vm1031, %v1015, %v1018
        %v1036 = vsel %vm1034, %v1024, 2102212464
        %v1037 = vsel %vm1033, %v1021, %v1036
        %v1038 = vsel %vm1032, %v1035, %v1037
        %v1039 = vsel %vm1031, %v1018, %v1021
        %v1040 = vsel %vm1034, %v1027, 920167782
        %v1041 = vsel %vm1033, %v1024, %v1040
        %v1042 = vsel %vm1032, %v1039, %v1041
        %v1043 = vsel %vm1031, %v1021, %v1024
        %v1044 = vsel %vm1034, %v1030, 1326507024
        %v1045 = vsel %vm1033, %v1027, %v1044
        %v1046 = vsel %vm1032, %v1043, %v1045
        %v1047 = vshll.u32 %v1007, 8
        %v1048 = vmul.u32.u64.compose %v1047, %v1046
        %v1049 = vextract.low.u32 %v1048
        %v1050 = vextract.high.u32 %v1048
        %v1051 = vmul.u32.u64.compose %v1047, %v1042
        %v1052 = vextract.low.u32 %v1051
        %v1053 = vextract.high.u32 %v1051
        %v1054 = vmul.u32 %v1047, %v1038
        %v1055 = vadd.s32 %v1050, %v1052
        %vm1056 = vc.u32 %v1050, %v1052
        %v1057 = vadd.s32 %v1053, 1
        %v1058 = vsel %vm1056, %v1057, %v1053
        %v1059 = vadd.s32 %v1054, %v1058
        %v1060 = vadd.s32 %v1059, 536870912
        %v1061 = vshrl.u32 %v1060, 30
        %v1062 = vshll.u32 %v1061, 30
        %v1063 = vsub.s32 %v1059, %v1062
        %vm1064 = vcmp.lt.s32.totalorder %v1063, 0
        %v1065 = vsub.s32 0, %v1063
        %v1066 = vsel %vm1064, %v1065, %v1063
        %v1067 = vclz %v1066
        %v1068 = vsub.s32 %v1067, 2
        %vm1069 = vcmp.gt.s32.totalorder 0, %v1068
        %v1070 = vsel %vm1069, 0, %v1068
        %v1071 = vsub.s32 32, %v1070
        %v1072 = vshll.u32 %v1063, %v1070
        %v1073 = vshrl.u32 %v1055, %v1071
        %v1074 = vor.u32 %v1072, %v1073
        %v1075 = vsub.s32 4294967266, %v1070
        %v1076 = vadd.s32 %v1075, 127
        %v1077 = vshll.u32 %v1076, 23
        %v1078 = vor.u32 4788187, %v1077
        %v1079 = vand.u32 2147483647, %v1078
        %v1081 = vcvt.s32.f32 %v1074
        %v1082 = vmul.f32 %v1081, %v1079
        %v1083 = vxor.u32 %v1082, 2147483648
        %v1084 = vsel %vm1001, %v1083, %v1082
        %v1085 = vsub.s32 4, %v1061
        %v1086 = vsel %vm1001, %v1085, %v1061
        %v1087 = vsel %vm1000, %v368, %v1084
        %v1088 = vsel %vm1000, 0, %v1086
        %v1089 = vcosq.f32.pop %v1087
        %v1090 = vsinq.f32.pop %v1087
        %vm1091 = vweird.f32 %v368
        %v1092 = vadd.s32 %v1088, 3
        %v1093 = vand.u32 %v1092, 3
        %vm1094 = vcmp.lt.s32.totalorder %v1093, 2
        %vm1095 = vcmp.eq.s32.totalorder %v1093, 0
        %v1096 = vxor.u32 %v1090, 2147483648
        %v1097 = vsel %vm1095, %v1089, %v1096
        %vm1098 = vcmp.eq.s32.totalorder %v1093, 2
        %v1099 = vxor.u32 %v1089, 2147483648
        %v1100 = vsel %vm1098, %v1099, %v1090
        %v1101 = vsel %vm1094, %v1097, %v1100
        %v1102 = vsel %vm1091, nan, %v1101
        %v1103 = vand.u32 2147483647, %v369
        %vm1104 = vcmp.le.f32.partialorder %v1103, 0.7853982
        %vm1105 = vcmp.lt.s32.totalorder %v369, 0
        %v1106 = vand.u32 %v369, 2139095040
        %v1107 = vshrl.u32 %v1106, 23
        %v1108 = vsub.s32 %v1107, 127
        %v1109 = vand.u32 2147483647, %v369
        %v1110 = vand.u32 %v1109, 8388607
        %v1111 = vor.u32 %v1110, 8388608
        %v1112 = vsub.s32 0, %v1111
        %v1113 = vadd.s32 %v1108, 1
        %vm1114 = vcmp.gt.s32.totalorder %v1113, 0
        %v1115 = vsel %vm1114, %v1113, 0
        %v1116 = vshrl.u32 %v1115, 5
        %v1117 = vand.u32 %v1115, 31
        %v1118 = vsub.s32 32, %v1117
        %v1119 = vshrl.u32 683565275, %v1118
        %v1120 = vshll.u32 683565275, %v1117
        %v1121 = vshrl.u32 2475754826, %v1118
        %v1122 = vor.u32 %v1120, %v1121
        %v1123 = vshll.u32 2475754826, %v1117
        %v1124 = vshrl.u32 2131351028, %v1118
        %v1125 = vor.u32 %v1123, %v1124
        %v1126 = vshll.u32 2131351028, %v1117
        %v1127 = vshrl.u32 2102212464, %v1118
        %v1128 = vor.u32 %v1126, %v1127
        %v1129 = vshll.u32 2102212464, %v1117
        %v1130 = vshrl.u32 920167782, %v1118
        %v1131 = vor.u32 %v1129, %v1130
        %v1132 = vshll.u32 920167782, %v1117
        %v1133 = vshrl.u32 1326507024, %v1118
        %v1134 = vor.u32 %v1132, %v1133
        %vm1135 = vcmp.lt.s32.totalorder %v1116, 1
        %vm1136 = vcmp.lt.s32.totalorder %v1116, 2
        %vm1137 = vcmp.lt.s32.totalorder %v1116, 3
        %vm1138 = vcmp.lt.s32.totalorder %v1116, 4
        %v1139 = vsel %vm1135, %v1119, %v1122
        %v1140 = vsel %vm1138, %v1128, 2102212464
        %v1141 = vsel %vm1137, %v1125, %v1140
        %v1142 = vsel %vm1136, %v1139, %v1141
        %v1143 = vsel %vm1135, %v1122, %v1125
        %v1144 = vsel %vm1138, %v1131, 920167782
        %v1145 = vsel %vm1137, %v1128, %v1144
        %v1146 = vsel %vm1136, %v1143, %v1145
        %v1147 = vsel %vm1135, %v1125, %v1128
        %v1148 = vsel %vm1138, %v1134, 1326507024
        %v1149 = vsel %vm1137, %v1131, %v1148
        %v1150 = vsel %vm1136, %v1147, %v1149
        %v1151 = vshll.u32 %v1111, 8
        %v1152 = vmul.u32.u64.compose %v1151, %v1150
        %v1153 = vextract.low.u32 %v1152
        %v1154 = vextract.high.u32 %v1152
        %v1155 = vmul.u32.u64.compose %v1151, %v1146
        %v1156 = vextract.low.u32 %v1155
        %v1157 = vextract.high.u32 %v1155
        %v1158 = vmul.u32 %v1151, %v1142
        %v1159 = vadd.s32 %v1154, %v1156
        %vm1160 = vc.u32 %v1154, %v1156
        %v1161 = vadd.s32 %v1157, 1
        %v1162 = vsel %vm1160, %v1161, %v1157
        %v1163 = vadd.s32 %v1158, %v1162
        %v1164 = vadd.s32 %v1163, 536870912
        %v1165 = vshrl.u32 %v1164, 30
        %v1166 = vshll.u32 %v1165, 30
        %v1167 = vsub.s32 %v1163, %v1166
        %vm1168 = vcmp.lt.s32.totalorder %v1167, 0
        %v1169 = vsub.s32 0, %v1167
        %v1170 = vsel %vm1168, %v1169, %v1167
        %v1171 = vclz %v1170
        %v1172 = vsub.s32 %v1171, 2
        %vm1173 = vcmp.gt.s32.totalorder 0, %v1172
        %v1174 = vsel %vm1173, 0, %v1172
        %v1175 = vsub.s32 32, %v1174
        %v1176 = vshll.u32 %v1167, %v1174
        %v1177 = vshrl.u32 %v1159, %v1175
        %v1178 = vor.u32 %v1176, %v1177
        %v1179 = vsub.s32 4294967266, %v1174
        %v1180 = vadd.s32 %v1179, 127
        %v1181 = vshll.u32 %v1180, 23
        %v1182 = vor.u32 4788187, %v1181
        %v1183 = vand.u32 2147483647, %v1182
        %v1185 = vcvt.s32.f32 %v1178
        %v1186 = vmul.f32 %v1185, %v1183
        %v1187 = vxor.u32 %v1186, 2147483648
        %v1188 = vsel %vm1105, %v1187, %v1186
        %v1189 = vsub.s32 4, %v1165
        %v1190 = vsel %vm1105, %v1189, %v1165
        %v1191 = vsel %vm1104, %v369, %v1188
        %v1192 = vsel %vm1104, 0, %v1190
        %v1193 = vcosq.f32.pop %v1191
        %v1194 = vsinq.f32.pop %v1191
        %vm1195 = vweird.f32 %v369
        %v1196 = vadd.s32 %v1192, 3
        %v1197 = vand.u32 %v1196, 3
        %vm1198 = vcmp.lt.s32.totalorder %v1197, 2
        %vm1199 = vcmp.eq.s32.totalorder %v1197, 0
        %v1200 = vxor.u32 %v1194, 2147483648
        %v1201 = vsel %vm1199, %v1193, %v1200
        %vm1202 = vcmp.eq.s32.totalorder %v1197, 2
        %v1203 = vxor.u32 %v1193, 2147483648
        %v1204 = vsel %vm1202, %v1203, %v1194
        %v1205 = vsel %vm1198, %v1201, %v1204
        %v1206 = vsel %vm1195, nan, %v1205
        %v1207 = vand.u32 2147483647, %v370
        %vm1208 = vcmp.le.f32.partialorder %v1207, 0.7853982
        %vm1209 = vcmp.lt.s32.totalorder %v370, 0
        %v1210 = vand.u32 %v370, 2139095040
        %v1211 = vshrl.u32 %v1210, 23
        %v1212 = vsub.s32 %v1211, 127
        %v1213 = vand.u32 2147483647, %v370
        %v1214 = vand.u32 %v1213, 8388607
        %v1215 = vor.u32 %v1214, 8388608
        %v1216 = vsub.s32 0, %v1215
        %v1217 = vadd.s32 %v1212, 1
        %vm1218 = vcmp.gt.s32.totalorder %v1217, 0
        %v1219 = vsel %vm1218, %v1217, 0
        %v1220 = vshrl.u32 %v1219, 5
        %v1221 = vand.u32 %v1219, 31
        %v1222 = vsub.s32 32, %v1221
        %v1223 = vshrl.u32 683565275, %v1222
        %v1224 = vshll.u32 683565275, %v1221
        %v1225 = vshrl.u32 2475754826, %v1222
        %v1226 = vor.u32 %v1224, %v1225
        %v1227 = vshll.u32 2475754826, %v1221
        %v1228 = vshrl.u32 2131351028, %v1222
        %v1229 = vor.u32 %v1227, %v1228
        %v1230 = vshll.u32 2131351028, %v1221
        %v1231 = vshrl.u32 2102212464, %v1222
        %v1232 = vor.u32 %v1230, %v1231
        %v1233 = vshll.u32 2102212464, %v1221
        %v1234 = vshrl.u32 920167782, %v1222
        %v1235 = vor.u32 %v1233, %v1234
        %v1236 = vshll.u32 920167782, %v1221
        %v1237 = vshrl.u32 1326507024, %v1222
        %v1238 = vor.u32 %v1236, %v1237
        %vm1239 = vcmp.lt.s32.totalorder %v1220, 1
        %vm1240 = vcmp.lt.s32.totalorder %v1220, 2
        %vm1241 = vcmp.lt.s32.totalorder %v1220, 3
        %vm1242 = vcmp.lt.s32.totalorder %v1220, 4
        %v1243 = vsel %vm1239, %v1223, %v1226
        %v1244 = vsel %vm1242, %v1232, 2102212464
        %v1245 = vsel %vm1241, %v1229, %v1244
        %v1246 = vsel %vm1240, %v1243, %v1245
        %v1247 = vsel %vm1239, %v1226, %v1229
        %v1248 = vsel %vm1242, %v1235, 920167782
        %v1249 = vsel %vm1241, %v1232, %v1248
        %v1250 = vsel %vm1240, %v1247, %v1249
        %v1251 = vsel %vm1239, %v1229, %v1232
        %v1252 = vsel %vm1242, %v1238, 1326507024
        %v1253 = vsel %vm1241, %v1235, %v1252
        %v1254 = vsel %vm1240, %v1251, %v1253
        %v1255 = vshll.u32 %v1215, 8
        %v1256 = vmul.u32.u64.compose %v1255, %v1254
        %v1257 = vextract.low.u32 %v1256
        %v1258 = vextract.high.u32 %v1256
        %v1259 = vmul.u32.u64.compose %v1255, %v1250
        %v1260 = vextract.low.u32 %v1259
        %v1261 = vextract.high.u32 %v1259
        %v1262 = vmul.u32 %v1255, %v1246
        %v1263 = vadd.s32 %v1258, %v1260
        %vm1264 = vc.u32 %v1258, %v1260
        %v1265 = vadd.s32 %v1261, 1
        %v1266 = vsel %vm1264, %v1265, %v1261
        %v1267 = vadd.s32 %v1262, %v1266
        %v1268 = vadd.s32 %v1267, 536870912
        %v1269 = vshrl.u32 %v1268, 30
        %v1270 = vshll.u32 %v1269, 30
        %v1271 = vsub.s32 %v1267, %v1270
        %vm1272 = vcmp.lt.s32.totalorder %v1271, 0
        %v1273 = vsub.s32 0, %v1271
        %v1274 = vsel %vm1272, %v1273, %v1271
        %v1275 = vclz %v1274
        %v1276 = vsub.s32 %v1275, 2
        %vm1277 = vcmp.gt.s32.totalorder 0, %v1276
        %v1278 = vsel %vm1277, 0, %v1276
        %v1279 = vsub.s32 32, %v1278
        %v1280 = vshll.u32 %v1271, %v1278
        %v1281 = vshrl.u32 %v1263, %v1279
        %v1282 = vor.u32 %v1280, %v1281
        %v1283 = vsub.s32 4294967266, %v1278
        %v1284 = vadd.s32 %v1283, 127
        %v1285 = vshll.u32 %v1284, 23
        %v1286 = vor.u32 4788187, %v1285
        %v1287 = vand.u32 2147483647, %v1286
        %v1289 = vcvt.s32.f32 %v1282
        %v1290 = vmul.f32 %v1289, %v1287
        %v1291 = vxor.u32 %v1290, 2147483648
        %v1292 = vsel %vm1209, %v1291, %v1290
        %v1293 = vsub.s32 4, %v1269
        %v1294 = vsel %vm1209, %v1293, %v1269
        %v1295 = vsel %vm1208, %v370, %v1292
        %v1296 = vsel %vm1208, 0, %v1294
        %v1297 = vcosq.f32.pop %v1295
        %v1298 = vsinq.f32.pop %v1295
        %vm1299 = vweird.f32 %v370
        %v1300 = vadd.s32 %v1296, 3
        %v1301 = vand.u32 %v1300, 3
        %vm1302 = vcmp.lt.s32.totalorder %v1301, 2
        %vm1303 = vcmp.eq.s32.totalorder %v1301, 0
        %v1304 = vxor.u32 %v1298, 2147483648
        %v1305 = vsel %vm1303, %v1297, %v1304
        %vm1306 = vcmp.eq.s32.totalorder %v1301, 2
        %v1307 = vxor.u32 %v1297, 2147483648
        %v1308 = vsel %vm1306, %v1307, %v1298
        %v1309 = vsel %vm1302, %v1305, %v1308
        %v1310 = vsel %vm1299, nan, %v1309
        %v1311 = vand.u32 2147483647, %v371
        %vm1312 = vcmp.le.f32.partialorder %v1311, 0.7853982
        %vm1313 = vcmp.lt.s32.totalorder %v371, 0
        %v1314 = vand.u32 %v371, 2139095040
        %v1315 = vshrl.u32 %v1314, 23
        %v1316 = vsub.s32 %v1315, 127
        %v1317 = vand.u32 2147483647, %v371
        %v1318 = vand.u32 %v1317, 8388607
        %v1319 = vor.u32 %v1318, 8388608
        %v1320 = vsub.s32 0, %v1319
        %v1321 = vadd.s32 %v1316, 1
        %vm1322 = vcmp.gt.s32.totalorder %v1321, 0
        %v1323 = vsel %vm1322, %v1321, 0
        %v1324 = vshrl.u32 %v1323, 5
        %v1325 = vand.u32 %v1323, 31
        %v1326 = vsub.s32 32, %v1325
        %v1327 = vshrl.u32 683565275, %v1326
        %v1328 = vshll.u32 683565275, %v1325
        %v1329 = vshrl.u32 2475754826, %v1326
        %v1330 = vor.u32 %v1328, %v1329
        %v1331 = vshll.u32 2475754826, %v1325
        %v1332 = vshrl.u32 2131351028, %v1326
        %v1333 = vor.u32 %v1331, %v1332
        %v1334 = vshll.u32 2131351028, %v1325
        %v1335 = vshrl.u32 2102212464, %v1326
        %v1336 = vor.u32 %v1334, %v1335
        %v1337 = vshll.u32 2102212464, %v1325
        %v1338 = vshrl.u32 920167782, %v1326
        %v1339 = vor.u32 %v1337, %v1338
        %v1340 = vshll.u32 920167782, %v1325
        %v1341 = vshrl.u32 1326507024, %v1326
        %v1342 = vor.u32 %v1340, %v1341
        %vm1343 = vcmp.lt.s32.totalorder %v1324, 1
        %vm1344 = vcmp.lt.s32.totalorder %v1324, 2
        %vm1345 = vcmp.lt.s32.totalorder %v1324, 3
        %vm1346 = vcmp.lt.s32.totalorder %v1324, 4
        %v1347 = vsel %vm1343, %v1327, %v1330
        %v1348 = vsel %vm1346, %v1336, 2102212464
        %v1349 = vsel %vm1345, %v1333, %v1348
        %v1350 = vsel %vm1344, %v1347, %v1349
        %v1351 = vsel %vm1343, %v1330, %v1333
        %v1352 = vsel %vm1346, %v1339, 920167782
        %v1353 = vsel %vm1345, %v1336, %v1352
        %v1354 = vsel %vm1344, %v1351, %v1353
        %v1355 = vsel %vm1343, %v1333, %v1336
        %v1356 = vsel %vm1346, %v1342, 1326507024
        %v1357 = vsel %vm1345, %v1339, %v1356
        %v1358 = vsel %vm1344, %v1355, %v1357
        %v1359 = vshll.u32 %v1319, 8
        %v1360 = vmul.u32.u64.compose %v1359, %v1358
        %v1361 = vextract.low.u32 %v1360
        %v1362 = vextract.high.u32 %v1360
        %v1363 = vmul.u32.u64.compose %v1359, %v1354
        %v1364 = vextract.low.u32 %v1363
        %v1365 = vextract.high.u32 %v1363
        %v1366 = vmul.u32 %v1359, %v1350
        %v1367 = vadd.s32 %v1362, %v1364
        %vm1368 = vc.u32 %v1362, %v1364
        %v1369 = vadd.s32 %v1365, 1
        %v1370 = vsel %vm1368, %v1369, %v1365
        %v1371 = vadd.s32 %v1366, %v1370
        %v1372 = vadd.s32 %v1371, 536870912
        %v1373 = vshrl.u32 %v1372, 30
        %v1374 = vshll.u32 %v1373, 30
        %v1375 = vsub.s32 %v1371, %v1374
        %vm1376 = vcmp.lt.s32.totalorder %v1375, 0
        %v1377 = vsub.s32 0, %v1375
        %v1378 = vsel %vm1376, %v1377, %v1375
        %v1379 = vclz %v1378
        %v1380 = vsub.s32 %v1379, 2
        %vm1381 = vcmp.gt.s32.totalorder 0, %v1380
        %v1382 = vsel %vm1381, 0, %v1380
        %v1383 = vsub.s32 32, %v1382
        %v1384 = vshll.u32 %v1375, %v1382
        %v1385 = vshrl.u32 %v1367, %v1383
        %v1386 = vor.u32 %v1384, %v1385
        %v1387 = vsub.s32 4294967266, %v1382
        %v1388 = vadd.s32 %v1387, 127
        %v1389 = vshll.u32 %v1388, 23
        %v1390 = vor.u32 4788187, %v1389
        %v1391 = vand.u32 2147483647, %v1390
        %v1393 = vcvt.s32.f32 %v1386
        %v1394 = vmul.f32 %v1393, %v1391
        %v1395 = vxor.u32 %v1394, 2147483648
        %v1396 = vsel %vm1313, %v1395, %v1394
        %v1397 = vsub.s32 4, %v1373
        %v1398 = vsel %vm1313, %v1397, %v1373
        %v1399 = vsel %vm1312, %v371, %v1396
        %v1400 = vsel %vm1312, 0, %v1398
        %v1401 = vcosq.f32.pop %v1399
        %v1402 = vsinq.f32.pop %v1399
        %vm1403 = vweird.f32 %v371
        %v1404 = vadd.s32 %v1400, 3
        %v1405 = vand.u32 %v1404, 3
        %vm1406 = vcmp.lt.s32.totalorder %v1405, 2
        %vm1407 = vcmp.eq.s32.totalorder %v1405, 0
        %v1408 = vxor.u32 %v1402, 2147483648
        %v1409 = vsel %vm1407, %v1401, %v1408
        %vm1410 = vcmp.eq.s32.totalorder %v1405, 2
        %v1411 = vxor.u32 %v1401, 2147483648
        %v1412 = vsel %vm1410, %v1411, %v1402
        %v1413 = vsel %vm1406, %v1409, %v1412
        %v1414 = vsel %vm1403, nan, %v1413
        %v1415 = vand.u32 2147483647, %v372
        %vm1416 = vcmp.le.f32.partialorder %v1415, 0.7853982
        %vm1417 = vcmp.lt.s32.totalorder %v372, 0
        %v1418 = vand.u32 %v372, 2139095040
        %v1419 = vshrl.u32 %v1418, 23
        %v1420 = vsub.s32 %v1419, 127
        %v1421 = vand.u32 2147483647, %v372
        %v1422 = vand.u32 %v1421, 8388607
        %v1423 = vor.u32 %v1422, 8388608
        %v1424 = vsub.s32 0, %v1423
        %v1425 = vadd.s32 %v1420, 1
        %vm1426 = vcmp.gt.s32.totalorder %v1425, 0
        %v1427 = vsel %vm1426, %v1425, 0
        %v1428 = vshrl.u32 %v1427, 5
        %v1429 = vand.u32 %v1427, 31
        %v1430 = vsub.s32 32, %v1429
        %v1431 = vshrl.u32 683565275, %v1430
        %v1432 = vshll.u32 683565275, %v1429
        %v1433 = vshrl.u32 2475754826, %v1430
        %v1434 = vor.u32 %v1432, %v1433
        %v1435 = vshll.u32 2475754826, %v1429
        %v1436 = vshrl.u32 2131351028, %v1430
        %v1437 = vor.u32 %v1435, %v1436
        %v1438 = vshll.u32 2131351028, %v1429
        %v1439 = vshrl.u32 2102212464, %v1430
        %v1440 = vor.u32 %v1438, %v1439
        %v1441 = vshll.u32 2102212464, %v1429
        %v1442 = vshrl.u32 920167782, %v1430
        %v1443 = vor.u32 %v1441, %v1442
        %v1444 = vshll.u32 920167782, %v1429
        %v1445 = vshrl.u32 1326507024, %v1430
        %v1446 = vor.u32 %v1444, %v1445
        %vm1447 = vcmp.lt.s32.totalorder %v1428, 1
        %vm1448 = vcmp.lt.s32.totalorder %v1428, 2
        %vm1449 = vcmp.lt.s32.totalorder %v1428, 3
        %vm1450 = vcmp.lt.s32.totalorder %v1428, 4
        %v1451 = vsel %vm1447, %v1431, %v1434
        %v1452 = vsel %vm1450, %v1440, 2102212464
        %v1453 = vsel %vm1449, %v1437, %v1452
        %v1454 = vsel %vm1448, %v1451, %v1453
        %v1455 = vsel %vm1447, %v1434, %v1437
        %v1456 = vsel %vm1450, %v1443, 920167782
        %v1457 = vsel %vm1449, %v1440, %v1456
        %v1458 = vsel %vm1448, %v1455, %v1457
        %v1459 = vsel %vm1447, %v1437, %v1440
        %v1460 = vsel %vm1450, %v1446, 1326507024
        %v1461 = vsel %vm1449, %v1443, %v1460
        %v1462 = vsel %vm1448, %v1459, %v1461
        %v1463 = vshll.u32 %v1423, 8
        %v1464 = vmul.u32.u64.compose %v1463, %v1462
        %v1465 = vextract.low.u32 %v1464
        %v1466 = vextract.high.u32 %v1464
        %v1467 = vmul.u32.u64.compose %v1463, %v1458
        %v1468 = vextract.low.u32 %v1467
        %v1469 = vextract.high.u32 %v1467
        %v1470 = vmul.u32 %v1463, %v1454
        %v1471 = vadd.s32 %v1466, %v1468
        %vm1472 = vc.u32 %v1466, %v1468
        %v1473 = vadd.s32 %v1469, 1
        %v1474 = vsel %vm1472, %v1473, %v1469
        %v1475 = vadd.s32 %v1470, %v1474
        %v1476 = vadd.s32 %v1475, 536870912
        %v1477 = vshrl.u32 %v1476, 30
        %v1478 = vshll.u32 %v1477, 30
        %v1479 = vsub.s32 %v1475, %v1478
        %vm1480 = vcmp.lt.s32.totalorder %v1479, 0
        %v1481 = vsub.s32 0, %v1479
        %v1482 = vsel %vm1480, %v1481, %v1479
        %v1483 = vclz %v1482
        %v1484 = vsub.s32 %v1483, 2
        %vm1485 = vcmp.gt.s32.totalorder 0, %v1484
        %v1486 = vsel %vm1485, 0, %v1484
        %v1487 = vsub.s32 32, %v1486
        %v1488 = vshll.u32 %v1479, %v1486
        %v1489 = vshrl.u32 %v1471, %v1487
        %v1490 = vor.u32 %v1488, %v1489
        %v1491 = vsub.s32 4294967266, %v1486
        %v1492 = vadd.s32 %v1491, 127
        %v1493 = vshll.u32 %v1492, 23
        %v1494 = vor.u32 4788187, %v1493
        %v1495 = vand.u32 2147483647, %v1494
        %v1497 = vcvt.s32.f32 %v1490
        %v1498 = vmul.f32 %v1497, %v1495
        %v1499 = vxor.u32 %v1498, 2147483648
        %v1500 = vsel %vm1417, %v1499, %v1498
        %v1501 = vsub.s32 4, %v1477
        %v1502 = vsel %vm1417, %v1501, %v1477
        %v1503 = vsel %vm1416, %v372, %v1500
        %v1504 = vsel %vm1416, 0, %v1502
        %v1505 = vcosq.f32.pop %v1503
        %v1506 = vsinq.f32.pop %v1503
        %vm1507 = vweird.f32 %v372
        %v1508 = vadd.s32 %v1504, 3
        %v1509 = vand.u32 %v1508, 3
        %vm1510 = vcmp.lt.s32.totalorder %v1509, 2
        %vm1511 = vcmp.eq.s32.totalorder %v1509, 0
        %v1512 = vxor.u32 %v1506, 2147483648
        %v1513 = vsel %vm1511, %v1505, %v1512
        %vm1514 = vcmp.eq.s32.totalorder %v1509, 2
        %v1515 = vxor.u32 %v1505, 2147483648
        %v1516 = vsel %vm1514, %v1515, %v1506
        %v1517 = vsel %vm1510, %v1513, %v1516
        %v1518 = vsel %vm1507, nan, %v1517
        %v1519 = vand.u32 2147483647, %v373
        %vm1520 = vcmp.le.f32.partialorder %v1519, 0.7853982
        %vm1521 = vcmp.lt.s32.totalorder %v373, 0
        %v1522 = vand.u32 %v373, 2139095040
        %v1523 = vshrl.u32 %v1522, 23
        %v1524 = vsub.s32 %v1523, 127
        %v1525 = vand.u32 2147483647, %v373
        %v1526 = vand.u32 %v1525, 8388607
        %v1527 = vor.u32 %v1526, 8388608
        %v1528 = vsub.s32 0, %v1527
        %v1529 = vadd.s32 %v1524, 1
        %vm1530 = vcmp.gt.s32.totalorder %v1529, 0
        %v1531 = vsel %vm1530, %v1529, 0
        %v1532 = vshrl.u32 %v1531, 5
        %v1533 = vand.u32 %v1531, 31
        %v1534 = vsub.s32 32, %v1533
        %v1535 = vshrl.u32 683565275, %v1534
        %v1536 = vshll.u32 683565275, %v1533
        %v1537 = vshrl.u32 2475754826, %v1534
        %v1538 = vor.u32 %v1536, %v1537
        %v1539 = vshll.u32 2475754826, %v1533
        %v1540 = vshrl.u32 2131351028, %v1534
        %v1541 = vor.u32 %v1539, %v1540
        %v1542 = vshll.u32 2131351028, %v1533
        %v1543 = vshrl.u32 2102212464, %v1534
        %v1544 = vor.u32 %v1542, %v1543
        %v1545 = vshll.u32 2102212464, %v1533
        %v1546 = vshrl.u32 920167782, %v1534
        %v1547 = vor.u32 %v1545, %v1546
        %v1548 = vshll.u32 920167782, %v1533
        %v1549 = vshrl.u32 1326507024, %v1534
        %v1550 = vor.u32 %v1548, %v1549
        %vm1551 = vcmp.lt.s32.totalorder %v1532, 1
        %vm1552 = vcmp.lt.s32.totalorder %v1532, 2
        %vm1553 = vcmp.lt.s32.totalorder %v1532, 3
        %vm1554 = vcmp.lt.s32.totalorder %v1532, 4
        %v1555 = vsel %vm1551, %v1535, %v1538
        %v1556 = vsel %vm1554, %v1544, 2102212464
        %v1557 = vsel %vm1553, %v1541, %v1556
        %v1558 = vsel %vm1552, %v1555, %v1557
        %v1559 = vsel %vm1551, %v1538, %v1541
        %v1560 = vsel %vm1554, %v1547, 920167782
        %v1561 = vsel %vm1553, %v1544, %v1560
        %v1562 = vsel %vm1552, %v1559, %v1561
        %v1563 = vsel %vm1551, %v1541, %v1544
        %v1564 = vsel %vm1554, %v1550, 1326507024
        %v1565 = vsel %vm1553, %v1547, %v1564
        %v1566 = vsel %vm1552, %v1563, %v1565
        %v1567 = vshll.u32 %v1527, 8
        %v1568 = vmul.u32.u64.compose %v1567, %v1566
        %v1569 = vextract.low.u32 %v1568
        %v1570 = vextract.high.u32 %v1568
        %v1571 = vmul.u32.u64.compose %v1567, %v1562
        %v1572 = vextract.low.u32 %v1571
        %v1573 = vextract.high.u32 %v1571
        %v1574 = vmul.u32 %v1567, %v1558
        %v1575 = vadd.s32 %v1570, %v1572
        %vm1576 = vc.u32 %v1570, %v1572
        %v1577 = vadd.s32 %v1573, 1
        %v1578 = vsel %vm1576, %v1577, %v1573
        %v1579 = vadd.s32 %v1574, %v1578
        %v1580 = vadd.s32 %v1579, 536870912
        %v1581 = vshrl.u32 %v1580, 30
        %v1582 = vshll.u32 %v1581, 30
        %v1583 = vsub.s32 %v1579, %v1582
        %vm1584 = vcmp.lt.s32.totalorder %v1583, 0
        %v1585 = vsub.s32 0, %v1583
        %v1586 = vsel %vm1584, %v1585, %v1583
        %v1587 = vclz %v1586
        %v1588 = vsub.s32 %v1587, 2
        %vm1589 = vcmp.gt.s32.totalorder 0, %v1588
        %v1590 = vsel %vm1589, 0, %v1588
        %v1591 = vsub.s32 32, %v1590
        %v1592 = vshll.u32 %v1583, %v1590
        %v1593 = vshrl.u32 %v1575, %v1591
        %v1594 = vor.u32 %v1592, %v1593
        %v1595 = vsub.s32 4294967266, %v1590
        %v1596 = vadd.s32 %v1595, 127
        %v1597 = vshll.u32 %v1596, 23
        %v1598 = vor.u32 4788187, %v1597
        %v1599 = vand.u32 2147483647, %v1598
        %v1601 = vcvt.s32.f32 %v1594
        %v1602 = vmul.f32 %v1601, %v1599
        %v1603 = vxor.u32 %v1602, 2147483648
        %v1604 = vsel %vm1521, %v1603, %v1602
        %v1605 = vsub.s32 4, %v1581
        %v1606 = vsel %vm1521, %v1605, %v1581
        %v1607 = vsel %vm1520, %v373, %v1604
        %v1608 = vsel %vm1520, 0, %v1606
        %v1609 = vcosq.f32.pop %v1607
        %v1610 = vsinq.f32.pop %v1607
        %vm1611 = vweird.f32 %v373
        %v1612 = vadd.s32 %v1608, 3
        %v1613 = vand.u32 %v1612, 3
        %vm1614 = vcmp.lt.s32.totalorder %v1613, 2
        %vm1615 = vcmp.eq.s32.totalorder %v1613, 0
        %v1616 = vxor.u32 %v1610, 2147483648
        %v1617 = vsel %vm1615, %v1609, %v1616
        %vm1618 = vcmp.eq.s32.totalorder %v1613, 2
        %v1619 = vxor.u32 %v1609, 2147483648
        %v1620 = vsel %vm1618, %v1619, %v1610
        %v1621 = vsel %vm1614, %v1617, %v1620
        %v1622 = vsel %vm1611, nan, %v1621
        %v1623 = vand.u32 2147483647, %v374
        %vm1624 = vcmp.le.f32.partialorder %v1623, 0.7853982
        %vm1625 = vcmp.lt.s32.totalorder %v374, 0
        %v1626 = vand.u32 %v374, 2139095040
        %v1627 = vshrl.u32 %v1626, 23
        %v1628 = vsub.s32 %v1627, 127
        %v1629 = vand.u32 2147483647, %v374
        %v1630 = vand.u32 %v1629, 8388607
        %v1631 = vor.u32 %v1630, 8388608
        %v1632 = vsub.s32 0, %v1631
        %v1633 = vadd.s32 %v1628, 1
        %vm1634 = vcmp.gt.s32.totalorder %v1633, 0
        %v1635 = vsel %vm1634, %v1633, 0
        %v1636 = vshrl.u32 %v1635, 5
        %v1637 = vand.u32 %v1635, 31
        %v1638 = vsub.s32 32, %v1637
        %v1639 = vshrl.u32 683565275, %v1638
        %v1640 = vshll.u32 683565275, %v1637
        %v1641 = vshrl.u32 2475754826, %v1638
        %v1642 = vor.u32 %v1640, %v1641
        %v1643 = vshll.u32 2475754826, %v1637
        %v1644 = vshrl.u32 2131351028, %v1638
        %v1645 = vor.u32 %v1643, %v1644
        %v1646 = vshll.u32 2131351028, %v1637
        %v1647 = vshrl.u32 2102212464, %v1638
        %v1648 = vor.u32 %v1646, %v1647
        %v1649 = vshll.u32 2102212464, %v1637
        %v1650 = vshrl.u32 920167782, %v1638
        %v1651 = vor.u32 %v1649, %v1650
        %v1652 = vshll.u32 920167782, %v1637
        %v1653 = vshrl.u32 1326507024, %v1638
        %v1654 = vor.u32 %v1652, %v1653
        %vm1655 = vcmp.lt.s32.totalorder %v1636, 1
        %vm1656 = vcmp.lt.s32.totalorder %v1636, 2
        %vm1657 = vcmp.lt.s32.totalorder %v1636, 3
        %vm1658 = vcmp.lt.s32.totalorder %v1636, 4
        %v1659 = vsel %vm1655, %v1639, %v1642
        %v1660 = vsel %vm1658, %v1648, 2102212464
        %v1661 = vsel %vm1657, %v1645, %v1660
        %v1662 = vsel %vm1656, %v1659, %v1661
        %v1663 = vsel %vm1655, %v1642, %v1645
        %v1664 = vsel %vm1658, %v1651, 920167782
        %v1665 = vsel %vm1657, %v1648, %v1664
        %v1666 = vsel %vm1656, %v1663, %v1665
        %v1667 = vsel %vm1655, %v1645, %v1648
        %v1668 = vsel %vm1658, %v1654, 1326507024
        %v1669 = vsel %vm1657, %v1651, %v1668
        %v1670 = vsel %vm1656, %v1667, %v1669
        %v1671 = vshll.u32 %v1631, 8
        %v1672 = vmul.u32.u64.compose %v1671, %v1670
        %v1673 = vextract.low.u32 %v1672
        %v1674 = vextract.high.u32 %v1672
        %v1675 = vmul.u32.u64.compose %v1671, %v1666
        %v1676 = vextract.low.u32 %v1675
        %v1677 = vextract.high.u32 %v1675
        %v1678 = vmul.u32 %v1671, %v1662
        %v1679 = vadd.s32 %v1674, %v1676
        %vm1680 = vc.u32 %v1674, %v1676
        %v1681 = vadd.s32 %v1677, 1
        %v1682 = vsel %vm1680, %v1681, %v1677
        %v1683 = vadd.s32 %v1678, %v1682
        %v1684 = vadd.s32 %v1683, 536870912
        %v1685 = vshrl.u32 %v1684, 30
        %v1686 = vshll.u32 %v1685, 30
        %v1687 = vsub.s32 %v1683, %v1686
        %vm1688 = vcmp.lt.s32.totalorder %v1687, 0
        %v1689 = vsub.s32 0, %v1687
        %v1690 = vsel %vm1688, %v1689, %v1687
        %v1691 = vclz %v1690
        %v1692 = vsub.s32 %v1691, 2
        %vm1693 = vcmp.gt.s32.totalorder 0, %v1692
        %v1694 = vsel %vm1693, 0, %v1692
        %v1695 = vsub.s32 32, %v1694
        %v1696 = vshll.u32 %v1687, %v1694
        %v1697 = vshrl.u32 %v1679, %v1695
        %v1698 = vor.u32 %v1696, %v1697
        %v1699 = vsub.s32 4294967266, %v1694
        %v1700 = vadd.s32 %v1699, 127
        %v1701 = vshll.u32 %v1700, 23
        %v1702 = vor.u32 4788187, %v1701
        %v1703 = vand.u32 2147483647, %v1702
        %v1705 = vcvt.s32.f32 %v1698
        %v1706 = vmul.f32 %v1705, %v1703
        %v1707 = vxor.u32 %v1706, 2147483648
        %v1708 = vsel %vm1625, %v1707, %v1706
        %v1709 = vsub.s32 4, %v1685
        %v1710 = vsel %vm1625, %v1709, %v1685
        %v1711 = vsel %vm1624, %v374, %v1708
        %v1712 = vsel %vm1624, 0, %v1710
        %v1713 = vcosq.f32.pop %v1711
        %v1714 = vsinq.f32.pop %v1711
        %vm1715 = vweird.f32 %v374
        %v1716 = vadd.s32 %v1712, 3
        %v1717 = vand.u32 %v1716, 3
        %vm1718 = vcmp.lt.s32.totalorder %v1717, 2
        %vm1719 = vcmp.eq.s32.totalorder %v1717, 0
        %v1720 = vxor.u32 %v1714, 2147483648
        %v1721 = vsel %vm1719, %v1713, %v1720
        %vm1722 = vcmp.eq.s32.totalorder %v1717, 2
        %v1723 = vxor.u32 %v1713, 2147483648
        %v1724 = vsel %vm1722, %v1723, %v1714
        %v1725 = vsel %vm1718, %v1721, %v1724
        %v1726 = vsel %vm1715, nan, %v1725
        %v1727 = vld [vmem:[%s2] sm:$0xff]
        %v1728 = vld [vmem:[%s2 + $0x8] sm:$0xff]
        %v1729 = vand.u32 2147483647, %v362
        %vm1730 = vcmp.le.f32.partialorder %v1729, 0.7853982
        %vm1731 = vcmp.lt.s32.totalorder %v362, 0
        %v1732 = vand.u32 %v362, 2139095040
        %v1733 = vshrl.u32 %v1732, 23
        %v1734 = vsub.s32 %v1733, 127
        %v1735 = vand.u32 2147483647, %v362
        %v1736 = vand.u32 %v1735, 8388607
        %v1737 = vor.u32 %v1736, 8388608
        %v1738 = vsub.s32 0, %v1737
        %v1739 = vadd.s32 %v1734, 1
        %vm1740 = vcmp.gt.s32.totalorder %v1739, 0
        %v1741 = vsel %vm1740, %v1739, 0
        %v1742 = vshrl.u32 %v1741, 5
        %v1743 = vand.u32 %v1741, 31
        %v1744 = vsub.s32 32, %v1743
        %v1745 = vshrl.u32 683565275, %v1744
        %v1746 = vshll.u32 683565275, %v1743
        %v1747 = vshrl.u32 2475754826, %v1744
        %v1748 = vor.u32 %v1746, %v1747
        %v1749 = vshll.u32 2475754826, %v1743
        %v1750 = vshrl.u32 2131351028, %v1744
        %v1751 = vor.u32 %v1749, %v1750
        %v1752 = vshll.u32 2131351028, %v1743
        %v1753 = vshrl.u32 2102212464, %v1744
        %v1754 = vor.u32 %v1752, %v1753
        %v1755 = vshll.u32 2102212464, %v1743
        %v1756 = vshrl.u32 920167782, %v1744
        %v1757 = vor.u32 %v1755, %v1756
        %v1758 = vshll.u32 920167782, %v1743
        %v1759 = vshrl.u32 1326507024, %v1744
        %v1760 = vor.u32 %v1758, %v1759
        %vm1761 = vcmp.lt.s32.totalorder %v1742, 1
        %vm1762 = vcmp.lt.s32.totalorder %v1742, 2
        %vm1763 = vcmp.lt.s32.totalorder %v1742, 3
        %vm1764 = vcmp.lt.s32.totalorder %v1742, 4
        %v1765 = vsel %vm1761, %v1745, %v1748
        %v1766 = vsel %vm1764, %v1754, 2102212464
        %v1767 = vsel %vm1763, %v1751, %v1766
        %v1768 = vsel %vm1762, %v1765, %v1767
        %v1769 = vsel %vm1761, %v1748, %v1751
        %v1770 = vsel %vm1764, %v1757, 920167782
        %v1771 = vsel %vm1763, %v1754, %v1770
        %v1772 = vsel %vm1762, %v1769, %v1771
        %v1773 = vsel %vm1761, %v1751, %v1754
        %v1774 = vsel %vm1764, %v1760, 1326507024
        %v1775 = vsel %vm1763, %v1757, %v1774
        %v1776 = vsel %vm1762, %v1773, %v1775
        %v1777 = vshll.u32 %v1737, 8
        %v1778 = vmul.u32.u64.compose %v1777, %v1776
        %v1779 = vextract.low.u32 %v1778
        %v1780 = vextract.high.u32 %v1778
        %v1781 = vmul.u32.u64.compose %v1777, %v1772
        %v1782 = vextract.low.u32 %v1781
        %v1783 = vextract.high.u32 %v1781
        %v1784 = vmul.u32 %v1777, %v1768
        %v1785 = vadd.s32 %v1780, %v1782
        %vm1786 = vc.u32 %v1780, %v1782
        %v1787 = vadd.s32 %v1783, 1
        %v1788 = vsel %vm1786, %v1787, %v1783
        %v1789 = vadd.s32 %v1784, %v1788
        %v1790 = vadd.s32 %v1789, 536870912
        %v1791 = vshrl.u32 %v1790, 30
        %v1792 = vshll.u32 %v1791, 30
        %v1793 = vsub.s32 %v1789, %v1792
        %vm1794 = vcmp.lt.s32.totalorder %v1793, 0
        %v1795 = vsub.s32 0, %v1793
        %v1796 = vsel %vm1794, %v1795, %v1793
        %v1797 = vclz %v1796
        %v1798 = vsub.s32 %v1797, 2
        %vm1799 = vcmp.gt.s32.totalorder 0, %v1798
        %v1800 = vsel %vm1799, 0, %v1798
        %v1801 = vsub.s32 32, %v1800
        %v1802 = vshll.u32 %v1793, %v1800
        %v1803 = vshrl.u32 %v1785, %v1801
        %v1804 = vor.u32 %v1802, %v1803
        %v1805 = vsub.s32 4294967266, %v1800
        %v1806 = vadd.s32 %v1805, 127
        %v1807 = vshll.u32 %v1806, 23
        %v1808 = vor.u32 4788187, %v1807
        %v1809 = vand.u32 2147483647, %v1808
        %v1811 = vcvt.s32.f32 %v1804
        %v1812 = vmul.f32 %v1811, %v1809
        %v1813 = vxor.u32 %v1812, 2147483648
        %v1814 = vsel %vm1731, %v1813, %v1812
        %v1815 = vsub.s32 4, %v1791
        %v1816 = vsel %vm1731, %v1815, %v1791
        %v1817 = vsel %vm1730, %v362, %v1814
        %v1818 = vsel %vm1730, 0, %v1816
        %v1819 = vcosq.f32.pop %v1817
        %v1820 = vsinq.f32.pop %v1817
        %vm1821 = vweird.f32 %v362
        %v1822 = vand.u32 %v1818, 3
        %vm1823 = vcmp.lt.s32.totalorder %v1822, 2
        %vm1824 = vcmp.eq.s32.totalorder %v1822, 0
        %v1825 = vxor.u32 %v1820, 2147483648
        %v1826 = vsel %vm1824, %v1819, %v1825
        %vm1827 = vcmp.eq.s32.totalorder %v1822, 2
        %v1828 = vxor.u32 %v1819, 2147483648
        %v1829 = vsel %vm1827, %v1828, %v1820
        %v1830 = vsel %vm1823, %v1826, %v1829
        %v1831 = vsel %vm1821, nan, %v1830
        %v1832 = vand.u32 2147483647, %v363
        %vm1833 = vcmp.le.f32.partialorder %v1832, 0.7853982
        %vm1834 = vcmp.lt.s32.totalorder %v363, 0
        %v1835 = vand.u32 %v363, 2139095040
        %v1836 = vshrl.u32 %v1835, 23
        %v1837 = vsub.s32 %v1836, 127
        %v1838 = vand.u32 2147483647, %v363
        %v1839 = vand.u32 %v1838, 8388607
        %v1840 = vor.u32 %v1839, 8388608
        %v1841 = vsub.s32 0, %v1840
        %v1842 = vadd.s32 %v1837, 1
        %vm1843 = vcmp.gt.s32.totalorder %v1842, 0
        %v1844 = vsel %vm1843, %v1842, 0
        %v1845 = vshrl.u32 %v1844, 5
        %v1846 = vand.u32 %v1844, 31
        %v1847 = vsub.s32 32, %v1846
        %v1848 = vshrl.u32 683565275, %v1847
        %v1849 = vshll.u32 683565275, %v1846
        %v1850 = vshrl.u32 2475754826, %v1847
        %v1851 = vor.u32 %v1849, %v1850
        %v1852 = vshll.u32 2475754826, %v1846
        %v1853 = vshrl.u32 2131351028, %v1847
        %v1854 = vor.u32 %v1852, %v1853
        %v1855 = vshll.u32 2131351028, %v1846
        %v1856 = vshrl.u32 2102212464, %v1847
        %v1857 = vor.u32 %v1855, %v1856
        %v1858 = vshll.u32 2102212464, %v1846
        %v1859 = vshrl.u32 920167782, %v1847
        %v1860 = vor.u32 %v1858, %v1859
        %v1861 = vshll.u32 920167782, %v1846
        %v1862 = vshrl.u32 1326507024, %v1847
        %v1863 = vor.u32 %v1861, %v1862
        %vm1864 = vcmp.lt.s32.totalorder %v1845, 1
        %vm1865 = vcmp.lt.s32.totalorder %v1845, 2
        %vm1866 = vcmp.lt.s32.totalorder %v1845, 3
        %vm1867 = vcmp.lt.s32.totalorder %v1845, 4
        %v1868 = vsel %vm1864, %v1848, %v1851
        %v1869 = vsel %vm1867, %v1857, 2102212464
        %v1870 = vsel %vm1866, %v1854, %v1869
        %v1871 = vsel %vm1865, %v1868, %v1870
        %v1872 = vsel %vm1864, %v1851, %v1854
        %v1873 = vsel %vm1867, %v1860, 920167782
        %v1874 = vsel %vm1866, %v1857, %v1873
        %v1875 = vsel %vm1865, %v1872, %v1874
        %v1876 = vsel %vm1864, %v1854, %v1857
        %v1877 = vsel %vm1867, %v1863, 1326507024
        %v1878 = vsel %vm1866, %v1860, %v1877
        %v1879 = vsel %vm1865, %v1876, %v1878
        %v1880 = vshll.u32 %v1840, 8
        %v1881 = vmul.u32.u64.compose %v1880, %v1879
        %v1882 = vextract.low.u32 %v1881
        %v1883 = vextract.high.u32 %v1881
        %v1884 = vmul.u32.u64.compose %v1880, %v1875
        %v1885 = vextract.low.u32 %v1884
        %v1886 = vextract.high.u32 %v1884
        %v1887 = vmul.u32 %v1880, %v1871
        %v1888 = vadd.s32 %v1883, %v1885
        %vm1889 = vc.u32 %v1883, %v1885
        %v1890 = vadd.s32 %v1886, 1
        %v1891 = vsel %vm1889, %v1890, %v1886
        %v1892 = vadd.s32 %v1887, %v1891
        %v1893 = vadd.s32 %v1892, 536870912
        %v1894 = vshrl.u32 %v1893, 30
        %v1895 = vshll.u32 %v1894, 30
        %v1896 = vsub.s32 %v1892, %v1895
        %vm1897 = vcmp.lt.s32.totalorder %v1896, 0
        %v1898 = vsub.s32 0, %v1896
        %v1899 = vsel %vm1897, %v1898, %v1896
        %v1900 = vclz %v1899
        %v1901 = vsub.s32 %v1900, 2
        %vm1902 = vcmp.gt.s32.totalorder 0, %v1901
        %v1903 = vsel %vm1902, 0, %v1901
        %v1904 = vsub.s32 32, %v1903
        %v1905 = vshll.u32 %v1896, %v1903
        %v1906 = vshrl.u32 %v1888, %v1904
        %v1907 = vor.u32 %v1905, %v1906
        %v1908 = vsub.s32 4294967266, %v1903
        %v1909 = vadd.s32 %v1908, 127
        %v1910 = vshll.u32 %v1909, 23
        %v1911 = vor.u32 4788187, %v1910
        %v1912 = vand.u32 2147483647, %v1911
        %v1914 = vcvt.s32.f32 %v1907
        %v1915 = vmul.f32 %v1914, %v1912
        %v1916 = vxor.u32 %v1915, 2147483648
        %v1917 = vsel %vm1834, %v1916, %v1915
        %v1918 = vsub.s32 4, %v1894
        %v1919 = vsel %vm1834, %v1918, %v1894
        %v1920 = vsel %vm1833, %v363, %v1917
        %v1921 = vsel %vm1833, 0, %v1919
        %v1922 = vcosq.f32.pop %v1920
        %v1923 = vsinq.f32.pop %v1920
        %vm1924 = vweird.f32 %v363
        %v1925 = vand.u32 %v1921, 3
        %vm1926 = vcmp.lt.s32.totalorder %v1925, 2
        %vm1927 = vcmp.eq.s32.totalorder %v1925, 0
        %v1928 = vxor.u32 %v1923, 2147483648
        %v1929 = vsel %vm1927, %v1922, %v1928
        %vm1930 = vcmp.eq.s32.totalorder %v1925, 2
        %v1931 = vxor.u32 %v1922, 2147483648
        %v1932 = vsel %vm1930, %v1931, %v1923
        %v1933 = vsel %vm1926, %v1929, %v1932
        %v1934 = vsel %vm1924, nan, %v1933
        %v1935 = vand.u32 2147483647, %v364
        %vm1936 = vcmp.le.f32.partialorder %v1935, 0.7853982
        %vm1937 = vcmp.lt.s32.totalorder %v364, 0
        %v1938 = vand.u32 %v364, 2139095040
        %v1939 = vshrl.u32 %v1938, 23
        %v1940 = vsub.s32 %v1939, 127
        %v1941 = vand.u32 2147483647, %v364
        %v1942 = vand.u32 %v1941, 8388607
        %v1943 = vor.u32 %v1942, 8388608
        %v1944 = vsub.s32 0, %v1943
        %v1945 = vadd.s32 %v1940, 1
        %vm1946 = vcmp.gt.s32.totalorder %v1945, 0
        %v1947 = vsel %vm1946, %v1945, 0
        %v1948 = vshrl.u32 %v1947, 5
        %v1949 = vand.u32 %v1947, 31
        %v1950 = vsub.s32 32, %v1949
        %v1951 = vshrl.u32 683565275, %v1950
        %v1952 = vshll.u32 683565275, %v1949
        %v1953 = vshrl.u32 2475754826, %v1950
        %v1954 = vor.u32 %v1952, %v1953
        %v1955 = vshll.u32 2475754826, %v1949
        %v1956 = vshrl.u32 2131351028, %v1950
        %v1957 = vor.u32 %v1955, %v1956
        %v1958 = vshll.u32 2131351028, %v1949
        %v1959 = vshrl.u32 2102212464, %v1950
        %v1960 = vor.u32 %v1958, %v1959
        %v1961 = vshll.u32 2102212464, %v1949
        %v1962 = vshrl.u32 920167782, %v1950
        %v1963 = vor.u32 %v1961, %v1962
        %v1964 = vshll.u32 920167782, %v1949
        %v1965 = vshrl.u32 1326507024, %v1950
        %v1966 = vor.u32 %v1964, %v1965
        %vm1967 = vcmp.lt.s32.totalorder %v1948, 1
        %vm1968 = vcmp.lt.s32.totalorder %v1948, 2
        %vm1969 = vcmp.lt.s32.totalorder %v1948, 3
        %vm1970 = vcmp.lt.s32.totalorder %v1948, 4
        %v1971 = vsel %vm1967, %v1951, %v1954
        %v1972 = vsel %vm1970, %v1960, 2102212464
        %v1973 = vsel %vm1969, %v1957, %v1972
        %v1974 = vsel %vm1968, %v1971, %v1973
        %v1975 = vsel %vm1967, %v1954, %v1957
        %v1976 = vsel %vm1970, %v1963, 920167782
        %v1977 = vsel %vm1969, %v1960, %v1976
        %v1978 = vsel %vm1968, %v1975, %v1977
        %v1979 = vsel %vm1967, %v1957, %v1960
        %v1980 = vsel %vm1970, %v1966, 1326507024
        %v1981 = vsel %vm1969, %v1963, %v1980
        %v1982 = vsel %vm1968, %v1979, %v1981
        %v1983 = vshll.u32 %v1943, 8
        %v1984 = vmul.u32.u64.compose %v1983, %v1982
        %v1985 = vextract.low.u32 %v1984
        %v1986 = vextract.high.u32 %v1984
        %v1987 = vmul.u32.u64.compose %v1983, %v1978
        %v1988 = vextract.low.u32 %v1987
        %v1989 = vextract.high.u32 %v1987
        %v1990 = vmul.u32 %v1983, %v1974
        %v1991 = vadd.s32 %v1986, %v1988
        %vm1992 = vc.u32 %v1986, %v1988
        %v1993 = vadd.s32 %v1989, 1
        %v1994 = vsel %vm1992, %v1993, %v1989
        %v1995 = vadd.s32 %v1990, %v1994
        %v1996 = vadd.s32 %v1995, 536870912
        %v1997 = vshrl.u32 %v1996, 30
        %v1998 = vshll.u32 %v1997, 30
        %v1999 = vsub.s32 %v1995, %v1998
        %vm2000 = vcmp.lt.s32.totalorder %v1999, 0
        %v2001 = vsub.s32 0, %v1999
        %v2002 = vsel %vm2000, %v2001, %v1999
        %v2003 = vclz %v2002
        %v2004 = vsub.s32 %v2003, 2
        %vm2005 = vcmp.gt.s32.totalorder 0, %v2004
        %v2006 = vsel %vm2005, 0, %v2004
        %v2007 = vsub.s32 32, %v2006
        %v2008 = vshll.u32 %v1999, %v2006
        %v2009 = vshrl.u32 %v1991, %v2007
        %v2010 = vor.u32 %v2008, %v2009
        %v2011 = vsub.s32 4294967266, %v2006
        %v2012 = vadd.s32 %v2011, 127
        %v2013 = vshll.u32 %v2012, 23
        %v2014 = vor.u32 4788187, %v2013
        %v2015 = vand.u32 2147483647, %v2014
        %v2017 = vcvt.s32.f32 %v2010
        %v2018 = vmul.f32 %v2017, %v2015
        %v2019 = vxor.u32 %v2018, 2147483648
        %v2020 = vsel %vm1937, %v2019, %v2018
        %v2021 = vsub.s32 4, %v1997
        %v2022 = vsel %vm1937, %v2021, %v1997
        %v2023 = vsel %vm1936, %v364, %v2020
        %v2024 = vsel %vm1936, 0, %v2022
        %v2025 = vcosq.f32.pop %v2023
        %v2026 = vsinq.f32.pop %v2023
        %vm2027 = vweird.f32 %v364
        %v2028 = vand.u32 %v2024, 3
        %vm2029 = vcmp.lt.s32.totalorder %v2028, 2
        %vm2030 = vcmp.eq.s32.totalorder %v2028, 0
        %v2031 = vxor.u32 %v2026, 2147483648
        %v2032 = vsel %vm2030, %v2025, %v2031
        %vm2033 = vcmp.eq.s32.totalorder %v2028, 2
        %v2034 = vxor.u32 %v2025, 2147483648
        %v2035 = vsel %vm2033, %v2034, %v2026
        %v2036 = vsel %vm2029, %v2032, %v2035
        %v2037 = vsel %vm2027, nan, %v2036
        %v2038 = vand.u32 2147483647, %v365
        %vm2039 = vcmp.le.f32.partialorder %v2038, 0.7853982
        %vm2040 = vcmp.lt.s32.totalorder %v365, 0
        %v2041 = vand.u32 %v365, 2139095040
        %v2042 = vshrl.u32 %v2041, 23
        %v2043 = vsub.s32 %v2042, 127
        %v2044 = vand.u32 2147483647, %v365
        %v2045 = vand.u32 %v2044, 8388607
        %v2046 = vor.u32 %v2045, 8388608
        %v2047 = vsub.s32 0, %v2046
        %v2048 = vadd.s32 %v2043, 1
        %vm2049 = vcmp.gt.s32.totalorder %v2048, 0
        %v2050 = vsel %vm2049, %v2048, 0
        %v2051 = vshrl.u32 %v2050, 5
        %v2052 = vand.u32 %v2050, 31
        %v2053 = vsub.s32 32, %v2052
        %v2054 = vshrl.u32 683565275, %v2053
        %v2055 = vshll.u32 683565275, %v2052
        %v2056 = vshrl.u32 2475754826, %v2053
        %v2057 = vor.u32 %v2055, %v2056
        %v2058 = vshll.u32 2475754826, %v2052
        %v2059 = vshrl.u32 2131351028, %v2053
        %v2060 = vor.u32 %v2058, %v2059
        %v2061 = vshll.u32 2131351028, %v2052
        %v2062 = vshrl.u32 2102212464, %v2053
        %v2063 = vor.u32 %v2061, %v2062
        %v2064 = vshll.u32 2102212464, %v2052
        %v2065 = vshrl.u32 920167782, %v2053
        %v2066 = vor.u32 %v2064, %v2065
        %v2067 = vshll.u32 920167782, %v2052
        %v2068 = vshrl.u32 1326507024, %v2053
        %v2069 = vor.u32 %v2067, %v2068
        %vm2070 = vcmp.lt.s32.totalorder %v2051, 1
        %vm2071 = vcmp.lt.s32.totalorder %v2051, 2
        %vm2072 = vcmp.lt.s32.totalorder %v2051, 3
        %vm2073 = vcmp.lt.s32.totalorder %v2051, 4
        %v2074 = vsel %vm2070, %v2054, %v2057
        %v2075 = vsel %vm2073, %v2063, 2102212464
        %v2076 = vsel %vm2072, %v2060, %v2075
        %v2077 = vsel %vm2071, %v2074, %v2076
        %v2078 = vsel %vm2070, %v2057, %v2060
        %v2079 = vsel %vm2073, %v2066, 920167782
        %v2080 = vsel %vm2072, %v2063, %v2079
        %v2081 = vsel %vm2071, %v2078, %v2080
        %v2082 = vsel %vm2070, %v2060, %v2063
        %v2083 = vsel %vm2073, %v2069, 1326507024
        %v2084 = vsel %vm2072, %v2066, %v2083
        %v2085 = vsel %vm2071, %v2082, %v2084
        %v2086 = vshll.u32 %v2046, 8
        %v2087 = vmul.u32.u64.compose %v2086, %v2085
        %v2088 = vextract.low.u32 %v2087
        %v2089 = vextract.high.u32 %v2087
        %v2090 = vmul.u32.u64.compose %v2086, %v2081
        %v2091 = vextract.low.u32 %v2090
        %v2092 = vextract.high.u32 %v2090
        %v2093 = vmul.u32 %v2086, %v2077
        %v2094 = vadd.s32 %v2089, %v2091
        %vm2095 = vc.u32 %v2089, %v2091
        %v2096 = vadd.s32 %v2092, 1
        %v2097 = vsel %vm2095, %v2096, %v2092
        %v2098 = vadd.s32 %v2093, %v2097
        %v2099 = vadd.s32 %v2098, 536870912
        %v2100 = vshrl.u32 %v2099, 30
        %v2101 = vshll.u32 %v2100, 30
        %v2102 = vsub.s32 %v2098, %v2101
        %vm2103 = vcmp.lt.s32.totalorder %v2102, 0
        %v2104 = vsub.s32 0, %v2102
        %v2105 = vsel %vm2103, %v2104, %v2102
        %v2106 = vclz %v2105
        %v2107 = vsub.s32 %v2106, 2
        %vm2108 = vcmp.gt.s32.totalorder 0, %v2107
        %v2109 = vsel %vm2108, 0, %v2107
        %v2110 = vsub.s32 32, %v2109
        %v2111 = vshll.u32 %v2102, %v2109
        %v2112 = vshrl.u32 %v2094, %v2110
        %v2113 = vor.u32 %v2111, %v2112
        %v2114 = vsub.s32 4294967266, %v2109
        %v2115 = vadd.s32 %v2114, 127
        %v2116 = vshll.u32 %v2115, 23
        %v2117 = vor.u32 4788187, %v2116
        %v2118 = vand.u32 2147483647, %v2117
        %v2120 = vcvt.s32.f32 %v2113
        %v2121 = vmul.f32 %v2120, %v2118
        %v2122 = vxor.u32 %v2121, 2147483648
        %v2123 = vsel %vm2040, %v2122, %v2121
        %v2124 = vsub.s32 4, %v2100
        %v2125 = vsel %vm2040, %v2124, %v2100
        %v2126 = vsel %vm2039, %v365, %v2123
        %v2127 = vsel %vm2039, 0, %v2125
        %v2128 = vcosq.f32.pop %v2126
        %v2129 = vsinq.f32.pop %v2126
        %vm2130 = vweird.f32 %v365
        %v2131 = vand.u32 %v2127, 3
        %vm2132 = vcmp.lt.s32.totalorder %v2131, 2
        %vm2133 = vcmp.eq.s32.totalorder %v2131, 0
        %v2134 = vxor.u32 %v2129, 2147483648
        %v2135 = vsel %vm2133, %v2128, %v2134
        %vm2136 = vcmp.eq.s32.totalorder %v2131, 2
        %v2137 = vxor.u32 %v2128, 2147483648
        %v2138 = vsel %vm2136, %v2137, %v2129
        %v2139 = vsel %vm2132, %v2135, %v2138
        %v2140 = vsel %vm2130, nan, %v2139
        %v2141 = vand.u32 2147483647, %v366
        %vm2142 = vcmp.le.f32.partialorder %v2141, 0.7853982
        %vm2143 = vcmp.lt.s32.totalorder %v366, 0
        %v2144 = vand.u32 %v366, 2139095040
        %v2145 = vshrl.u32 %v2144, 23
        %v2146 = vsub.s32 %v2145, 127
        %v2147 = vand.u32 2147483647, %v366
        %v2148 = vand.u32 %v2147, 8388607
        %v2149 = vor.u32 %v2148, 8388608
        %v2150 = vsub.s32 0, %v2149
        %v2151 = vadd.s32 %v2146, 1
        %vm2152 = vcmp.gt.s32.totalorder %v2151, 0
        %v2153 = vsel %vm2152, %v2151, 0
        %v2154 = vshrl.u32 %v2153, 5
        %v2155 = vand.u32 %v2153, 31
        %v2156 = vsub.s32 32, %v2155
        %v2157 = vshrl.u32 683565275, %v2156
        %v2158 = vshll.u32 683565275, %v2155
        %v2159 = vshrl.u32 2475754826, %v2156
        %v2160 = vor.u32 %v2158, %v2159
        %v2161 = vshll.u32 2475754826, %v2155
        %v2162 = vshrl.u32 2131351028, %v2156
        %v2163 = vor.u32 %v2161, %v2162
        %v2164 = vshll.u32 2131351028, %v2155
        %v2165 = vshrl.u32 2102212464, %v2156
        %v2166 = vor.u32 %v2164, %v2165
        %v2167 = vshll.u32 2102212464, %v2155
        %v2168 = vshrl.u32 920167782, %v2156
        %v2169 = vor.u32 %v2167, %v2168
        %v2170 = vshll.u32 920167782, %v2155
        %v2171 = vshrl.u32 1326507024, %v2156
        %v2172 = vor.u32 %v2170, %v2171
        %vm2173 = vcmp.lt.s32.totalorder %v2154, 1
        %vm2174 = vcmp.lt.s32.totalorder %v2154, 2
        %vm2175 = vcmp.lt.s32.totalorder %v2154, 3
        %vm2176 = vcmp.lt.s32.totalorder %v2154, 4
        %v2177 = vsel %vm2173, %v2157, %v2160
        %v2178 = vsel %vm2176, %v2166, 2102212464
        %v2179 = vsel %vm2175, %v2163, %v2178
        %v2180 = vsel %vm2174, %v2177, %v2179
        %v2181 = vsel %vm2173, %v2160, %v2163
        %v2182 = vsel %vm2176, %v2169, 920167782
        %v2183 = vsel %vm2175, %v2166, %v2182
        %v2184 = vsel %vm2174, %v2181, %v2183
        %v2185 = vsel %vm2173, %v2163, %v2166
        %v2186 = vsel %vm2176, %v2172, 1326507024
        %v2187 = vsel %vm2175, %v2169, %v2186
        %v2188 = vsel %vm2174, %v2185, %v2187
        %v2189 = vshll.u32 %v2149, 8
        %v2190 = vmul.u32.u64.compose %v2189, %v2188
        %v2191 = vextract.low.u32 %v2190
        %v2192 = vextract.high.u32 %v2190
        %v2193 = vmul.u32.u64.compose %v2189, %v2184
        %v2194 = vextract.low.u32 %v2193
        %v2195 = vextract.high.u32 %v2193
        %v2196 = vmul.u32 %v2189, %v2180
        %v2197 = vadd.s32 %v2192, %v2194
        %vm2198 = vc.u32 %v2192, %v2194
        %v2199 = vadd.s32 %v2195, 1
        %v2200 = vsel %vm2198, %v2199, %v2195
        %v2201 = vadd.s32 %v2196, %v2200
        %v2202 = vadd.s32 %v2201, 536870912
        %v2203 = vshrl.u32 %v2202, 30
        %v2204 = vshll.u32 %v2203, 30
        %v2205 = vsub.s32 %v2201, %v2204
        %vm2206 = vcmp.lt.s32.totalorder %v2205, 0
        %v2207 = vsub.s32 0, %v2205
        %v2208 = vsel %vm2206, %v2207, %v2205
        %v2209 = vclz %v2208
        %v2210 = vsub.s32 %v2209, 2
        %vm2211 = vcmp.gt.s32.totalorder 0, %v2210
        %v2212 = vsel %vm2211, 0, %v2210
        %v2213 = vsub.s32 32, %v2212
        %v2214 = vshll.u32 %v2205, %v2212
        %v2215 = vshrl.u32 %v2197, %v2213
        %v2216 = vor.u32 %v2214, %v2215
        %v2217 = vsub.s32 4294967266, %v2212
        %v2218 = vadd.s32 %v2217, 127
        %v2219 = vshll.u32 %v2218, 23
        %v2220 = vor.u32 4788187, %v2219
        %v2221 = vand.u32 2147483647, %v2220
        %v2223 = vcvt.s32.f32 %v2216
        %v2224 = vmul.f32 %v2223, %v2221
        %v2225 = vxor.u32 %v2224, 2147483648
        %v2226 = vsel %vm2143, %v2225, %v2224
        %v2227 = vsub.s32 4, %v2203
        %v2228 = vsel %vm2143, %v2227, %v2203
        %v2229 = vsel %vm2142, %v366, %v2226
        %v2230 = vsel %vm2142, 0, %v2228
        %v2231 = vcosq.f32.pop %v2229
        %v2232 = vsinq.f32.pop %v2229
        %vm2233 = vweird.f32 %v366
        %v2234 = vand.u32 %v2230, 3
        %vm2235 = vcmp.lt.s32.totalorder %v2234, 2
        %vm2236 = vcmp.eq.s32.totalorder %v2234, 0
        %v2237 = vxor.u32 %v2232, 2147483648
        %v2238 = vsel %vm2236, %v2231, %v2237
        %vm2239 = vcmp.eq.s32.totalorder %v2234, 2
        %v2240 = vxor.u32 %v2231, 2147483648
        %v2241 = vsel %vm2239, %v2240, %v2232
        %v2242 = vsel %vm2235, %v2238, %v2241
        %v2243 = vsel %vm2233, nan, %v2242
        %v2244 = vand.u32 2147483647, %v367
        %vm2245 = vcmp.le.f32.partialorder %v2244, 0.7853982
        %vm2246 = vcmp.lt.s32.totalorder %v367, 0
        %v2247 = vand.u32 %v367, 2139095040
        %v2248 = vshrl.u32 %v2247, 23
        %v2249 = vsub.s32 %v2248, 127
        %v2250 = vand.u32 2147483647, %v367
        %v2251 = vand.u32 %v2250, 8388607
        %v2252 = vor.u32 %v2251, 8388608
        %v2253 = vsub.s32 0, %v2252
        %v2254 = vadd.s32 %v2249, 1
        %vm2255 = vcmp.gt.s32.totalorder %v2254, 0
        %v2256 = vsel %vm2255, %v2254, 0
        %v2257 = vshrl.u32 %v2256, 5
        %v2258 = vand.u32 %v2256, 31
        %v2259 = vsub.s32 32, %v2258
        %v2260 = vshrl.u32 683565275, %v2259
        %v2261 = vshll.u32 683565275, %v2258
        %v2262 = vshrl.u32 2475754826, %v2259
        %v2263 = vor.u32 %v2261, %v2262
        %v2264 = vshll.u32 2475754826, %v2258
        %v2265 = vshrl.u32 2131351028, %v2259
        %v2266 = vor.u32 %v2264, %v2265
        %v2267 = vshll.u32 2131351028, %v2258
        %v2268 = vshrl.u32 2102212464, %v2259
        %v2269 = vor.u32 %v2267, %v2268
        %v2270 = vshll.u32 2102212464, %v2258
        %v2271 = vshrl.u32 920167782, %v2259
        %v2272 = vor.u32 %v2270, %v2271
        %v2273 = vshll.u32 920167782, %v2258
        %v2274 = vshrl.u32 1326507024, %v2259
        %v2275 = vor.u32 %v2273, %v2274
        %vm2276 = vcmp.lt.s32.totalorder %v2257, 1
        %vm2277 = vcmp.lt.s32.totalorder %v2257, 2
        %vm2278 = vcmp.lt.s32.totalorder %v2257, 3
        %vm2279 = vcmp.lt.s32.totalorder %v2257, 4
        %v2280 = vsel %vm2276, %v2260, %v2263
        %v2281 = vsel %vm2279, %v2269, 2102212464
        %v2282 = vsel %vm2278, %v2266, %v2281
        %v2283 = vsel %vm2277, %v2280, %v2282
        %v2284 = vsel %vm2276, %v2263, %v2266
        %v2285 = vsel %vm2279, %v2272, 920167782
        %v2286 = vsel %vm2278, %v2269, %v2285
        %v2287 = vsel %vm2277, %v2284, %v2286
        %v2288 = vsel %vm2276, %v2266, %v2269
        %v2289 = vsel %vm2279, %v2275, 1326507024
        %v2290 = vsel %vm2278, %v2272, %v2289
        %v2291 = vsel %vm2277, %v2288, %v2290
        %v2292 = vshll.u32 %v2252, 8
        %v2293 = vmul.u32.u64.compose %v2292, %v2291
        %v2294 = vextract.low.u32 %v2293
        %v2295 = vextract.high.u32 %v2293
        %v2296 = vmul.u32.u64.compose %v2292, %v2287
        %v2297 = vextract.low.u32 %v2296
        %v2298 = vextract.high.u32 %v2296
        %v2299 = vmul.u32 %v2292, %v2283
        %v2300 = vadd.s32 %v2295, %v2297
        %vm2301 = vc.u32 %v2295, %v2297
        %v2302 = vadd.s32 %v2298, 1
        %v2303 = vsel %vm2301, %v2302, %v2298
        %v2304 = vadd.s32 %v2299, %v2303
        %v2305 = vadd.s32 %v2304, 536870912
        %v2306 = vshrl.u32 %v2305, 30
        %v2307 = vshll.u32 %v2306, 30
        %v2308 = vsub.s32 %v2304, %v2307
        %vm2309 = vcmp.lt.s32.totalorder %v2308, 0
        %v2310 = vsub.s32 0, %v2308
        %v2311 = vsel %vm2309, %v2310, %v2308
        %v2312 = vclz %v2311
        %v2313 = vsub.s32 %v2312, 2
        %vm2314 = vcmp.gt.s32.totalorder 0, %v2313
        %v2315 = vsel %vm2314, 0, %v2313
        %v2316 = vsub.s32 32, %v2315
        %v2317 = vshll.u32 %v2308, %v2315
        %v2318 = vshrl.u32 %v2300, %v2316
        %v2319 = vor.u32 %v2317, %v2318
        %v2320 = vsub.s32 4294967266, %v2315
        %v2321 = vadd.s32 %v2320, 127
        %v2322 = vshll.u32 %v2321, 23
        %v2323 = vor.u32 4788187, %v2322
        %v2324 = vand.u32 2147483647, %v2323
        %v2326 = vcvt.s32.f32 %v2319
        %v2327 = vmul.f32 %v2326, %v2324
        %v2328 = vxor.u32 %v2327, 2147483648
        %v2329 = vsel %vm2246, %v2328, %v2327
        %v2330 = vsub.s32 4, %v2306
        %v2331 = vsel %vm2246, %v2330, %v2306
        %v2332 = vsel %vm2245, %v367, %v2329
        %v2333 = vsel %vm2245, 0, %v2331
        %v2334 = vcosq.f32.pop %v2332
        %v2335 = vsinq.f32.pop %v2332
        %vm2336 = vweird.f32 %v367
        %v2337 = vand.u32 %v2333, 3
        %vm2338 = vcmp.lt.s32.totalorder %v2337, 2
        %vm2339 = vcmp.eq.s32.totalorder %v2337, 0
        %v2340 = vxor.u32 %v2335, 2147483648
        %v2341 = vsel %vm2339, %v2334, %v2340
        %vm2342 = vcmp.eq.s32.totalorder %v2337, 2
        %v2343 = vxor.u32 %v2334, 2147483648
        %v2344 = vsel %vm2342, %v2343, %v2335
        %v2345 = vsel %vm2338, %v2341, %v2344
        %v2346 = vsel %vm2336, nan, %v2345
        %v2347 = vand.u32 2147483647, %v368
        %vm2348 = vcmp.le.f32.partialorder %v2347, 0.7853982
        %vm2349 = vcmp.lt.s32.totalorder %v368, 0
        %v2350 = vand.u32 %v368, 2139095040
        %v2351 = vshrl.u32 %v2350, 23
        %v2352 = vsub.s32 %v2351, 127
        %v2353 = vand.u32 2147483647, %v368
        %v2354 = vand.u32 %v2353, 8388607
        %v2355 = vor.u32 %v2354, 8388608
        %v2356 = vsub.s32 0, %v2355
        %v2357 = vadd.s32 %v2352, 1
        %vm2358 = vcmp.gt.s32.totalorder %v2357, 0
        %v2359 = vsel %vm2358, %v2357, 0
        %v2360 = vshrl.u32 %v2359, 5
        %v2361 = vand.u32 %v2359, 31
        %v2362 = vsub.s32 32, %v2361
        %v2363 = vshrl.u32 683565275, %v2362
        %v2364 = vshll.u32 683565275, %v2361
        %v2365 = vshrl.u32 2475754826, %v2362
        %v2366 = vor.u32 %v2364, %v2365
        %v2367 = vshll.u32 2475754826, %v2361
        %v2368 = vshrl.u32 2131351028, %v2362
        %v2369 = vor.u32 %v2367, %v2368
        %v2370 = vshll.u32 2131351028, %v2361
        %v2371 = vshrl.u32 2102212464, %v2362
        %v2372 = vor.u32 %v2370, %v2371
        %v2373 = vshll.u32 2102212464, %v2361
        %v2374 = vshrl.u32 920167782, %v2362
        %v2375 = vor.u32 %v2373, %v2374
        %v2376 = vshll.u32 920167782, %v2361
        %v2377 = vshrl.u32 1326507024, %v2362
        %v2378 = vor.u32 %v2376, %v2377
        %vm2379 = vcmp.lt.s32.totalorder %v2360, 1
        %vm2380 = vcmp.lt.s32.totalorder %v2360, 2
        %vm2381 = vcmp.lt.s32.totalorder %v2360, 3
        %vm2382 = vcmp.lt.s32.totalorder %v2360, 4
        %v2383 = vsel %vm2379, %v2363, %v2366
        %v2384 = vsel %vm2382, %v2372, 2102212464
        %v2385 = vsel %vm2381, %v2369, %v2384
        %v2386 = vsel %vm2380, %v2383, %v2385
        %v2387 = vsel %vm2379, %v2366, %v2369
        %v2388 = vsel %vm2382, %v2375, 920167782
        %v2389 = vsel %vm2381, %v2372, %v2388
        %v2390 = vsel %vm2380, %v2387, %v2389
        %v2391 = vsel %vm2379, %v2369, %v2372
        %v2392 = vsel %vm2382, %v2378, 1326507024
        %v2393 = vsel %vm2381, %v2375, %v2392
        %v2394 = vsel %vm2380, %v2391, %v2393
        %v2395 = vshll.u32 %v2355, 8
        %v2396 = vmul.u32.u64.compose %v2395, %v2394
        %v2397 = vextract.low.u32 %v2396
        %v2398 = vextract.high.u32 %v2396
        %v2399 = vmul.u32.u64.compose %v2395, %v2390
        %v2400 = vextract.low.u32 %v2399
        %v2401 = vextract.high.u32 %v2399
        %v2402 = vmul.u32 %v2395, %v2386
        %v2403 = vadd.s32 %v2398, %v2400
        %vm2404 = vc.u32 %v2398, %v2400
        %v2405 = vadd.s32 %v2401, 1
        %v2406 = vsel %vm2404, %v2405, %v2401
        %v2407 = vadd.s32 %v2402, %v2406
        %v2408 = vadd.s32 %v2407, 536870912
        %v2409 = vshrl.u32 %v2408, 30
        %v2410 = vshll.u32 %v2409, 30
        %v2411 = vsub.s32 %v2407, %v2410
        %vm2412 = vcmp.lt.s32.totalorder %v2411, 0
        %v2413 = vsub.s32 0, %v2411
        %v2414 = vsel %vm2412, %v2413, %v2411
        %v2415 = vclz %v2414
        %v2416 = vsub.s32 %v2415, 2
        %vm2417 = vcmp.gt.s32.totalorder 0, %v2416
        %v2418 = vsel %vm2417, 0, %v2416
        %v2419 = vsub.s32 32, %v2418
        %v2420 = vshll.u32 %v2411, %v2418
        %v2421 = vshrl.u32 %v2403, %v2419
        %v2422 = vor.u32 %v2420, %v2421
        %v2423 = vsub.s32 4294967266, %v2418
        %v2424 = vadd.s32 %v2423, 127
        %v2425 = vshll.u32 %v2424, 23
        %v2426 = vor.u32 4788187, %v2425
        %v2427 = vand.u32 2147483647, %v2426
        %v2429 = vcvt.s32.f32 %v2422
        %v2430 = vmul.f32 %v2429, %v2427
        %v2431 = vxor.u32 %v2430, 2147483648
        %v2432 = vsel %vm2349, %v2431, %v2430
        %v2433 = vsub.s32 4, %v2409
        %v2434 = vsel %vm2349, %v2433, %v2409
        %v2435 = vsel %vm2348, %v368, %v2432
        %v2436 = vsel %vm2348, 0, %v2434
        %v2437 = vcosq.f32.pop %v2435
        %v2438 = vsinq.f32.pop %v2435
        %vm2439 = vweird.f32 %v368
        %v2440 = vand.u32 %v2436, 3
        %vm2441 = vcmp.lt.s32.totalorder %v2440, 2
        %vm2442 = vcmp.eq.s32.totalorder %v2440, 0
        %v2443 = vxor.u32 %v2438, 2147483648
        %v2444 = vsel %vm2442, %v2437, %v2443
        %vm2445 = vcmp.eq.s32.totalorder %v2440, 2
        %v2446 = vxor.u32 %v2437, 2147483648
        %v2447 = vsel %vm2445, %v2446, %v2438
        %v2448 = vsel %vm2441, %v2444, %v2447
        %v2449 = vsel %vm2439, nan, %v2448
        %v2450 = vand.u32 2147483647, %v369
        %vm2451 = vcmp.le.f32.partialorder %v2450, 0.7853982
        %vm2452 = vcmp.lt.s32.totalorder %v369, 0
        %v2453 = vand.u32 %v369, 2139095040
        %v2454 = vshrl.u32 %v2453, 23
        %v2455 = vsub.s32 %v2454, 127
        %v2456 = vand.u32 2147483647, %v369
        %v2457 = vand.u32 %v2456, 8388607
        %v2458 = vor.u32 %v2457, 8388608
        %v2459 = vsub.s32 0, %v2458
        %v2460 = vadd.s32 %v2455, 1
        %vm2461 = vcmp.gt.s32.totalorder %v2460, 0
        %v2462 = vsel %vm2461, %v2460, 0
        %v2463 = vshrl.u32 %v2462, 5
        %v2464 = vand.u32 %v2462, 31
        %v2465 = vsub.s32 32, %v2464
        %v2466 = vshrl.u32 683565275, %v2465
        %v2467 = vshll.u32 683565275, %v2464
        %v2468 = vshrl.u32 2475754826, %v2465
        %v2469 = vor.u32 %v2467, %v2468
        %v2470 = vshll.u32 2475754826, %v2464
        %v2471 = vshrl.u32 2131351028, %v2465
        %v2472 = vor.u32 %v2470, %v2471
        %v2473 = vshll.u32 2131351028, %v2464
        %v2474 = vshrl.u32 2102212464, %v2465
        %v2475 = vor.u32 %v2473, %v2474
        %v2476 = vshll.u32 2102212464, %v2464
        %v2477 = vshrl.u32 920167782, %v2465
        %v2478 = vor.u32 %v2476, %v2477
        %v2479 = vshll.u32 920167782, %v2464
        %v2480 = vshrl.u32 1326507024, %v2465
        %v2481 = vor.u32 %v2479, %v2480
        %vm2482 = vcmp.lt.s32.totalorder %v2463, 1
        %vm2483 = vcmp.lt.s32.totalorder %v2463, 2
        %vm2484 = vcmp.lt.s32.totalorder %v2463, 3
        %vm2485 = vcmp.lt.s32.totalorder %v2463, 4
        %v2486 = vsel %vm2482, %v2466, %v2469
        %v2487 = vsel %vm2485, %v2475, 2102212464
        %v2488 = vsel %vm2484, %v2472, %v2487
        %v2489 = vsel %vm2483, %v2486, %v2488
        %v2490 = vsel %vm2482, %v2469, %v2472
        %v2491 = vsel %vm2485, %v2478, 920167782
        %v2492 = vsel %vm2484, %v2475, %v2491
        %v2493 = vsel %vm2483, %v2490, %v2492
        %v2494 = vsel %vm2482, %v2472, %v2475
        %v2495 = vsel %vm2485, %v2481, 1326507024
        %v2496 = vsel %vm2484, %v2478, %v2495
        %v2497 = vsel %vm2483, %v2494, %v2496
        %v2498 = vshll.u32 %v2458, 8
        %v2499 = vmul.u32.u64.compose %v2498, %v2497
        %v2500 = vextract.low.u32 %v2499
        %v2501 = vextract.high.u32 %v2499
        %v2502 = vmul.u32.u64.compose %v2498, %v2493
        %v2503 = vextract.low.u32 %v2502
        %v2504 = vextract.high.u32 %v2502
        %v2505 = vmul.u32 %v2498, %v2489
        %v2506 = vadd.s32 %v2501, %v2503
        %vm2507 = vc.u32 %v2501, %v2503
        %v2508 = vadd.s32 %v2504, 1
        %v2509 = vsel %vm2507, %v2508, %v2504
        %v2510 = vadd.s32 %v2505, %v2509
        %v2511 = vadd.s32 %v2510, 536870912
        %v2512 = vshrl.u32 %v2511, 30
        %v2513 = vshll.u32 %v2512, 30
        %v2514 = vsub.s32 %v2510, %v2513
        %vm2515 = vcmp.lt.s32.totalorder %v2514, 0
        %v2516 = vsub.s32 0, %v2514
        %v2517 = vsel %vm2515, %v2516, %v2514
        %v2518 = vclz %v2517
        %v2519 = vsub.s32 %v2518, 2
        %vm2520 = vcmp.gt.s32.totalorder 0, %v2519
        %v2521 = vsel %vm2520, 0, %v2519
        %v2522 = vsub.s32 32, %v2521
        %v2523 = vshll.u32 %v2514, %v2521
        %v2524 = vshrl.u32 %v2506, %v2522
        %v2525 = vor.u32 %v2523, %v2524
        %v2526 = vsub.s32 4294967266, %v2521
        %v2527 = vadd.s32 %v2526, 127
        %v2528 = vshll.u32 %v2527, 23
        %v2529 = vor.u32 4788187, %v2528
        %v2530 = vand.u32 2147483647, %v2529
        %v2532 = vcvt.s32.f32 %v2525
        %v2533 = vmul.f32 %v2532, %v2530
        %v2534 = vxor.u32 %v2533, 2147483648
        %v2535 = vsel %vm2452, %v2534, %v2533
        %v2536 = vsub.s32 4, %v2512
        %v2537 = vsel %vm2452, %v2536, %v2512
        %v2538 = vsel %vm2451, %v369, %v2535
        %v2539 = vsel %vm2451, 0, %v2537
        %v2540 = vcosq.f32.pop %v2538
        %v2541 = vsinq.f32.pop %v2538
        %vm2542 = vweird.f32 %v369
        %v2543 = vand.u32 %v2539, 3
        %vm2544 = vcmp.lt.s32.totalorder %v2543, 2
        %vm2545 = vcmp.eq.s32.totalorder %v2543, 0
        %v2546 = vxor.u32 %v2541, 2147483648
        %v2547 = vsel %vm2545, %v2540, %v2546
        %vm2548 = vcmp.eq.s32.totalorder %v2543, 2
        %v2549 = vxor.u32 %v2540, 2147483648
        %v2550 = vsel %vm2548, %v2549, %v2541
        %v2551 = vsel %vm2544, %v2547, %v2550
        %v2552 = vsel %vm2542, nan, %v2551
        %v2553 = vand.u32 2147483647, %v370
        %vm2554 = vcmp.le.f32.partialorder %v2553, 0.7853982
        %vm2555 = vcmp.lt.s32.totalorder %v370, 0
        %v2556 = vand.u32 %v370, 2139095040
        %v2557 = vshrl.u32 %v2556, 23
        %v2558 = vsub.s32 %v2557, 127
        %v2559 = vand.u32 2147483647, %v370
        %v2560 = vand.u32 %v2559, 8388607
        %v2561 = vor.u32 %v2560, 8388608
        %v2562 = vsub.s32 0, %v2561
        %v2563 = vadd.s32 %v2558, 1
        %vm2564 = vcmp.gt.s32.totalorder %v2563, 0
        %v2565 = vsel %vm2564, %v2563, 0
        %v2566 = vshrl.u32 %v2565, 5
        %v2567 = vand.u32 %v2565, 31
        %v2568 = vsub.s32 32, %v2567
        %v2569 = vshrl.u32 683565275, %v2568
        %v2570 = vshll.u32 683565275, %v2567
        %v2571 = vshrl.u32 2475754826, %v2568
        %v2572 = vor.u32 %v2570, %v2571
        %v2573 = vshll.u32 2475754826, %v2567
        %v2574 = vshrl.u32 2131351028, %v2568
        %v2575 = vor.u32 %v2573, %v2574
        %v2576 = vshll.u32 2131351028, %v2567
        %v2577 = vshrl.u32 2102212464, %v2568
        %v2578 = vor.u32 %v2576, %v2577
        %v2579 = vshll.u32 2102212464, %v2567
        %v2580 = vshrl.u32 920167782, %v2568
        %v2581 = vor.u32 %v2579, %v2580
        %v2582 = vshll.u32 920167782, %v2567
        %v2583 = vshrl.u32 1326507024, %v2568
        %v2584 = vor.u32 %v2582, %v2583
        %vm2585 = vcmp.lt.s32.totalorder %v2566, 1
        %vm2586 = vcmp.lt.s32.totalorder %v2566, 2
        %vm2587 = vcmp.lt.s32.totalorder %v2566, 3
        %vm2588 = vcmp.lt.s32.totalorder %v2566, 4
        %v2589 = vsel %vm2585, %v2569, %v2572
        %v2590 = vsel %vm2588, %v2578, 2102212464
        %v2591 = vsel %vm2587, %v2575, %v2590
        %v2592 = vsel %vm2586, %v2589, %v2591
        %v2593 = vsel %vm2585, %v2572, %v2575
        %v2594 = vsel %vm2588, %v2581, 920167782
        %v2595 = vsel %vm2587, %v2578, %v2594
        %v2596 = vsel %vm2586, %v2593, %v2595
        %v2597 = vsel %vm2585, %v2575, %v2578
        %v2598 = vsel %vm2588, %v2584, 1326507024
        %v2599 = vsel %vm2587, %v2581, %v2598
        %v2600 = vsel %vm2586, %v2597, %v2599
        %v2601 = vshll.u32 %v2561, 8
        %v2602 = vmul.u32.u64.compose %v2601, %v2600
        %v2603 = vextract.low.u32 %v2602
        %v2604 = vextract.high.u32 %v2602
        %v2605 = vmul.u32.u64.compose %v2601, %v2596
        %v2606 = vextract.low.u32 %v2605
        %v2607 = vextract.high.u32 %v2605
        %v2608 = vmul.u32 %v2601, %v2592
        %v2609 = vadd.s32 %v2604, %v2606
        %vm2610 = vc.u32 %v2604, %v2606
        %v2611 = vadd.s32 %v2607, 1
        %v2612 = vsel %vm2610, %v2611, %v2607
        %v2613 = vadd.s32 %v2608, %v2612
        %v2614 = vadd.s32 %v2613, 536870912
        %v2615 = vshrl.u32 %v2614, 30
        %v2616 = vshll.u32 %v2615, 30
        %v2617 = vsub.s32 %v2613, %v2616
        %vm2618 = vcmp.lt.s32.totalorder %v2617, 0
        %v2619 = vsub.s32 0, %v2617
        %v2620 = vsel %vm2618, %v2619, %v2617
        %v2621 = vclz %v2620
        %v2622 = vsub.s32 %v2621, 2
        %vm2623 = vcmp.gt.s32.totalorder 0, %v2622
        %v2624 = vsel %vm2623, 0, %v2622
        %v2625 = vsub.s32 32, %v2624
        %v2626 = vshll.u32 %v2617, %v2624
        %v2627 = vshrl.u32 %v2609, %v2625
        %v2628 = vor.u32 %v2626, %v2627
        %v2629 = vsub.s32 4294967266, %v2624
        %v2630 = vadd.s32 %v2629, 127
        %v2631 = vshll.u32 %v2630, 23
        %v2632 = vor.u32 4788187, %v2631
        %v2633 = vand.u32 2147483647, %v2632
        %v2635 = vcvt.s32.f32 %v2628
        %v2636 = vmul.f32 %v2635, %v2633
        %v2637 = vxor.u32 %v2636, 2147483648
        %v2638 = vsel %vm2555, %v2637, %v2636
        %v2639 = vsub.s32 4, %v2615
        %v2640 = vsel %vm2555, %v2639, %v2615
        %v2641 = vsel %vm2554, %v370, %v2638
        %v2642 = vsel %vm2554, 0, %v2640
        %v2643 = vcosq.f32.pop %v2641
        %v2644 = vsinq.f32.pop %v2641
        %vm2645 = vweird.f32 %v370
        %v2646 = vand.u32 %v2642, 3
        %vm2647 = vcmp.lt.s32.totalorder %v2646, 2
        %vm2648 = vcmp.eq.s32.totalorder %v2646, 0
        %v2649 = vxor.u32 %v2644, 2147483648
        %v2650 = vsel %vm2648, %v2643, %v2649
        %vm2651 = vcmp.eq.s32.totalorder %v2646, 2
        %v2652 = vxor.u32 %v2643, 2147483648
        %v2653 = vsel %vm2651, %v2652, %v2644
        %v2654 = vsel %vm2647, %v2650, %v2653
        %v2655 = vsel %vm2645, nan, %v2654
        %v2656 = vand.u32 2147483647, %v371
        %vm2657 = vcmp.le.f32.partialorder %v2656, 0.7853982
        %vm2658 = vcmp.lt.s32.totalorder %v371, 0
        %v2659 = vand.u32 %v371, 2139095040
        %v2660 = vshrl.u32 %v2659, 23
        %v2661 = vsub.s32 %v2660, 127
        %v2662 = vand.u32 2147483647, %v371
        %v2663 = vand.u32 %v2662, 8388607
        %v2664 = vor.u32 %v2663, 8388608
        %v2665 = vsub.s32 0, %v2664
        %v2666 = vadd.s32 %v2661, 1
        %vm2667 = vcmp.gt.s32.totalorder %v2666, 0
        %v2668 = vsel %vm2667, %v2666, 0
        %v2669 = vshrl.u32 %v2668, 5
        %v2670 = vand.u32 %v2668, 31
        %v2671 = vsub.s32 32, %v2670
        %v2672 = vshrl.u32 683565275, %v2671
        %v2673 = vshll.u32 683565275, %v2670
        %v2674 = vshrl.u32 2475754826, %v2671
        %v2675 = vor.u32 %v2673, %v2674
        %v2676 = vshll.u32 2475754826, %v2670
        %v2677 = vshrl.u32 2131351028, %v2671
        %v2678 = vor.u32 %v2676, %v2677
        %v2679 = vshll.u32 2131351028, %v2670
        %v2680 = vshrl.u32 2102212464, %v2671
        %v2681 = vor.u32 %v2679, %v2680
        %v2682 = vshll.u32 2102212464, %v2670
        %v2683 = vshrl.u32 920167782, %v2671
        %v2684 = vor.u32 %v2682, %v2683
        %v2685 = vshll.u32 920167782, %v2670
        %v2686 = vshrl.u32 1326507024, %v2671
        %v2687 = vor.u32 %v2685, %v2686
        %vm2688 = vcmp.lt.s32.totalorder %v2669, 1
        %vm2689 = vcmp.lt.s32.totalorder %v2669, 2
        %vm2690 = vcmp.lt.s32.totalorder %v2669, 3
        %vm2691 = vcmp.lt.s32.totalorder %v2669, 4
        %v2692 = vsel %vm2688, %v2672, %v2675
        %v2693 = vsel %vm2691, %v2681, 2102212464
        %v2694 = vsel %vm2690, %v2678, %v2693
        %v2695 = vsel %vm2689, %v2692, %v2694
        %v2696 = vsel %vm2688, %v2675, %v2678
        %v2697 = vsel %vm2691, %v2684, 920167782
        %v2698 = vsel %vm2690, %v2681, %v2697
        %v2699 = vsel %vm2689, %v2696, %v2698
        %v2700 = vsel %vm2688, %v2678, %v2681
        %v2701 = vsel %vm2691, %v2687, 1326507024
        %v2702 = vsel %vm2690, %v2684, %v2701
        %v2703 = vsel %vm2689, %v2700, %v2702
        %v2704 = vshll.u32 %v2664, 8
        %v2705 = vmul.u32.u64.compose %v2704, %v2703
        %v2706 = vextract.low.u32 %v2705
        %v2707 = vextract.high.u32 %v2705
        %v2708 = vmul.u32.u64.compose %v2704, %v2699
        %v2709 = vextract.low.u32 %v2708
        %v2710 = vextract.high.u32 %v2708
        %v2711 = vmul.u32 %v2704, %v2695
        %v2712 = vadd.s32 %v2707, %v2709
        %vm2713 = vc.u32 %v2707, %v2709
        %v2714 = vadd.s32 %v2710, 1
        %v2715 = vsel %vm2713, %v2714, %v2710
        %v2716 = vadd.s32 %v2711, %v2715
        %v2717 = vadd.s32 %v2716, 536870912
        %v2718 = vshrl.u32 %v2717, 30
        %v2719 = vshll.u32 %v2718, 30
        %v2720 = vsub.s32 %v2716, %v2719
        %vm2721 = vcmp.lt.s32.totalorder %v2720, 0
        %v2722 = vsub.s32 0, %v2720
        %v2723 = vsel %vm2721, %v2722, %v2720
        %v2724 = vclz %v2723
        %v2725 = vsub.s32 %v2724, 2
        %vm2726 = vcmp.gt.s32.totalorder 0, %v2725
        %v2727 = vsel %vm2726, 0, %v2725
        %v2728 = vsub.s32 32, %v2727
        %v2729 = vshll.u32 %v2720, %v2727
        %v2730 = vshrl.u32 %v2712, %v2728
        %v2731 = vor.u32 %v2729, %v2730
        %v2732 = vsub.s32 4294967266, %v2727
        %v2733 = vadd.s32 %v2732, 127
        %v2734 = vshll.u32 %v2733, 23
        %v2735 = vor.u32 4788187, %v2734
        %v2736 = vand.u32 2147483647, %v2735
        %v2738 = vcvt.s32.f32 %v2731
        %v2739 = vmul.f32 %v2738, %v2736
        %v2740 = vxor.u32 %v2739, 2147483648
        %v2741 = vsel %vm2658, %v2740, %v2739
        %v2742 = vsub.s32 4, %v2718
        %v2743 = vsel %vm2658, %v2742, %v2718
        %v2744 = vsel %vm2657, %v371, %v2741
        %v2745 = vsel %vm2657, 0, %v2743
        %v2746 = vcosq.f32.pop %v2744
        %v2747 = vsinq.f32.pop %v2744
        %vm2748 = vweird.f32 %v371
        %v2749 = vand.u32 %v2745, 3
        %vm2750 = vcmp.lt.s32.totalorder %v2749, 2
        %vm2751 = vcmp.eq.s32.totalorder %v2749, 0
        %v2752 = vxor.u32 %v2747, 2147483648
        %v2753 = vsel %vm2751, %v2746, %v2752
        %vm2754 = vcmp.eq.s32.totalorder %v2749, 2
        %v2755 = vxor.u32 %v2746, 2147483648
        %v2756 = vsel %vm2754, %v2755, %v2747
        %v2757 = vsel %vm2750, %v2753, %v2756
        %v2758 = vsel %vm2748, nan, %v2757
        %v2759 = vand.u32 2147483647, %v372
        %vm2760 = vcmp.le.f32.partialorder %v2759, 0.7853982
        %vm2761 = vcmp.lt.s32.totalorder %v372, 0
        %v2762 = vand.u32 %v372, 2139095040
        %v2763 = vshrl.u32 %v2762, 23
        %v2764 = vsub.s32 %v2763, 127
        %v2765 = vand.u32 2147483647, %v372
        %v2766 = vand.u32 %v2765, 8388607
        %v2767 = vor.u32 %v2766, 8388608
        %v2768 = vsub.s32 0, %v2767
        %v2769 = vadd.s32 %v2764, 1
        %vm2770 = vcmp.gt.s32.totalorder %v2769, 0
        %v2771 = vsel %vm2770, %v2769, 0
        %v2772 = vshrl.u32 %v2771, 5
        %v2773 = vand.u32 %v2771, 31
        %v2774 = vsub.s32 32, %v2773
        %v2775 = vshrl.u32 683565275, %v2774
        %v2776 = vshll.u32 683565275, %v2773
        %v2777 = vshrl.u32 2475754826, %v2774
        %v2778 = vor.u32 %v2776, %v2777
        %v2779 = vshll.u32 2475754826, %v2773
        %v2780 = vshrl.u32 2131351028, %v2774
        %v2781 = vor.u32 %v2779, %v2780
        %v2782 = vshll.u32 2131351028, %v2773
        %v2783 = vshrl.u32 2102212464, %v2774
        %v2784 = vor.u32 %v2782, %v2783
        %v2785 = vshll.u32 2102212464, %v2773
        %v2786 = vshrl.u32 920167782, %v2774
        %v2787 = vor.u32 %v2785, %v2786
        %v2788 = vshll.u32 920167782, %v2773
        %v2789 = vshrl.u32 1326507024, %v2774
        %v2790 = vor.u32 %v2788, %v2789
        %vm2791 = vcmp.lt.s32.totalorder %v2772, 1
        %vm2792 = vcmp.lt.s32.totalorder %v2772, 2
        %vm2793 = vcmp.lt.s32.totalorder %v2772, 3
        %vm2794 = vcmp.lt.s32.totalorder %v2772, 4
        %v2795 = vsel %vm2791, %v2775, %v2778
        %v2796 = vsel %vm2794, %v2784, 2102212464
        %v2797 = vsel %vm2793, %v2781, %v2796
        %v2798 = vsel %vm2792, %v2795, %v2797
        %v2799 = vsel %vm2791, %v2778, %v2781
        %v2800 = vsel %vm2794, %v2787, 920167782
        %v2801 = vsel %vm2793, %v2784, %v2800
        %v2802 = vsel %vm2792, %v2799, %v2801
        %v2803 = vsel %vm2791, %v2781, %v2784
        %v2804 = vsel %vm2794, %v2790, 1326507024
        %v2805 = vsel %vm2793, %v2787, %v2804
        %v2806 = vsel %vm2792, %v2803, %v2805
        %v2807 = vshll.u32 %v2767, 8
        %v2808 = vmul.u32.u64.compose %v2807, %v2806
        %v2809 = vextract.low.u32 %v2808
        %v2810 = vextract.high.u32 %v2808
        %v2811 = vmul.u32.u64.compose %v2807, %v2802
        %v2812 = vextract.low.u32 %v2811
        %v2813 = vextract.high.u32 %v2811
        %v2814 = vmul.u32 %v2807, %v2798
        %v2815 = vadd.s32 %v2810, %v2812
        %vm2816 = vc.u32 %v2810, %v2812
        %v2817 = vadd.s32 %v2813, 1
        %v2818 = vsel %vm2816, %v2817, %v2813
        %v2819 = vadd.s32 %v2814, %v2818
        %v2820 = vadd.s32 %v2819, 536870912
        %v2821 = vshrl.u32 %v2820, 30
        %v2822 = vshll.u32 %v2821, 30
        %v2823 = vsub.s32 %v2819, %v2822
        %vm2824 = vcmp.lt.s32.totalorder %v2823, 0
        %v2825 = vsub.s32 0, %v2823
        %v2826 = vsel %vm2824, %v2825, %v2823
        %v2827 = vclz %v2826
        %v2828 = vsub.s32 %v2827, 2
        %vm2829 = vcmp.gt.s32.totalorder 0, %v2828
        %v2830 = vsel %vm2829, 0, %v2828
        %v2831 = vsub.s32 32, %v2830
        %v2832 = vshll.u32 %v2823, %v2830
        %v2833 = vshrl.u32 %v2815, %v2831
        %v2834 = vor.u32 %v2832, %v2833
        %v2835 = vsub.s32 4294967266, %v2830
        %v2836 = vadd.s32 %v2835, 127
        %v2837 = vshll.u32 %v2836, 23
        %v2838 = vor.u32 4788187, %v2837
        %v2839 = vand.u32 2147483647, %v2838
        %v2841 = vcvt.s32.f32 %v2834
        %v2842 = vmul.f32 %v2841, %v2839
        %v2843 = vxor.u32 %v2842, 2147483648
        %v2844 = vsel %vm2761, %v2843, %v2842
        %v2845 = vsub.s32 4, %v2821
        %v2846 = vsel %vm2761, %v2845, %v2821
        %v2847 = vsel %vm2760, %v372, %v2844
        %v2848 = vsel %vm2760, 0, %v2846
        %v2849 = vcosq.f32.pop %v2847
        %v2850 = vsinq.f32.pop %v2847
        %vm2851 = vweird.f32 %v372
        %v2852 = vand.u32 %v2848, 3
        %vm2853 = vcmp.lt.s32.totalorder %v2852, 2
        %vm2854 = vcmp.eq.s32.totalorder %v2852, 0
        %v2855 = vxor.u32 %v2850, 2147483648
        %v2856 = vsel %vm2854, %v2849, %v2855
        %vm2857 = vcmp.eq.s32.totalorder %v2852, 2
        %v2858 = vxor.u32 %v2849, 2147483648
        %v2859 = vsel %vm2857, %v2858, %v2850
        %v2860 = vsel %vm2853, %v2856, %v2859
        %v2861 = vsel %vm2851, nan, %v2860
        %v2862 = vand.u32 2147483647, %v373
        %vm2863 = vcmp.le.f32.partialorder %v2862, 0.7853982
        %vm2864 = vcmp.lt.s32.totalorder %v373, 0
        %v2865 = vand.u32 %v373, 2139095040
        %v2866 = vshrl.u32 %v2865, 23
        %v2867 = vsub.s32 %v2866, 127
        %v2868 = vand.u32 2147483647, %v373
        %v2869 = vand.u32 %v2868, 8388607
        %v2870 = vor.u32 %v2869, 8388608
        %v2871 = vsub.s32 0, %v2870
        %v2872 = vadd.s32 %v2867, 1
        %vm2873 = vcmp.gt.s32.totalorder %v2872, 0
        %v2874 = vsel %vm2873, %v2872, 0
        %v2875 = vshrl.u32 %v2874, 5
        %v2876 = vand.u32 %v2874, 31
        %v2877 = vsub.s32 32, %v2876
        %v2878 = vshrl.u32 683565275, %v2877
        %v2879 = vshll.u32 683565275, %v2876
        %v2880 = vshrl.u32 2475754826, %v2877
        %v2881 = vor.u32 %v2879, %v2880
        %v2882 = vshll.u32 2475754826, %v2876
        %v2883 = vshrl.u32 2131351028, %v2877
        %v2884 = vor.u32 %v2882, %v2883
        %v2885 = vshll.u32 2131351028, %v2876
        %v2886 = vshrl.u32 2102212464, %v2877
        %v2887 = vor.u32 %v2885, %v2886
        %v2888 = vshll.u32 2102212464, %v2876
        %v2889 = vshrl.u32 920167782, %v2877
        %v2890 = vor.u32 %v2888, %v2889
        %v2891 = vshll.u32 920167782, %v2876
        %v2892 = vshrl.u32 1326507024, %v2877
        %v2893 = vor.u32 %v2891, %v2892
        %vm2894 = vcmp.lt.s32.totalorder %v2875, 1
        %vm2895 = vcmp.lt.s32.totalorder %v2875, 2
        %vm2896 = vcmp.lt.s32.totalorder %v2875, 3
        %vm2897 = vcmp.lt.s32.totalorder %v2875, 4
        %v2898 = vsel %vm2894, %v2878, %v2881
        %v2899 = vsel %vm2897, %v2887, 2102212464
        %v2900 = vsel %vm2896, %v2884, %v2899
        %v2901 = vsel %vm2895, %v2898, %v2900
        %v2902 = vsel %vm2894, %v2881, %v2884
        %v2903 = vsel %vm2897, %v2890, 920167782
        %v2904 = vsel %vm2896, %v2887, %v2903
        %v2905 = vsel %vm2895, %v2902, %v2904
        %v2906 = vsel %vm2894, %v2884, %v2887
        %v2907 = vsel %vm2897, %v2893, 1326507024
        %v2908 = vsel %vm2896, %v2890, %v2907
        %v2909 = vsel %vm2895, %v2906, %v2908
        %v2910 = vshll.u32 %v2870, 8
        %v2911 = vmul.u32.u64.compose %v2910, %v2909
        %v2912 = vextract.low.u32 %v2911
        %v2913 = vextract.high.u32 %v2911
        %v2914 = vmul.u32.u64.compose %v2910, %v2905
        %v2915 = vextract.low.u32 %v2914
        %v2916 = vextract.high.u32 %v2914
        %v2917 = vmul.u32 %v2910, %v2901
        %v2918 = vadd.s32 %v2913, %v2915
        %vm2919 = vc.u32 %v2913, %v2915
        %v2920 = vadd.s32 %v2916, 1
        %v2921 = vsel %vm2919, %v2920, %v2916
        %v2922 = vadd.s32 %v2917, %v2921
        %v2923 = vadd.s32 %v2922, 536870912
        %v2924 = vshrl.u32 %v2923, 30
        %v2925 = vshll.u32 %v2924, 30
        %v2926 = vsub.s32 %v2922, %v2925
        %vm2927 = vcmp.lt.s32.totalorder %v2926, 0
        %v2928 = vsub.s32 0, %v2926
        %v2929 = vsel %vm2927, %v2928, %v2926
        %v2930 = vclz %v2929
        %v2931 = vsub.s32 %v2930, 2
        %vm2932 = vcmp.gt.s32.totalorder 0, %v2931
        %v2933 = vsel %vm2932, 0, %v2931
        %v2934 = vsub.s32 32, %v2933
        %v2935 = vshll.u32 %v2926, %v2933
        %v2936 = vshrl.u32 %v2918, %v2934
        %v2937 = vor.u32 %v2935, %v2936
        %v2938 = vsub.s32 4294967266, %v2933
        %v2939 = vadd.s32 %v2938, 127
        %v2940 = vshll.u32 %v2939, 23
        %v2941 = vor.u32 4788187, %v2940
        %v2942 = vand.u32 2147483647, %v2941
        %v2944 = vcvt.s32.f32 %v2937
        %v2945 = vmul.f32 %v2944, %v2942
        %v2946 = vxor.u32 %v2945, 2147483648
        %v2947 = vsel %vm2864, %v2946, %v2945
        %v2948 = vsub.s32 4, %v2924
        %v2949 = vsel %vm2864, %v2948, %v2924
        %v2950 = vsel %vm2863, %v373, %v2947
        %v2951 = vsel %vm2863, 0, %v2949
        %v2952 = vcosq.f32.pop %v2950
        %v2953 = vsinq.f32.pop %v2950
        %vm2954 = vweird.f32 %v373
        %v2955 = vand.u32 %v2951, 3
        %vm2956 = vcmp.lt.s32.totalorder %v2955, 2
        %vm2957 = vcmp.eq.s32.totalorder %v2955, 0
        %v2958 = vxor.u32 %v2953, 2147483648
        %v2959 = vsel %vm2957, %v2952, %v2958
        %vm2960 = vcmp.eq.s32.totalorder %v2955, 2
        %v2961 = vxor.u32 %v2952, 2147483648
        %v2962 = vsel %vm2960, %v2961, %v2953
        %v2963 = vsel %vm2956, %v2959, %v2962
        %v2964 = vsel %vm2954, nan, %v2963
        %v2965 = vand.u32 2147483647, %v374
        %vm2966 = vcmp.le.f32.partialorder %v2965, 0.7853982
        %vm2967 = vcmp.lt.s32.totalorder %v374, 0
        %v2968 = vand.u32 %v374, 2139095040
        %v2969 = vshrl.u32 %v2968, 23
        %v2970 = vsub.s32 %v2969, 127
        %v2971 = vand.u32 2147483647, %v374
        %v2972 = vand.u32 %v2971, 8388607
        %v2973 = vor.u32 %v2972, 8388608
        %v2974 = vsub.s32 0, %v2973
        %v2975 = vadd.s32 %v2970, 1
        %vm2976 = vcmp.gt.s32.totalorder %v2975, 0
        %v2977 = vsel %vm2976, %v2975, 0
        %v2978 = vshrl.u32 %v2977, 5
        %v2979 = vand.u32 %v2977, 31
        %v2980 = vsub.s32 32, %v2979
        %v2981 = vshrl.u32 683565275, %v2980
        %v2982 = vshll.u32 683565275, %v2979
        %v2983 = vshrl.u32 2475754826, %v2980
        %v2984 = vor.u32 %v2982, %v2983
        %v2985 = vshll.u32 2475754826, %v2979
        %v2986 = vshrl.u32 2131351028, %v2980
        %v2987 = vor.u32 %v2985, %v2986
        %v2988 = vshll.u32 2131351028, %v2979
        %v2989 = vshrl.u32 2102212464, %v2980
        %v2990 = vor.u32 %v2988, %v2989
        %v2991 = vshll.u32 2102212464, %v2979
        %v2992 = vshrl.u32 920167782, %v2980
        %v2993 = vor.u32 %v2991, %v2992
        %v2994 = vshll.u32 920167782, %v2979
        %v2995 = vshrl.u32 1326507024, %v2980
        %v2996 = vor.u32 %v2994, %v2995
        %vm2997 = vcmp.lt.s32.totalorder %v2978, 1
        %vm2998 = vcmp.lt.s32.totalorder %v2978, 2
        %vm2999 = vcmp.lt.s32.totalorder %v2978, 3
        %vm3000 = vcmp.lt.s32.totalorder %v2978, 4
        %v3001 = vsel %vm2997, %v2981, %v2984
        %v3002 = vsel %vm3000, %v2990, 2102212464
        %v3003 = vsel %vm2999, %v2987, %v3002
        %v3004 = vsel %vm2998, %v3001, %v3003
        %v3005 = vsel %vm2997, %v2984, %v2987
        %v3006 = vsel %vm3000, %v2993, 920167782
        %v3007 = vsel %vm2999, %v2990, %v3006
        %v3008 = vsel %vm2998, %v3005, %v3007
        %v3009 = vsel %vm2997, %v2987, %v2990
        %v3010 = vsel %vm3000, %v2996, 1326507024
        %v3011 = vsel %vm2999, %v2993, %v3010
        %v3012 = vsel %vm2998, %v3009, %v3011
        %v3013 = vshll.u32 %v2973, 8
        %v3014 = vmul.u32.u64.compose %v3013, %v3012
        %v3015 = vextract.low.u32 %v3014
        %v3016 = vextract.high.u32 %v3014
        %v3017 = vmul.u32.u64.compose %v3013, %v3008
        %v3018 = vextract.low.u32 %v3017
        %v3019 = vextract.high.u32 %v3017
        %v3020 = vmul.u32 %v3013, %v3004
        %v3021 = vadd.s32 %v3016, %v3018
        %vm3022 = vc.u32 %v3016, %v3018
        %v3023 = vadd.s32 %v3019, 1
        %v3024 = vsel %vm3022, %v3023, %v3019
        %v3025 = vadd.s32 %v3020, %v3024
        %v3026 = vadd.s32 %v3025, 536870912
        %v3027 = vshrl.u32 %v3026, 30
        %v3028 = vshll.u32 %v3027, 30
        %v3029 = vsub.s32 %v3025, %v3028
        %vm3030 = vcmp.lt.s32.totalorder %v3029, 0
        %v3031 = vsub.s32 0, %v3029
        %v3032 = vsel %vm3030, %v3031, %v3029
        %v3033 = vclz %v3032
        %v3034 = vsub.s32 %v3033, 2
        %vm3035 = vcmp.gt.s32.totalorder 0, %v3034
        %v3036 = vsel %vm3035, 0, %v3034
        %v3037 = vsub.s32 32, %v3036
        %v3038 = vshll.u32 %v3029, %v3036
        %v3039 = vshrl.u32 %v3021, %v3037
        %v3040 = vor.u32 %v3038, %v3039
        %v3041 = vsub.s32 4294967266, %v3036
        %v3042 = vadd.s32 %v3041, 127
        %v3043 = vshll.u32 %v3042, 23
        %v3044 = vor.u32 4788187, %v3043
        %v3045 = vand.u32 2147483647, %v3044
        %v3047 = vcvt.s32.f32 %v3040
        %v3048 = vmul.f32 %v3047, %v3045
        %v3049 = vxor.u32 %v3048, 2147483648
        %v3050 = vsel %vm2967, %v3049, %v3048
        %v3051 = vsub.s32 4, %v3027
        %v3052 = vsel %vm2967, %v3051, %v3027
        %v3053 = vsel %vm2966, %v374, %v3050
        %v3054 = vsel %vm2966, 0, %v3052
        %v3055 = vcosq.f32.pop %v3053
        %v3056 = vsinq.f32.pop %v3053
        %vm3057 = vweird.f32 %v374
        %v3058 = vand.u32 %v3054, 3
        %vm3059 = vcmp.lt.s32.totalorder %v3058, 2
        %vm3060 = vcmp.eq.s32.totalorder %v3058, 0
        %v3061 = vxor.u32 %v3056, 2147483648
        %v3062 = vsel %vm3060, %v3055, %v3061
        %vm3063 = vcmp.eq.s32.totalorder %v3058, 2
        %v3064 = vxor.u32 %v3055, 2147483648
        %v3065 = vsel %vm3063, %v3064, %v3056
        %v3066 = vsel %vm3059, %v3062, %v3065
        %v3067 = vsel %vm3057, nan, %v3066
        %v3068 = vld [vmem:[%s2 + $0x10] sm:$0xff]
        %v3069 = vld [vmem:[%s2 + $0x18] sm:$0xff]
        %vm3070 = vcmask 130048
        %v3072 = vsel %vm3070, %v1831, 0
        %v3075 = vsel %vm3070, %v1934, 0
        %v3078 = vsel %vm3070, %v2037, 0
        %v3081 = vsel %vm3070, %v2140, 0
        %v3084 = vsel %vm3070, %v2243, 0
        %v3087 = vsel %vm3070, %v2346, 0
        %v3090 = vsel %vm3070, %v2449, 0
        %v3093 = vsel %vm3070, %v2552, 0
        %v3096 = vsel %vm3070, %v2655, 0
        %v3099 = vsel %vm3070, %v2758, 0
        %v3102 = vsel %vm3070, %v2861, 0
        %v3105 = vsel %vm3070, %v2964, 0
        %v3108 = vsel %vm3070, %v3067, 0
        %3110 = vmatprep.subr.mxu0 0.0
        %3111 = vmatpush1.msra.mxu0 0.0
        %3112 = vmatprep.subr.mxu0 0.0
        %3113 = vmatpush1.msra.mxu0 0.0
        %3114 = vmatprep.subr.mxu0 0.0
        %3115 = vmatpush1.msra.mxu0 0.0
        %3116 = vmatprep.subr.mxu0 0.0
        %3117 = vmatpush1.msra.mxu0 0.0
        %3118 = vmatprep.subr.mxu0 0.0
        %3119 = vmatpush1.msra.mxu0 0.0
        %3120 = vmatprep.subr.mxu0 0.0
        %3121 = vmatpush1.msra.mxu0 0.0
        %3122 = vmatprep.subr.mxu0 0.0
        %3123 = vmatpush1.msra.mxu0 0.0
        %3124 = vmatprep.subr.mxu0 0.0
        %3125 = vmatpush1.msra.mxu0 0.0
        %3126 = vmatprep.subr.mxu0 0.0
        %3127 = vmatpush1.msra.mxu0 0.0
        %3128 = vmatprep.subr.mxu0 0.0
        %3129 = vmatpush1.msra.mxu0 0.0
        %3130 = vmatprep.subr.mxu0 0.0
        %3131 = vmatpush1.msra.mxu0 0.0
        %3132 = vmatprep.subr.mxu0 0.0
        %3133 = vmatpush1.msra.mxu0 0.0
        %3134 = vmatprep.subr.mxu0 0.0
        %3135 = vmatpush1.msra.mxu0 0.0
        %3136 = vmatprep.subr.mxu0 0.0
        %3137 = vmatpush1.msra.mxu0 0.0
        %3138 = vmatprep.subr.mxu0 0.0
        %3139 = vmatpush1.msra.mxu0 %v3069
        %3140 = vmatprep.subr.mxu0 0.0
        %3141 = vmatpush1.msra.mxu0 %v3068
        %3142 = vmatprep.subr.mxu0 0.0
        %3143 = vmatpush2.msra.mxu0 0.0
        %3144 = vmatprep.subr.mxu0 0.0
        %3145 = vmatpush2.msra.mxu0 0.0
        %3146 = vmatprep.subr.mxu0 0.0
        %3147 = vmatpush2.msra.mxu0 0.0
        %3148 = vmatprep.subr.mxu0 0.0
        %3149 = vmatpush2.msra.mxu0 0.0
        %3150 = vmatprep.subr.mxu0 0.0
        %3151 = vmatpush2.msra.mxu0 0.0
        %3152 = vmatprep.subr.mxu0 0.0
        %3153 = vmatpush2.msra.mxu0 0.0
        %3154 = vmatprep.subr.mxu0 0.0
        %3155 = vmatpush2.msra.mxu0 0.0
        %3156 = vmatprep.subr.mxu0 0.0
        %3157 = vmatpush2.msra.mxu0 0.0
        %3158 = vmatprep.subr.mxu0 0.0
        %3159 = vmatpush2.msra.mxu0 0.0
        %3160 = vmatprep.subr.mxu0 0.0
        %3161 = vmatpush2.msra.mxu0 0.0
        %3162 = vmatprep.subr.mxu0 0.0
        %3163 = vmatpush2.msra.mxu0 0.0
        %3164 = vmatprep.subr.mxu0 0.0
        %3165 = vmatpush2.msra.mxu0 0.0
        %3166 = vmatprep.subr.mxu0 0.0
        %3167 = vmatpush2.msra.mxu0 0.0
        %3168 = vmatprep.subr.mxu0 0.0
        %3169 = vmatpush2.msra.mxu0 0.0
        %3170 = vmatprep.subr.mxu0 0.0
        %3171 = vmatpush2.msra.mxu0 0.0
        %3172 = vmatprep.subr.mxu0 0.0
        %3173 = vmatpush2.msra.mxu0 0.0
        %3174 = vmatprep.mubr.f32.mxu0 0.0
        %3175 = vmatmul.mubr.f32.gmra.mxu0 %v3072
        %v3176 = vpop.f32.mrf.mxu0
        %v3177 = vadd.f32 0.0, %v3176
        %v3178 = vpop.f32.mrf.mxu0
        %3179 = vmatprep.mubr.f32.mxu0 0.0
        %3180 = vmatmul.mubr.f32.gmra.mxu0 %v3075
        %v3181 = vpop.f32.mrf.mxu0
        %v3182 = vadd.f32 0.0, %v3181
        %v3183 = vpop.f32.mrf.mxu0
        %3184 = vmatprep.mubr.f32.mxu0 0.0
        %3185 = vmatmul.mubr.f32.gmra.mxu0 %v3078
        %v3186 = vpop.f32.mrf.mxu0
        %v3187 = vadd.f32 0.0, %v3186
        %v3188 = vpop.f32.mrf.mxu0
        %3189 = vmatprep.mubr.f32.mxu0 0.0
        %3190 = vmatmul.mubr.f32.gmra.mxu0 %v3081
        %v3191 = vpop.f32.mrf.mxu0
        %v3192 = vadd.f32 0.0, %v3191
        %v3193 = vpop.f32.mrf.mxu0
        %3194 = vmatprep.mubr.f32.mxu0 0.0
        %3195 = vmatmul.mubr.f32.gmra.mxu0 %v3084
        %v3196 = vpop.f32.mrf.mxu0
        %v3197 = vadd.f32 0.0, %v3196
        %v3198 = vpop.f32.mrf.mxu0
        %3199 = vmatprep.mubr.f32.mxu0 0.0
        %3200 = vmatmul.mubr.f32.gmra.mxu0 %v3087
        %v3201 = vpop.f32.mrf.mxu0
        %v3202 = vadd.f32 0.0, %v3201
        %v3203 = vpop.f32.mrf.mxu0
        %3204 = vmatprep.mubr.f32.mxu0 0.0
        %3205 = vmatmul.mubr.f32.gmra.mxu0 %v3090
        %v3206 = vpop.f32.mrf.mxu0
        %v3207 = vadd.f32 0.0, %v3206
        %v3208 = vpop.f32.mrf.mxu0
        %3209 = vmatprep.mubr.f32.mxu0 0.0
        %3210 = vmatmul.mubr.f32.gmra.mxu0 %v3093
        %v3211 = vpop.f32.mrf.mxu0
        %v3212 = vadd.f32 0.0, %v3211
        %v3213 = vpop.f32.mrf.mxu0
        %3214 = vmatprep.mubr.f32.mxu0 0.0
        %3215 = vmatmul.mubr.f32.gmra.mxu0 %v3096
        %v3216 = vpop.f32.mrf.mxu0
        %v3217 = vadd.f32 0.0, %v3216
        %v3218 = vpop.f32.mrf.mxu0
        %3219 = vmatprep.mubr.f32.mxu0 0.0
        %3220 = vmatmul.mubr.f32.gmra.mxu0 %v3099
        %v3221 = vpop.f32.mrf.mxu0
        %v3222 = vadd.f32 0.0, %v3221
        %v3223 = vpop.f32.mrf.mxu0
        %3224 = vmatprep.mubr.f32.mxu0 0.0
        %3225 = vmatmul.mubr.f32.gmra.mxu0 %v3102
        %v3226 = vpop.f32.mrf.mxu0
        %v3227 = vadd.f32 0.0, %v3226
        %v3228 = vpop.f32.mrf.mxu0
        %3229 = vmatprep.mubr.f32.mxu0 0.0
        %3230 = vmatmul.mubr.f32.gmra.mxu0 %v3105
        %v3231 = vpop.f32.mrf.mxu0
        %v3232 = vadd.f32 0.0, %v3231
        %v3233 = vpop.f32.mrf.mxu0
        %3234 = vmatprep.mubr.f32.mxu0 0.0
        %3235 = vmatmul.mubr.f32.gmra.mxu0 %v3108
        %v3236 = vpop.f32.mrf.mxu0
        %v3237 = vadd.f32 0.0, %v3236
        %v3238 = vpop.f32.mrf.mxu0
        %3239 = vdwg.mxu0
        %v3241 = vsel %vm3070, %v478, 0
        %v3244 = vsel %vm3070, %v582, 0
        %v3247 = vsel %vm3070, %v686, 0
        %v3250 = vsel %vm3070, %v790, 0
        %v3253 = vsel %vm3070, %v894, 0
        %v3256 = vsel %vm3070, %v998, 0
        %v3259 = vsel %vm3070, %v1102, 0
        %v3262 = vsel %vm3070, %v1206, 0
        %v3265 = vsel %vm3070, %v1310, 0
        %v3268 = vsel %vm3070, %v1414, 0
        %v3271 = vsel %vm3070, %v1518, 0
        %v3274 = vsel %vm3070, %v1622, 0
        %v3277 = vsel %vm3070, %v1726, 0
        %3279 = vmatprep.subr.mxu0 0.0
        %3280 = vmatpush1.msra.mxu0 0.0
        %3281 = vmatprep.subr.mxu0 0.0
        %3282 = vmatpush1.msra.mxu0 0.0
        %3283 = vmatprep.subr.mxu0 0.0
        %3284 = vmatpush1.msra.mxu0 0.0
        %3285 = vmatprep.subr.mxu0 0.0
        %3286 = vmatpush1.msra.mxu0 0.0
        %3287 = vmatprep.subr.mxu0 0.0
        %3288 = vmatpush1.msra.mxu0 0.0
        %3289 = vmatprep.subr.mxu0 0.0
        %3290 = vmatpush1.msra.mxu0 0.0
        %3291 = vmatprep.subr.mxu0 0.0
        %3292 = vmatpush1.msra.mxu0 0.0
        %3293 = vmatprep.subr.mxu0 0.0
        %3294 = vmatpush1.msra.mxu0 0.0
        %3295 = vmatprep.subr.mxu0 0.0
        %3296 = vmatpush1.msra.mxu0 0.0
        %3297 = vmatprep.subr.mxu0 0.0
        %3298 = vmatpush1.msra.mxu0 0.0
        %3299 = vmatprep.subr.mxu0 0.0
        %3300 = vmatpush1.msra.mxu0 0.0
        %3301 = vmatprep.subr.mxu0 0.0
        %3302 = vmatpush1.msra.mxu0 0.0
        %3303 = vmatprep.subr.mxu0 0.0
        %3304 = vmatpush1.msra.mxu0 0.0
        %3305 = vmatprep.subr.mxu0 0.0
        %3306 = vmatpush1.msra.mxu0 0.0
        %3307 = vmatprep.subr.mxu0 0.0
        %3308 = vmatpush1.msra.mxu0 %v1728
        %3309 = vmatprep.subr.mxu0 0.0
        %3310 = vmatpush1.msra.mxu0 %v1727
        %3311 = vmatprep.subr.mxu0 0.0
        %3312 = vmatpush2.msra.mxu0 0.0
        %3313 = vmatprep.subr.mxu0 0.0
        %3314 = vmatpush2.msra.mxu0 0.0
        %3315 = vmatprep.subr.mxu0 0.0
        %3316 = vmatpush2.msra.mxu0 0.0
        %3317 = vmatprep.subr.mxu0 0.0
        %3318 = vmatpush2.msra.mxu0 0.0
        %3319 = vmatprep.subr.mxu0 0.0
        %3320 = vmatpush2.msra.mxu0 0.0
        %3321 = vmatprep.subr.mxu0 0.0
        %3322 = vmatpush2.msra.mxu0 0.0
        %3323 = vmatprep.subr.mxu0 0.0
        %3324 = vmatpush2.msra.mxu0 0.0
        %3325 = vmatprep.subr.mxu0 0.0
        %3326 = vmatpush2.msra.mxu0 0.0
        %3327 = vmatprep.subr.mxu0 0.0
        %3328 = vmatpush2.msra.mxu0 0.0
        %3329 = vmatprep.subr.mxu0 0.0
        %3330 = vmatpush2.msra.mxu0 0.0
        %3331 = vmatprep.subr.mxu0 0.0
        %3332 = vmatpush2.msra.mxu0 0.0
        %3333 = vmatprep.subr.mxu0 0.0
        %3334 = vmatpush2.msra.mxu0 0.0
        %3335 = vmatprep.subr.mxu0 0.0
        %3336 = vmatpush2.msra.mxu0 0.0
        %3337 = vmatprep.subr.mxu0 0.0
        %3338 = vmatpush2.msra.mxu0 0.0
        %3339 = vmatprep.subr.mxu0 0.0
        %3340 = vmatpush2.msra.mxu0 0.0
        %3341 = vmatprep.subr.mxu0 0.0
        %3342 = vmatpush2.msra.mxu0 0.0
        %3343 = vmatprep.mubr.f32.mxu0 0.0
        %3344 = vmatmul.mubr.f32.gmra.mxu0 %v3241
        %v3345 = vpop.f32.mrf.mxu0
        %v3346 = vadd.f32 %v3177, %v3345
        %v3347 = vpop.f32.mrf.mxu0
        %3348 = vmatprep.mubr.f32.mxu0 0.0
        %3349 = vmatmul.mubr.f32.gmra.mxu0 %v3244
        %v3350 = vpop.f32.mrf.mxu0
        %v3351 = vadd.f32 %v3182, %v3350
        %v3352 = vpop.f32.mrf.mxu0
        %3353 = vmatprep.mubr.f32.mxu0 0.0
        %3354 = vmatmul.mubr.f32.gmra.mxu0 %v3247
        %v3355 = vpop.f32.mrf.mxu0
        %v3356 = vadd.f32 %v3187, %v3355
        %v3357 = vpop.f32.mrf.mxu0
        %3358 = vmatprep.mubr.f32.mxu0 0.0
        %3359 = vmatmul.mubr.f32.gmra.mxu0 %v3250
        %v3360 = vpop.f32.mrf.mxu0
        %v3361 = vadd.f32 %v3192, %v3360
        %v3362 = vpop.f32.mrf.mxu0
        %3363 = vmatprep.mubr.f32.mxu0 0.0
        %3364 = vmatmul.mubr.f32.gmra.mxu0 %v3253
        %v3365 = vpop.f32.mrf.mxu0
        %v3366 = vadd.f32 %v3197, %v3365
        %v3367 = vpop.f32.mrf.mxu0
        %3368 = vmatprep.mubr.f32.mxu0 0.0
        %3369 = vmatmul.mubr.f32.gmra.mxu0 %v3256
        %v3370 = vpop.f32.mrf.mxu0
        %v3371 = vadd.f32 %v3202, %v3370
        %v3372 = vpop.f32.mrf.mxu0
        %3373 = vmatprep.mubr.f32.mxu0 0.0
        %3374 = vmatmul.mubr.f32.gmra.mxu0 %v3259
        %v3375 = vpop.f32.mrf.mxu0
        %v3376 = vadd.f32 %v3207, %v3375
        %v3377 = vpop.f32.mrf.mxu0
        %3378 = vmatprep.mubr.f32.mxu0 0.0
        %3379 = vmatmul.mubr.f32.gmra.mxu0 %v3262
        %v3380 = vpop.f32.mrf.mxu0
        %v3381 = vadd.f32 %v3212, %v3380
        %v3382 = vpop.f32.mrf.mxu0
        %3383 = vmatprep.mubr.f32.mxu0 0.0
        %3384 = vmatmul.mubr.f32.gmra.mxu0 %v3265
        %v3385 = vpop.f32.mrf.mxu0
        %v3386 = vadd.f32 %v3217, %v3385
        %v3387 = vpop.f32.mrf.mxu0
        %3388 = vmatprep.mubr.f32.mxu0 0.0
        %3389 = vmatmul.mubr.f32.gmra.mxu0 %v3268
        %v3390 = vpop.f32.mrf.mxu0
        %v3391 = vadd.f32 %v3222, %v3390
        %v3392 = vpop.f32.mrf.mxu0
        %3393 = vmatprep.mubr.f32.mxu0 0.0
        %3394 = vmatmul.mubr.f32.gmra.mxu0 %v3271
        %v3395 = vpop.f32.mrf.mxu0
        %v3396 = vadd.f32 %v3227, %v3395
        %v3397 = vpop.f32.mrf.mxu0
        %3398 = vmatprep.mubr.f32.mxu0 0.0
        %3399 = vmatmul.mubr.f32.gmra.mxu0 %v3274
        %v3400 = vpop.f32.mrf.mxu0
        %v3401 = vadd.f32 %v3232, %v3400
        %v3402 = vpop.f32.mrf.mxu0
        %3403 = vmatprep.mubr.f32.mxu0 0.0
        %3404 = vmatmul.mubr.f32.gmra.mxu0 %v3277
        %v3405 = vpop.f32.mrf.mxu0
        %v3406 = vadd.f32 %v3237, %v3405
        %v3407 = vpop.f32.mrf.mxu0
        %3408 = vdwg.mxu0
        %v3409 = vld [vmem:[%s3] sm:$0x1]
        %v3411 = vlaneseq
        %v3412 = vshrl.u32 %v3411, 7
        %v3413 = vsub.s32 0, %v3412
        %v3414 = vrot.slane %v3409, %v3413
        %v3416 = vadd.f32 %v3346, %v3414
        %v3417 = vadd.f32 %v3351, %v3414
        %v3418 = vadd.f32 %v3356, %v3414
        %v3419 = vadd.f32 %v3361, %v3414
        %v3420 = vadd.f32 %v3366, %v3414
        %v3421 = vadd.f32 %v3371, %v3414
        %v3422 = vadd.f32 %v3376, %v3414
        %v3423 = vadd.f32 %v3381, %v3414
        %v3424 = vadd.f32 %v3386, %v3414
        %v3425 = vadd.f32 %v3391, %v3414
        %v3426 = vadd.f32 %v3396, %v3414
        %v3427 = vadd.f32 %v3401, %v3414
        %v3428 = vadd.f32 %v3406, %v3414
        %v3429 = vxor.u32 %v3416, 2147483648
        %v3430 = vxor.u32 %v3417, 2147483648
        %v3431 = vxor.u32 %v3418, 2147483648
        %v3432 = vxor.u32 %v3419, 2147483648
        %v3433 = vxor.u32 %v3420, 2147483648
        %v3434 = vxor.u32 %v3421, 2147483648
        %v3435 = vxor.u32 %v3422, 2147483648
        %v3436 = vxor.u32 %v3423, 2147483648
        %v3437 = vxor.u32 %v3424, 2147483648
        %v3438 = vxor.u32 %v3425, 2147483648
        %v3439 = vxor.u32 %v3426, 2147483648
        %v3440 = vxor.u32 %v3427, 2147483648
        %v3441 = vxor.u32 %v3428, 2147483648
        %v3442 = vmul.f32 %v3429, 1.442695
        %v3443 = vpow.pop %v3442
        %v3444 = vmul.f32 %v3430, 1.442695
        %v3445 = vpow.pop %v3444
        %v3446 = vmul.f32 %v3431, 1.442695
        %v3447 = vpow.pop %v3446
        %v3448 = vmul.f32 %v3432, 1.442695
        %v3449 = vpow.pop %v3448
        %v3450 = vmul.f32 %v3433, 1.442695
        %v3451 = vpow.pop %v3450
        %v3452 = vmul.f32 %v3434, 1.442695
        %v3453 = vpow.pop %v3452
        %v3454 = vmul.f32 %v3435, 1.442695
        %v3455 = vpow.pop %v3454
        %v3456 = vmul.f32 %v3436, 1.442695
        %v3457 = vpow.pop %v3456
        %v3458 = vmul.f32 %v3437, 1.442695
        %v3459 = vpow.pop %v3458
        %v3460 = vmul.f32 %v3438, 1.442695
        %v3461 = vpow.pop %v3460
        %v3462 = vmul.f32 %v3439, 1.442695
        %v3463 = vpow.pop %v3462
        %v3464 = vmul.f32 %v3440, 1.442695
        %v3465 = vpow.pop %v3464
        %v3466 = vmul.f32 %v3441, 1.442695
        %v3467 = vpow.pop %v3466
        %v3468 = vadd.f32 %v3443, 1.0
        %v3469 = vadd.f32 %v3445, 1.0
        %v3470 = vadd.f32 %v3447, 1.0
        %v3471 = vadd.f32 %v3449, 1.0
        %v3472 = vadd.f32 %v3451, 1.0
        %v3473 = vadd.f32 %v3453, 1.0
        %v3474 = vadd.f32 %v3455, 1.0
        %v3475 = vadd.f32 %v3457, 1.0
        %v3476 = vadd.f32 %v3459, 1.0
        %v3477 = vadd.f32 %v3461, 1.0
        %v3478 = vadd.f32 %v3463, 1.0
        %v3479 = vadd.f32 %v3465, 1.0
        %v3480 = vadd.f32 %v3467, 1.0
        %v3481 = vrcp.pop %v3468
        %v3482 = vmul.f32 1.0, %v3481
        %v3483 = vrcp.pop %v3469
        %v3484 = vmul.f32 1.0, %v3483
        %v3485 = vrcp.pop %v3470
        %v3486 = vmul.f32 1.0, %v3485
        %v3487 = vrcp.pop %v3471
        %v3488 = vmul.f32 1.0, %v3487
        %v3489 = vrcp.pop %v3472
        %v3490 = vmul.f32 1.0, %v3489
        %v3491 = vrcp.pop %v3473
        %v3492 = vmul.f32 1.0, %v3491
        %v3493 = vrcp.pop %v3474
        %v3494 = vmul.f32 1.0, %v3493
        %v3495 = vrcp.pop %v3475
        %v3496 = vmul.f32 1.0, %v3495
        %v3497 = vrcp.pop %v3476
        %v3498 = vmul.f32 1.0, %v3497
        %v3499 = vrcp.pop %v3477
        %v3500 = vmul.f32 1.0, %v3499
        %v3501 = vrcp.pop %v3478
        %v3502 = vmul.f32 1.0, %v3501
        %v3503 = vrcp.pop %v3479
        %v3504 = vmul.f32 1.0, %v3503
        %v3505 = vrcp.pop %v3480
        %v3506 = vmul.f32 1.0, %v3505
        %v3507 = vmul.f32 %v3416, %v3482
        %v3508 = vmul.f32 %v3417, %v3484
        %v3509 = vmul.f32 %v3418, %v3486
        %v3510 = vmul.f32 %v3419, %v3488
        %v3511 = vmul.f32 %v3420, %v3490
        %v3512 = vmul.f32 %v3421, %v3492
        %v3513 = vmul.f32 %v3422, %v3494
        %v3514 = vmul.f32 %v3423, %v3496
        %v3515 = vmul.f32 %v3424, %v3498
        %v3516 = vmul.f32 %v3425, %v3500
        %v3517 = vmul.f32 %v3426, %v3502
        %v3518 = vmul.f32 %v3427, %v3504
        %v3519 = vmul.f32 %v3428, %v3506
        %v3520 = vld [vmem:[%s4] sm:$0xff]
        %v3521 = vld [vmem:[%s4 + $0x8] sm:$0xff]
        %v3522 = vld [vmem:[%s4 + $0x10] sm:$0xff]
        %v3523 = vld [vmem:[%s4 + $0x18] sm:$0xff]
        %v3524 = vld [vmem:[%s4 + $0x20] sm:$0xff]
        %v3525 = vld [vmem:[%s4 + $0x28] sm:$0xff]
        %v3526 = vld [vmem:[%s4 + $0x30] sm:$0xff]
        %v3527 = vld [vmem:[%s4 + $0x38] sm:$0xff]
        %v3528 = vld [vmem:[%s4 + $0x40] sm:$0xff]
        %v3529 = vld [vmem:[%s4 + $0x48] sm:$0xff]
        %v3530 = vld [vmem:[%s4 + $0x50] sm:$0xff]
        %v3531 = vld [vmem:[%s4 + $0x58] sm:$0xff]
        %v3532 = vld [vmem:[%s4 + $0x60] sm:$0xff]
        %v3533 = vld [vmem:[%s4 + $0x68] sm:$0xff]
        %v3534 = vld [vmem:[%s4 + $0x70] sm:$0xff]
        %v3535 = vld [vmem:[%s4 + $0x78] sm:$0xff]
        %v3536 = vld [vmem:[%s5] sm:$0x1]
        %v3538 = vlaneseq
        %v3539 = vshrl.u32 %v3538, 7
        %v3540 = vsub.s32 0, %v3539
        %v3541 = vrot.slane %v3536, %v3540
        %3543 = vmatprep.subr.mxu0 0.0
        %3544 = vmatpush1.msra.mxu0 %v3535
        %3545 = vmatprep.subr.mxu0 0.0
        %3546 = vmatpush1.msra.mxu0 %v3534
        %3547 = vmatprep.subr.mxu0 0.0
        %3548 = vmatpush1.msra.mxu0 %v3533
        %3549 = vmatprep.subr.mxu0 0.0
        %3550 = vmatpush1.msra.mxu0 %v3532
        %3551 = vmatprep.subr.mxu0 0.0
        %3552 = vmatpush1.msra.mxu0 %v3531
        %3553 = vmatprep.subr.mxu0 0.0
        %3554 = vmatpush1.msra.mxu0 %v3530
        %3555 = vmatprep.subr.mxu0 0.0
        %3556 = vmatpush1.msra.mxu0 %v3529
        %3557 = vmatprep.subr.mxu0 0.0
        %3558 = vmatpush1.msra.mxu0 %v3528
        %3559 = vmatprep.subr.mxu0 0.0
        %3560 = vmatpush1.msra.mxu0 %v3527
        %3561 = vmatprep.subr.mxu0 0.0
        %3562 = vmatpush1.msra.mxu0 %v3526
        %3563 = vmatprep.subr.mxu0 0.0
        %3564 = vmatpush1.msra.mxu0 %v3525
        %3565 = vmatprep.subr.mxu0 0.0
        %3566 = vmatpush1.msra.mxu0 %v3524
        %3567 = vmatprep.subr.mxu0 0.0
        %3568 = vmatpush1.msra.mxu0 %v3523
        %3569 = vmatprep.subr.mxu0 0.0
        %3570 = vmatpush1.msra.mxu0 %v3522
        %3571 = vmatprep.subr.mxu0 0.0
        %3572 = vmatpush1.msra.mxu0 %v3521
        %3573 = vmatprep.subr.mxu0 0.0
        %3574 = vmatpush1.msra.mxu0 %v3520
        %3575 = vmatprep.subr.mxu0 0.0
        %3576 = vmatpush2.msra.mxu0 0.0
        %3577 = vmatprep.subr.mxu0 0.0
        %3578 = vmatpush2.msra.mxu0 0.0
        %3579 = vmatprep.subr.mxu0 0.0
        %3580 = vmatpush2.msra.mxu0 0.0
        %3581 = vmatprep.subr.mxu0 0.0
        %3582 = vmatpush2.msra.mxu0 0.0
        %3583 = vmatprep.subr.mxu0 0.0
        %3584 = vmatpush2.msra.mxu0 0.0
        %3585 = vmatprep.subr.mxu0 0.0
        %3586 = vmatpush2.msra.mxu0 0.0
        %3587 = vmatprep.subr.mxu0 0.0
        %3588 = vmatpush2.msra.mxu0 0.0
        %3589 = vmatprep.subr.mxu0 0.0
        %3590 = vmatpush2.msra.mxu0 0.0
        %3591 = vmatprep.subr.mxu0 0.0
        %3592 = vmatpush2.msra.mxu0 0.0
        %3593 = vmatprep.subr.mxu0 0.0
        %3594 = vmatpush2.msra.mxu0 0.0
        %3595 = vmatprep.subr.mxu0 0.0
        %3596 = vmatpush2.msra.mxu0 0.0
        %3597 = vmatprep.subr.mxu0 0.0
        %3598 = vmatpush2.msra.mxu0 0.0
        %3599 = vmatprep.subr.mxu0 0.0
        %3600 = vmatpush2.msra.mxu0 0.0
        %3601 = vmatprep.subr.mxu0 0.0
        %3602 = vmatpush2.msra.mxu0 0.0
        %3603 = vmatprep.subr.mxu0 0.0
        %3604 = vmatpush2.msra.mxu0 0.0
        %3605 = vmatprep.subr.mxu0 0.0
        %3606 = vmatpush2.msra.mxu0 0.0
        %3607 = vmatprep.mubr.f32.mxu0 0.0
        %3608 = vmatmul.mubr.f32.gmra.mxu0 %v3507
        %v3609 = vpop.f32.mrf.mxu0
        %v3610 = vadd.f32 %v3541, %v3609
        %v3611 = vpop.f32.mrf.mxu0
        %3612 = vmatprep.mubr.f32.mxu0 0.0
        %3613 = vmatmul.mubr.f32.gmra.mxu0 %v3508
        %v3614 = vpop.f32.mrf.mxu0
        %v3615 = vadd.f32 %v3541, %v3614
        %v3616 = vpop.f32.mrf.mxu0
        %3617 = vmatprep.mubr.f32.mxu0 0.0
        %3618 = vmatmul.mubr.f32.gmra.mxu0 %v3509
        %v3619 = vpop.f32.mrf.mxu0
        %v3620 = vadd.f32 %v3541, %v3619
        %v3621 = vpop.f32.mrf.mxu0
        %3622 = vmatprep.mubr.f32.mxu0 0.0
        %3623 = vmatmul.mubr.f32.gmra.mxu0 %v3510
        %v3624 = vpop.f32.mrf.mxu0
        %v3625 = vadd.f32 %v3541, %v3624
        %v3626 = vpop.f32.mrf.mxu0
        %3627 = vmatprep.mubr.f32.mxu0 0.0
        %3628 = vmatmul.mubr.f32.gmra.mxu0 %v3511
        %v3629 = vpop.f32.mrf.mxu0
        %v3630 = vadd.f32 %v3541, %v3629
        %v3631 = vpop.f32.mrf.mxu0
        %3632 = vmatprep.mubr.f32.mxu0 0.0
        %3633 = vmatmul.mubr.f32.gmra.mxu0 %v3512
        %v3634 = vpop.f32.mrf.mxu0
        %v3635 = vadd.f32 %v3541, %v3634
        %v3636 = vpop.f32.mrf.mxu0
        %3637 = vmatprep.mubr.f32.mxu0 0.0
        %3638 = vmatmul.mubr.f32.gmra.mxu0 %v3513
        %v3639 = vpop.f32.mrf.mxu0
        %v3640 = vadd.f32 %v3541, %v3639
        %v3641 = vpop.f32.mrf.mxu0
        %3642 = vmatprep.mubr.f32.mxu0 0.0
        %3643 = vmatmul.mubr.f32.gmra.mxu0 %v3514
        %v3644 = vpop.f32.mrf.mxu0
        %v3645 = vadd.f32 %v3541, %v3644
        %v3646 = vpop.f32.mrf.mxu0
        %3647 = vmatprep.mubr.f32.mxu0 0.0
        %3648 = vmatmul.mubr.f32.gmra.mxu0 %v3515
        %v3649 = vpop.f32.mrf.mxu0
        %v3650 = vadd.f32 %v3541, %v3649
        %v3651 = vpop.f32.mrf.mxu0
        %3652 = vmatprep.mubr.f32.mxu0 0.0
        %3653 = vmatmul.mubr.f32.gmra.mxu0 %v3516
        %v3654 = vpop.f32.mrf.mxu0
        %v3655 = vadd.f32 %v3541, %v3654
        %v3656 = vpop.f32.mrf.mxu0
        %3657 = vmatprep.mubr.f32.mxu0 0.0
        %3658 = vmatmul.mubr.f32.gmra.mxu0 %v3517
        %v3659 = vpop.f32.mrf.mxu0
        %v3660 = vadd.f32 %v3541, %v3659
        %v3661 = vpop.f32.mrf.mxu0
        %3662 = vmatprep.mubr.f32.mxu0 0.0
        %3663 = vmatmul.mubr.f32.gmra.mxu0 %v3518
        %v3664 = vpop.f32.mrf.mxu0
        %v3665 = vadd.f32 %v3541, %v3664
        %v3666 = vpop.f32.mrf.mxu0
        %3667 = vmatprep.mubr.f32.mxu0 0.0
        %3668 = vmatmul.mubr.f32.gmra.mxu0 %v3519
        %v3669 = vpop.f32.mrf.mxu0
        %v3670 = vadd.f32 %v3541, %v3669
        %v3671 = vpop.f32.mrf.mxu0
        %3672 = vdwg.mxu0
        %3673 = vst [vmem:[%s257] sm:$0xff] %v3610
        %3674 = vst [vmem:[%s257 + $0x8] sm:$0xff] %v3615
        %3675 = vst [vmem:[%s257 + $0x10] sm:$0xff] %v3620
        %3676 = vst [vmem:[%s257 + $0x18] sm:$0xff] %v3625
        %3677 = vst [vmem:[%s257 + $0x20] sm:$0xff] %v3630
        %3678 = vst [vmem:[%s257 + $0x28] sm:$0xff] %v3635
        %3679 = vst [vmem:[%s257 + $0x30] sm:$0xff] %v3640
        %3680 = vst [vmem:[%s257 + $0x38] sm:$0xff] %v3645
        %3681 = vst [vmem:[%s257 + $0x40] sm:$0xff] %v3650
        %3682 = vst [vmem:[%s257 + $0x48] sm:$0xff] %v3655
        %3683 = vst [vmem:[%s257 + $0x50] sm:$0xff] %v3660
        %3684 = vst [vmem:[%s257 + $0x58] sm:$0xff] %v3665
        %3685 = vst [vmem:[%s257 + $0x60] sm:$0xff] %v3670
        %s3686 = sand.u32 %s159, 1
        %s3687 = scalar_lea.sflag [#allocation3], %s3686
        %s3688 = sand.u32 %s159, 1
        %s3689 = smul.addr %s3688, 104
        %s3690 = scalar_lea.vmem [#allocation2], %s3689
        // Predicated region
        $region45: #{tpu_custom_call.1} parent=43 // pred_check
          %p3691 = pneg %p169
        $region46: #{tpu_custom_call.1} parent=43 // pred_check_branch
          %3693 = sbr.rel (%p3691) target = $region48
        $region47: #{tpu_custom_call.1} parent=43 // pred_region
          %s3694 = smul.u32 13, %s20
          %s3695 = ssub.s32 25, %s3694
          %p3696 = scmp.lt.s32.totalorder %s3695, 13
          %s3697 = scalar_select %p3696, %s3695, 13
          %s3698 = smul.u32 128, %s3697
          %s3700 = ssub.s32 1664, %s3698
          %3701 = vsyncadd %s3687, %s3700
          %p3702 = scmp.ne.s32.totalorder 0, %s3698
          %s3703 = smul.addr %s3694, 128
          %s3704 = scalar_lea.hbm %s6, %s3703
          %s3705 = smul.u32 8, %s3697
          %s3706 = sshll.u32 %s3690, 4
          %s3707 = int_to_ptr.vmem [resolvable:$true] %s3706
          %s3708 = sshll.u32 %s3705, 4
          %3712 = dma.vmem_to_hbm [thread:$0]  (%p3702), %s3707, %s3708, %s3704, %s3687, 128, 128, 8
        $region48: #{tpu_custom_call.1} parent=43 // pred_fallthru
          _
      $region44: #{tpu_custom_call.1} parent=5 // pred_fallthru
        _
      %p3713 = scmp.le.s32.totalorder 2, %s15
      // Predicated region
      $region49: #{tpu_custom_call.1} parent=5 // pred_check
        %p3714 = pneg %p3713
      $region50: #{tpu_custom_call.1} parent=5 // pred_check_branch
        %3716 = sbr.rel (%p3714) target = $region52
      $region51: #{tpu_custom_call.1} parent=5 // pred_region
        %s3717 = ssub.s32 %s15, 2
        // Predicated region
        $region53: #{tpu_custom_call.1} parent=51 // pred_check
          %p3718 = pneg %p175
        $region54: #{tpu_custom_call.1} parent=51 // pred_check_branch
          %3720 = sbr.rel (%p3718) target = $region56
        $region55: #{tpu_custom_call.1} parent=51 // pred_region
          %s3721 = sand.u32 %s160, 1
          %s3722 = scalar_lea.sflag [#allocation3], %s3721
          %s3723 = sand.u32 %s160, 1
          %s3724 = smul.addr %s3723, 104
          %s3725 = scalar_lea.vmem [#allocation2], %s3724
          %3726 = dma.done %s3722, 1664
        $region56: #{tpu_custom_call.1} parent=51 // pred_fallthru
          _
      $region52: #{tpu_custom_call.1} parent=5 // pred_fallthru
        _
    $region6: #{tpu_custom_call.1} parent=1 // loop_footer
      %s19 = sadd.s32 1, %s15
    $region7: #{tpu_custom_call.1} parent=1 // loop_footer_branch
      %14 = sbr.rel target = $region3
    $region8: #{tpu_custom_call.1} parent=1 // loop_exit
      _
    %3727 = vsyncpa [#allocation3], 1
    %s3728 = scalar_lea.sflag [#allocation3], 1
    %3729 = vsyncpa %s3728, 1

</llo_original>
